<compile_context>
chip_gen: v5e
topology: v5e:2x2
jax: 0.10.0
libtpu: 0.0.40
codegen_flags: <defaults>
</compile_context>

<pallas_src>
import jax
import jax.numpy as jnp
from jax.experimental import pallas as pl
from jax.experimental.pallas import tpu as pltpu  # kept for future per-chip tuning (unused here)

# ----- model hyper-parameters (small, consistent with the module config) -----
B, S, H = 2, 8, 32          # batch, seq_len, hidden_dim
NH = 4                      # num_attention_heads
DH = H // NH                # head dim
FF = H * 4                  # ff_expansion_factor = 4
NL = 3                      # number of transformer layers
EPS = 1e-5                  # nn.LayerNorm default eps


def _gelu(x):
    # tanh-approx GELU
    return 0.5 * x * (1.0 + jnp.tanh(0.7978845608028654 * (x + 0.044715 * x * x * x)))


def _layernorm(x, g, b):
    mu = jnp.mean(x, axis=-1, keepdims=True)
    var = jnp.mean((x - mu) ** 2, axis=-1, keepdims=True)
    return (x - mu) * jax.lax.rsqrt(var + EPS) * g + b


def _softmax_rows(x):
    x = x - jnp.max(x, axis=-1, keepdims=True)
    e = jnp.exp(x)
    return e * pl.reciprocal(jnp.sum(e, axis=-1, keepdims=True), approx=True)


# ---------------------------------------------------------------------------
# Single fused kernel: 3 SelfAttentionBlocks + all question heads.
# No grid; every operand is a full-array VMEM block.
# ---------------------------------------------------------------------------
def fused_kernel(*refs):
    (x_ref, mrow_ref, mcol_ref,
     wqkv_ref, bqkv_ref, wo_ref, bo_ref, ln1g_ref, ln1b_ref,
     w1_ref, b1_ref, w2_ref, b2_ref, ln2g_ref, ln2b_ref,
     ww1_ref, bw1_ref, ww2_ref, bw2_ref,
     wt1_ref, bt1_ref, tg_ref, tb_ref, wt2_ref, bt2_ref,
     wa1_ref, ba1_ref, ag_ref, ab_ref, wa2_ref, ba2_ref,
     wq1_ref, bq1_ref, qg_ref, qb_ref, wq2_ref, bq2_ref,
     wc1_ref, bc1_ref, wc2_ref, bc2_ref,
     ans_ref, attn_ref, qtype_ref, cplx_ref) = refs

    x = x_ref[...]                                  # (B*S, H) activations
    neg = (1.0 - mrow_ref[...]) * (-1e9)            # (B, S) additive key mask
    scale = 1.0 / (DH ** 0.5)

    # ----------------- 3 transformer layers (fully unrolled) -----------------
    for l in range(NL):
        wo_l = wo_ref[l]                            # (H, H)
        # packed QKV: one (B*S, H) @ (H, 3H) matmul
        qkv = jnp.dot(x, wqkv_ref[l], preferred_element_type=jnp.float32) + bqkv_ref[l]

        ao_rows = []                                # per-batch attention outputs
        attn_ps = []                                # final-layer attention probs
        for b in range(B):                          # unrolled batch loop (masking)
            qkv_b = qkv[b * S:(b + 1) * S, :]       # (S, 3H)
            neg_b = neg[b:b + 1, :]                 # (1, S) broadcast over queries
            acc = jnp.zeros((S, H), jnp.float32)
            for h in range(NH):                     # unrolled head loop
                lo = h * DH
                qh = qkv_b[:, lo:lo + DH]
                kh = qkv_b[:, H + lo:H + lo + DH]
                vh = qkv_b[:, 2 * H + lo:2 * H + lo + DH]
                sc = jax.lax.dot_general(qh, kh, (((1,), (1,)), ((), ())),
                                         preferred_element_type=jnp.float32) * scale + neg_b
                p = _softmax_rows(sc)               # (S, S)
                if l == NL - 1:
                    attn_ps.append(p)
                ctx = jnp.dot(p, vh, preferred_element_type=jnp.float32)        # (S, DH)
                # no concat: project each head's context directly through Wo[h]
                acc = acc + jnp.dot(ctx, wo_l[lo:lo + DH, :],
                                    preferred_element_type=jnp.float32)
            ao_rows.append(acc)
        attn_out = jnp.concatenate(ao_rows, axis=0) + bo_ref[l]                  # (B*S, H)

        h1 = _layernorm(x + attn_out, ln1g_ref[l], ln1b_ref[l])
        ff = _gelu(jnp.dot(h1, w1_ref[l], preferred_element_type=jnp.float32) + b1_ref[l])
        ff = jnp.dot(ff, w2_ref[l], preferred_element_type=jnp.float32) + b2_ref[l]
        x = _layernorm(h1 + ff, ln2g_ref[l], ln2b_ref[l])

        if l == NL - 1:
            # single contiguous store of the final layer's attention:
            # row layout (b, h, q) -> b*NH*S + h*S + q, columns = keys.
            attn_ref[...] = jnp.concatenate(attn_ps, axis=0)                      # (B*NH*S, S)

    # ------------------------------ heads ------------------------------------
    # CLS tokens of every batch element, stacked: (B, H)
    cls = jnp.concatenate([x[b * S:b * S + 1, :] for b in range(B)], axis=0)

    # question type classifier: Linear -> LN -> GELU -> Linear -> softmax
    qt = jnp.dot(cls, wq1_ref[...], preferred_element_type=jnp.float32) + bq1_ref[...]
    qt = _gelu(_layernorm(qt, qg_ref[...], qb_ref[...]))
    qt = jnp.dot(qt, wq2_ref[...], preferred_element_type=jnp.float32) + bq2_ref[...]
    qtype_ref[...] = _softmax_rows(qt)                                            # (B, 7)

    # wh-word detector: Linear -> GELU -> Linear -> sigmoid, then mask
    mcol = mcol_ref[...]                                                          # (B*S, 1)
    wh = _gelu(jnp.dot(x, ww1_ref[...], preferred_element_type=jnp.float32) + bw1_ref[...])
    wh = jnp.dot(wh, ww2_ref[...], preferred_element_type=jnp.float32) + bw2_ref[...]
    wh = jax.nn.sigmoid(wh) * mcol                                                # (B*S, 1)

    # topic weights + pooled topic representation (bmm(tw^T, seq)), per batch
    tw = (1.0 - wh) * mcol
    topic_rows = []
    for b in range(B):
        twb = tw[b * S:(b + 1) * S, :]                                            # (S, 1)
        xb = x[b * S:(b + 1) * S, :]                                              # (S, H)
        inv = pl.reciprocal(jnp.sum(twb, axis=0, keepdims=True) + 1e-9, approx=True)
        topic_rows.append(jnp.sum((twb * inv) * xb, axis=0, keepdims=True))       # (1, H)
    topic = jnp.concatenate(topic_rows, axis=0)                                   # (B, H)

    # topic extractor: Linear -> LN -> GELU -> Linear
    et = jnp.dot(topic, wt1_ref[...], preferred_element_type=jnp.float32) + bt1_ref[...]
    et = _gelu(_layernorm(et, tg_ref[...], tb_ref[...]))
    et = jnp.dot(et, wt2_ref[...], preferred_element_type=jnp.float32) + bt2_ref[...]

    # complexity estimator: Linear -> ReLU -> Linear -> sigmoid
    cx = jnp.maximum(
        jnp.dot(cls, wc1_ref[...], preferred_element_type=jnp.float32) + bc1_ref[...], 0.0)
    cplx_ref[...] = jax.nn.sigmoid(
        jnp.dot(cx, wc2_ref[...], preferred_element_type=jnp.float32) + bc2_ref[...])     # (B, 1)

    # answer generator on concat([cls, enhanced_topic]):
    # concat @ W == cls @ W[:H] + topic @ W[H:]  (no in-kernel concat needed)
    ans = (jnp.dot(cls, wa1_ref[0:H, :], preferred_element_type=jnp.float32)
           + jnp.dot(et, wa1_ref[H:2 * H, :], preferred_element_type=jnp.float32)
           + ba1_ref[...])
    ans = _gelu(_layernorm(ans, ag_ref[...], ab_ref[...]))
    ans_ref[...] = jnp.dot(ans, wa2_ref[...], preferred_element_type=jnp.float32) + ba2_ref[...]


# ---------------------------------------------------------------------------
# Full QuestionExpert forward: one pallas_call, everything resident in VMEM.
# ---------------------------------------------------------------------------
@jax.jit
def question_expert_forward(hidden_states, attention_mask, layer_params, head_params):
    x2 = hidden_states.reshape(B * S, H).astype(jnp.float32)
    mrow = attention_mask.reshape(B, S).astype(jnp.float32)        # attention key mask
    mcol = attention_mask.reshape(B * S, 1).astype(jnp.float32)    # wh / topic weighting mask

    out_shape = (jax.ShapeDtypeStruct((B, H), jnp.float32),            # answer_repr
                 jax.ShapeDtypeStruct((B * NH * S, S), jnp.float32),   # final attention (flat)
                 jax.ShapeDtypeStruct((B, 7), jnp.float32),            # question type probs
                 jax.ShapeDtypeStruct((B, 1), jnp.float32))            # complexity

    ans, attn, qtype, cplx = pl.pallas_call(
        fused_kernel,
        out_shape=out_shape,
        # TODO(synk): on v7x, a grid=(B,) "parallel" variant could use both
        # TensorCores; at this size the single fused step is best on v5e/v6e.
    )(x2, mrow, mcol, *layer_params, *head_params)

    answer_repr = ans[:, None, :]                       # (B, 1, H), matches unsqueeze(1)
    final_attention = attn.reshape(B, NH, S, S)
    return answer_repr, final_attention, qtype, cplx


# ---------------------------------------------------------------------------
# Deterministic parameter init (PyTorch-style uniform(-1/sqrt(fan_in), ...)),
# packed for the fused kernel: QKV fused to (H, 3H), layers stacked on axis 0.
# ---------------------------------------------------------------------------
def init_params(key):
    keys = iter(jax.random.split(key, 64))

    def lin(fan_in, fan_out):
        k1, k2 = next(keys), next(keys)
        bound = 1.0 / (fan_in ** 0.5)
        w = jax.random.uniform(k1, (fan_in, fan_out), jnp.float32, -bound, bound)
        b = jax.random.uniform(k2, (1, fan_out), jnp.float32, -bound, bound)
        return w, b

    def ln(d):
        return jnp.ones((1, d), jnp.float32), jnp.zeros((1, d), jnp.float32)

    names = ("wqkv", "bqkv", "wo", "bo", "ln1g", "ln1b",
             "w1", "b1", "w2", "b2", "ln2g", "ln2b")
    per = {n: [] for n in names}
    for _ in range(NL):
        wq, bq = lin(H, H); wk, bk = lin(H, H); wv, bv = lin(H, H)
        wo, bo = lin(H, H)
        w1, b1 = lin(H, FF); w2, b2 = lin(FF, H)
        g1, be1 = ln(H); g2, be2 = ln(H)
        per["wqkv"].append(jnp.concatenate([wq, wk, wv], axis=1))   # (H, 3H)
        per["bqkv"].append(jnp.concatenate([bq, bk, bv], axis=1))   # (1, 3H)
        per["wo"].append(wo);   per["bo"].append(bo)
        per["ln1g"].append(g1); per["ln1b"].append(be1)
        per["w1"].append(w1);   per["b1"].append(b1)
        per["w2"].append(w2);   per["b2"].append(b2)
        per["ln2g"].append(g2); per["ln2b"].append(be2)
    layer_params = [jnp.stack(per[n], axis=0) for n in names]        # each (3, ...)

    ww1, bw1 = lin(H, H // 2); ww2, bw2 = lin(H // 2, 1)
    wt1, bt1 = lin(H, H); wt2, bt2 = lin(H, H); tg, tb = ln(H)
    wa1, ba1 = lin(2 * H, H); wa2, ba2 = lin(H, H); ag, ab = ln(H)
    wq1, bq1 = lin(H, H // 2); wq2, bq2 = lin(H // 2, 7); qg, qb = ln(H // 2)
    wc1, bc1 = lin(H, H // 4); wc2, bc2 = lin(H // 4, 1)

    head_params = [ww1, bw1, ww2, bw2,
                   wt1, bt1, tg, tb, wt2, bt2,
                   wa1, ba1, ag, ab, wa2, ba2,
                   wq1, bq1, qg, qb, wq2, bq2,
                   wc1, bc1, wc2, bc2]
    return layer_params, head_params


if __name__ == "__main__":
    key = jax.random.PRNGKey(0)
    kx, kp = jax.random.split(key)
    hidden_states = jax.random.normal(kx, (B, S, H), jnp.float32)
    attention_mask = jnp.ones((B, S), jnp.float32).at[1, S - 2:].set(0.0)

    layer_params, head_params = init_params(kp)

    answer_repr, final_attention, qtype_probs, complexity = question_expert_forward(
        hidden_states, attention_mask, layer_params, head_params)
    jax.block_until_ready((answer_repr, final_attention, qtype_probs, complexity))

    assert answer_repr.shape == (B, 1, H)
    assert final_attention.shape == (B, NH, S, S)
    assert qtype_probs.shape == (B, 7)
    assert complexity.shape == (B, 1)
    print("KERNEL_OK")
</pallas_src>

<mosaic_0001>
module attributes {stable_mosaic.version = 11 : i64} {
  func.func @fused_kernel(%arg0: memref<16x32xf32, #tpu.memory_space<vmem>>, %arg1: memref<2x8xf32, #tpu.memory_space<vmem>>, %arg2: memref<16x1xf32, #tpu.memory_space<vmem>>, %arg3: memref<3x32x96xf32, #tpu.memory_space<vmem>>, %arg4: memref<3x1x96xf32, #tpu.memory_space<vmem>>, %arg5: memref<3x32x32xf32, #tpu.memory_space<vmem>>, %arg6: memref<3x1x32xf32, #tpu.memory_space<vmem>>, %arg7: memref<3x1x32xf32, #tpu.memory_space<vmem>>, %arg8: memref<3x1x32xf32, #tpu.memory_space<vmem>>, %arg9: memref<3x32x128xf32, #tpu.memory_space<vmem>>, %arg10: memref<3x1x128xf32, #tpu.memory_space<vmem>>, %arg11: memref<3x128x32xf32, #tpu.memory_space<vmem>>, %arg12: memref<3x1x32xf32, #tpu.memory_space<vmem>>, %arg13: memref<3x1x32xf32, #tpu.memory_space<vmem>>, %arg14: memref<3x1x32xf32, #tpu.memory_space<vmem>>, %arg15: memref<32x16xf32, #tpu.memory_space<vmem>>, %arg16: memref<1x16xf32, #tpu.memory_space<vmem>>, %arg17: memref<16x1xf32, #tpu.memory_space<vmem>>, %arg18: memref<1x1xf32, #tpu.memory_space<vmem>>, %arg19: memref<32x32xf32, #tpu.memory_space<vmem>>, %arg20: memref<1x32xf32, #tpu.memory_space<vmem>>, %arg21: memref<1x32xf32, #tpu.memory_space<vmem>>, %arg22: memref<1x32xf32, #tpu.memory_space<vmem>>, %arg23: memref<32x32xf32, #tpu.memory_space<vmem>>, %arg24: memref<1x32xf32, #tpu.memory_space<vmem>>, %arg25: memref<64x32xf32, #tpu.memory_space<vmem>>, %arg26: memref<1x32xf32, #tpu.memory_space<vmem>>, %arg27: memref<1x32xf32, #tpu.memory_space<vmem>>, %arg28: memref<1x32xf32, #tpu.memory_space<vmem>>, %arg29: memref<32x32xf32, #tpu.memory_space<vmem>>, %arg30: memref<1x32xf32, #tpu.memory_space<vmem>>, %arg31: memref<32x16xf32, #tpu.memory_space<vmem>>, %arg32: memref<1x16xf32, #tpu.memory_space<vmem>>, %arg33: memref<1x16xf32, #tpu.memory_space<vmem>>, %arg34: memref<1x16xf32, #tpu.memory_space<vmem>>, %arg35: memref<16x7xf32, #tpu.memory_space<vmem>>, %arg36: memref<1x7xf32, #tpu.memory_space<vmem>>, %arg37: memref<32x8xf32, #tpu.memory_space<vmem>>, %arg38: memref<1x8xf32, #tpu.memory_space<vmem>>, %arg39: memref<8x1xf32, #tpu.memory_space<vmem>>, %arg40: memref<1x1xf32, #tpu.memory_space<vmem>>, %arg41: memref<2x32xf32, #tpu.memory_space<vmem>>, %arg42: memref<64x8xf32, #tpu.memory_space<vmem>>, %arg43: memref<2x7xf32, #tpu.memory_space<vmem>>, %arg44: memref<2x1xf32, #tpu.memory_space<vmem>>) attributes {dimension_semantics = [], scalar_prefetch = 0 : i64, scratch_operands = 0 : i64, tpu.core_type = #tpu.core_type<tc>} {
    %c0 = arith.constant 0 : index
    %c0_0 = arith.constant 0 : index
    %0 = vector.load %arg0[%c0, %c0_0] : memref<16x32xf32, #tpu.memory_space<vmem>>, vector<16x32xf32>
    %c0_1 = arith.constant 0 : index
    %c0_2 = arith.constant 0 : index
    %1 = vector.load %arg1[%c0_1, %c0_2] : memref<2x8xf32, #tpu.memory_space<vmem>>, vector<2x8xf32>
    %cst = arith.constant 1.000000e+00 : f32
    %2 = vector.broadcast %cst : f32 to vector<2x8xf32>
    %3 = arith.subf %2, %1 : vector<2x8xf32>
    %cst_3 = arith.constant -1.000000e+09 : f32
    %4 = vector.broadcast %cst_3 : f32 to vector<2x8xf32>
    %5 = arith.mulf %3, %4 : vector<2x8xf32>
    %c0_4 = arith.constant 0 : index
    %c0_5 = arith.constant 0 : index
    %c0_6 = arith.constant 0 : index
    %6 = vector.load %arg5[%c0_4, %c0_5, %c0_6] : memref<3x32x32xf32, #tpu.memory_space<vmem>>, vector<1x32x32xf32>
    %7 = vector.shape_cast %6 : vector<1x32x32xf32> to vector<32x32xf32>
    %c0_7 = arith.constant 0 : index
    %c0_8 = arith.constant 0 : index
    %c0_9 = arith.constant 0 : index
    %8 = vector.load %arg3[%c0_7, %c0_8, %c0_9] : memref<3x32x96xf32, #tpu.memory_space<vmem>>, vector<1x32x96xf32>
    %9 = vector.shape_cast %8 : vector<1x32x96xf32> to vector<32x96xf32>
    %cst_10 = arith.constant dense<0.000000e+00> : vector<16x96xf32>
    %10 = tpu.matmul %0, %9, %cst_10 {dimension_numbers = #tpu.dot_dimension_numbers<[1], [0], [0], [1], [0, 0, 1, 1], [], []>} : vector<16x32xf32>, vector<32x96xf32>, vector<16x96xf32> -> vector<16x96xf32>
    %c0_11 = arith.constant 0 : index
    %c0_12 = arith.constant 0 : index
    %c0_13 = arith.constant 0 : index
    %11 = vector.load %arg4[%c0_11, %c0_12, %c0_13] : memref<3x1x96xf32, #tpu.memory_space<vmem>>, vector<1x1x96xf32>
    %12 = vector.shape_cast %11 : vector<1x1x96xf32> to vector<1x96xf32>
    %13 = vector.broadcast %12 : vector<1x96xf32> to vector<16x96xf32>
    %14 = arith.addf %10, %13 : vector<16x96xf32>
    %15 = vector.extract_strided_slice %14 {offsets = [0, 0], sizes = [8, 96], strides = [1, 1]} : vector<16x96xf32> to vector<8x96xf32>
    %16 = vector.extract_strided_slice %5 {offsets = [0, 0], sizes = [1, 8], strides = [1, 1]} : vector<2x8xf32> to vector<1x8xf32>
    %cst_14 = arith.constant 0.000000e+00 : f32
    %17 = vector.broadcast %cst_14 : f32 to vector<8x32xf32>
    %18 = vector.extract_strided_slice %15 {offsets = [0, 0], sizes = [8, 8], strides = [1, 1]} : vector<8x96xf32> to vector<8x8xf32>
    %19 = vector.extract_strided_slice %15 {offsets = [0, 32], sizes = [8, 8], strides = [1, 1]} : vector<8x96xf32> to vector<8x8xf32>
    %20 = vector.extract_strided_slice %15 {offsets = [0, 64], sizes = [8, 8], strides = [1, 1]} : vector<8x96xf32> to vector<8x8xf32>
    %cst_15 = arith.constant dense<0.000000e+00> : vector<8x8xf32>
    %21 = tpu.matmul %18, %19, %cst_15 {dimension_numbers = #tpu.dot_dimension_numbers<[1], [1], [0], [0], [0, 0, 1, 0], [], []>} : vector<8x8xf32>, vector<8x8xf32>, vector<8x8xf32> -> vector<8x8xf32>
    %cst_16 = arith.constant 0.353553385 : f32
    %22 = vector.broadcast %cst_16 : f32 to vector<8x8xf32>
    %23 = arith.mulf %21, %22 : vector<8x8xf32>
    %24 = vector.broadcast %16 : vector<1x8xf32> to vector<8x8xf32>
    %25 = arith.addf %23, %24 : vector<8x8xf32>
    %cst_17 = arith.constant dense<0xFF800000> : vector<8xf32>
    %26 = vector.multi_reduction <maximumf>, %25, %cst_17 [1] : vector<8x8xf32> to vector<8xf32>
    %27 = vector.shape_cast %26 : vector<8xf32> to vector<8x1xf32>
    %28 = vector.broadcast %27 : vector<8x1xf32> to vector<8x8xf32>
    %29 = arith.subf %25, %28 : vector<8x8xf32>
    %30 = math.exp %29 : vector<8x8xf32>
    %cst_18 = arith.constant dense<0.000000e+00> : vector<8xf32>
    %31 = vector.multi_reduction <add>, %30, %cst_18 [1] : vector<8x8xf32> to vector<8xf32>
    %32 = vector.shape_cast %31 : vector<8xf32> to vector<8x1xf32>
    %33 = tpu.reciprocal %32 {approx = true} : vector<8x1xf32> -> vector<8x1xf32>
    %34 = vector.broadcast %33 : vector<8x1xf32> to vector<8x8xf32>
    %35 = arith.mulf %30, %34 : vector<8x8xf32>
    %cst_19 = arith.constant dense<0.000000e+00> : vector<8x8xf32>
    %36 = tpu.matmul %35, %20, %cst_19 {dimension_numbers = #tpu.dot_dimension_numbers<[1], [0], [0], [1], [0, 0, 1, 1], [], []>} : vector<8x8xf32>, vector<8x8xf32>, vector<8x8xf32> -> vector<8x8xf32>
    %37 = vector.extract_strided_slice %7 {offsets = [0, 0], sizes = [8, 32], strides = [1, 1]} : vector<32x32xf32> to vector<8x32xf32>
    %cst_20 = arith.constant dense<0.000000e+00> : vector<8x32xf32>
    %38 = tpu.matmul %36, %37, %cst_20 {dimension_numbers = #tpu.dot_dimension_numbers<[1], [0], [0], [1], [0, 0, 1, 1], [], []>} : vector<8x8xf32>, vector<8x32xf32>, vector<8x32xf32> -> vector<8x32xf32>
    %39 = arith.addf %17, %38 : vector<8x32xf32>
    %40 = vector.extract_strided_slice %15 {offsets = [0, 8], sizes = [8, 8], strides = [1, 1]} : vector<8x96xf32> to vector<8x8xf32>
    %41 = vector.extract_strided_slice %15 {offsets = [0, 40], sizes = [8, 8], strides = [1, 1]} : vector<8x96xf32> to vector<8x8xf32>
    %42 = vector.extract_strided_slice %15 {offsets = [0, 72], sizes = [8, 8], strides = [1, 1]} : vector<8x96xf32> to vector<8x8xf32>
    %cst_21 = arith.constant dense<0.000000e+00> : vector<8x8xf32>
    %43 = tpu.matmul %40, %41, %cst_21 {dimension_numbers = #tpu.dot_dimension_numbers<[1], [1], [0], [0], [0, 0, 1, 0], [], []>} : vector<8x8xf32>, vector<8x8xf32>, vector<8x8xf32> -> vector<8x8xf32>
    %cst_22 = arith.constant 0.353553385 : f32
    %44 = vector.broadcast %cst_22 : f32 to vector<8x8xf32>
    %45 = arith.mulf %43, %44 : vector<8x8xf32>
    %46 = vector.broadcast %16 : vector<1x8xf32> to vector<8x8xf32>
    %47 = arith.addf %45, %46 : vector<8x8xf32>
    %cst_23 = arith.constant dense<0xFF800000> : vector<8xf32>
    %48 = vector.multi_reduction <maximumf>, %47, %cst_23 [1] : vector<8x8xf32> to vector<8xf32>
    %49 = vector.shape_cast %48 : vector<8xf32> to vector<8x1xf32>
    %50 = vector.broadcast %49 : vector<8x1xf32> to vector<8x8xf32>
    %51 = arith.subf %47, %50 : vector<8x8xf32>
    %52 = math.exp %51 : vector<8x8xf32>
    %cst_24 = arith.constant dense<0.000000e+00> : vector<8xf32>
    %53 = vector.multi_reduction <add>, %52, %cst_24 [1] : vector<8x8xf32> to vector<8xf32>
    %54 = vector.shape_cast %53 : vector<8xf32> to vector<8x1xf32>
    %55 = tpu.reciprocal %54 {approx = true} : vector<8x1xf32> -> vector<8x1xf32>
    %56 = vector.broadcast %55 : vector<8x1xf32> to vector<8x8xf32>
    %57 = arith.mulf %52, %56 : vector<8x8xf32>
    %cst_25 = arith.constant dense<0.000000e+00> : vector<8x8xf32>
    %58 = tpu.matmul %57, %42, %cst_25 {dimension_numbers = #tpu.dot_dimension_numbers<[1], [0], [0], [1], [0, 0, 1, 1], [], []>} : vector<8x8xf32>, vector<8x8xf32>, vector<8x8xf32> -> vector<8x8xf32>
    %59 = vector.extract_strided_slice %7 {offsets = [8, 0], sizes = [8, 32], strides = [1, 1]} : vector<32x32xf32> to vector<8x32xf32>
    %cst_26 = arith.constant dense<0.000000e+00> : vector<8x32xf32>
    %60 = tpu.matmul %58, %59, %cst_26 {dimension_numbers = #tpu.dot_dimension_numbers<[1], [0], [0], [1], [0, 0, 1, 1], [], []>} : vector<8x8xf32>, vector<8x32xf32>, vector<8x32xf32> -> vector<8x32xf32>
    %61 = arith.addf %39, %60 : vector<8x32xf32>
    %62 = vector.extract_strided_slice %15 {offsets = [0, 16], sizes = [8, 8], strides = [1, 1]} : vector<8x96xf32> to vector<8x8xf32>
    %63 = vector.extract_strided_slice %15 {offsets = [0, 48], sizes = [8, 8], strides = [1, 1]} : vector<8x96xf32> to vector<8x8xf32>
    %64 = vector.extract_strided_slice %15 {offsets = [0, 80], sizes = [8, 8], strides = [1, 1]} : vector<8x96xf32> to vector<8x8xf32>
    %cst_27 = arith.constant dense<0.000000e+00> : vector<8x8xf32>
    %65 = tpu.matmul %62, %63, %cst_27 {dimension_numbers = #tpu.dot_dimension_numbers<[1], [1], [0], [0], [0, 0, 1, 0], [], []>} : vector<8x8xf32>, vector<8x8xf32>, vector<8x8xf32> -> vector<8x8xf32>
    %cst_28 = arith.constant 0.353553385 : f32
    %66 = vector.broadcast %cst_28 : f32 to vector<8x8xf32>
    %67 = arith.mulf %65, %66 : vector<8x8xf32>
    %68 = vector.broadcast %16 : vector<1x8xf32> to vector<8x8xf32>
    %69 = arith.addf %67, %68 : vector<8x8xf32>
    %cst_29 = arith.constant dense<0xFF800000> : vector<8xf32>
    %70 = vector.multi_reduction <maximumf>, %69, %cst_29 [1] : vector<8x8xf32> to vector<8xf32>
    %71 = vector.shape_cast %70 : vector<8xf32> to vector<8x1xf32>
    %72 = vector.broadcast %71 : vector<8x1xf32> to vector<8x8xf32>
    %73 = arith.subf %69, %72 : vector<8x8xf32>
    %74 = math.exp %73 : vector<8x8xf32>
    %cst_30 = arith.constant dense<0.000000e+00> : vector<8xf32>
    %75 = vector.multi_reduction <add>, %74, %cst_30 [1] : vector<8x8xf32> to vector<8xf32>
    %76 = vector.shape_cast %75 : vector<8xf32> to vector<8x1xf32>
    %77 = tpu.reciprocal %76 {approx = true} : vector<8x1xf32> -> vector<8x1xf32>
    %78 = vector.broadcast %77 : vector<8x1xf32> to vector<8x8xf32>
    %79 = arith.mulf %74, %78 : vector<8x8xf32>
    %cst_31 = arith.constant dense<0.000000e+00> : vector<8x8xf32>
    %80 = tpu.matmul %79, %64, %cst_31 {dimension_numbers = #tpu.dot_dimension_numbers<[1], [0], [0], [1], [0, 0, 1, 1], [], []>} : vector<8x8xf32>, vector<8x8xf32>, vector<8x8xf32> -> vector<8x8xf32>
    %81 = vector.extract_strided_slice %7 {offsets = [16, 0], sizes = [8, 32], strides = [1, 1]} : vector<32x32xf32> to vector<8x32xf32>
    %cst_32 = arith.constant dense<0.000000e+00> : vector<8x32xf32>
    %82 = tpu.matmul %80, %81, %cst_32 {dimension_numbers = #tpu.dot_dimension_numbers<[1], [0], [0], [1], [0, 0, 1, 1], [], []>} : vector<8x8xf32>, vector<8x32xf32>, vector<8x32xf32> -> vector<8x32xf32>
    %83 = arith.addf %61, %82 : vector<8x32xf32>
    %84 = vector.extract_strided_slice %15 {offsets = [0, 24], sizes = [8, 8], strides = [1, 1]} : vector<8x96xf32> to vector<8x8xf32>
    %85 = vector.extract_strided_slice %15 {offsets = [0, 56], sizes = [8, 8], strides = [1, 1]} : vector<8x96xf32> to vector<8x8xf32>
    %86 = vector.extract_strided_slice %15 {offsets = [0, 88], sizes = [8, 8], strides = [1, 1]} : vector<8x96xf32> to vector<8x8xf32>
    %cst_33 = arith.constant dense<0.000000e+00> : vector<8x8xf32>
    %87 = tpu.matmul %84, %85, %cst_33 {dimension_numbers = #tpu.dot_dimension_numbers<[1], [1], [0], [0], [0, 0, 1, 0], [], []>} : vector<8x8xf32>, vector<8x8xf32>, vector<8x8xf32> -> vector<8x8xf32>
    %cst_34 = arith.constant 0.353553385 : f32
    %88 = vector.broadcast %cst_34 : f32 to vector<8x8xf32>
    %89 = arith.mulf %87, %88 : vector<8x8xf32>
    %90 = vector.broadcast %16 : vector<1x8xf32> to vector<8x8xf32>
    %91 = arith.addf %89, %90 : vector<8x8xf32>
    %cst_35 = arith.constant dense<0xFF800000> : vector<8xf32>
    %92 = vector.multi_reduction <maximumf>, %91, %cst_35 [1] : vector<8x8xf32> to vector<8xf32>
    %93 = vector.shape_cast %92 : vector<8xf32> to vector<8x1xf32>
    %94 = vector.broadcast %93 : vector<8x1xf32> to vector<8x8xf32>
    %95 = arith.subf %91, %94 : vector<8x8xf32>
    %96 = math.exp %95 : vector<8x8xf32>
    %cst_36 = arith.constant dense<0.000000e+00> : vector<8xf32>
    %97 = vector.multi_reduction <add>, %96, %cst_36 [1] : vector<8x8xf32> to vector<8xf32>
    %98 = vector.shape_cast %97 : vector<8xf32> to vector<8x1xf32>
    %99 = tpu.reciprocal %98 {approx = true} : vector<8x1xf32> -> vector<8x1xf32>
    %100 = vector.broadcast %99 : vector<8x1xf32> to vector<8x8xf32>
    %101 = arith.mulf %96, %100 : vector<8x8xf32>
    %cst_37 = arith.constant dense<0.000000e+00> : vector<8x8xf32>
    %102 = tpu.matmul %101, %86, %cst_37 {dimension_numbers = #tpu.dot_dimension_numbers<[1], [0], [0], [1], [0, 0, 1, 1], [], []>} : vector<8x8xf32>, vector<8x8xf32>, vector<8x8xf32> -> vector<8x8xf32>
    %103 = vector.extract_strided_slice %7 {offsets = [24, 0], sizes = [8, 32], strides = [1, 1]} : vector<32x32xf32> to vector<8x32xf32>
    %cst_38 = arith.constant dense<0.000000e+00> : vector<8x32xf32>
    %104 = tpu.matmul %102, %103, %cst_38 {dimension_numbers = #tpu.dot_dimension_numbers<[1], [0], [0], [1], [0, 0, 1, 1], [], []>} : vector<8x8xf32>, vector<8x32xf32>, vector<8x32xf32> -> vector<8x32xf32>
    %105 = arith.addf %83, %104 : vector<8x32xf32>
    %106 = vector.extract_strided_slice %14 {offsets = [8, 0], sizes = [8, 96], strides = [1, 1]} : vector<16x96xf32> to vector<8x96xf32>
    %107 = vector.extract_strided_slice %5 {offsets = [1, 0], sizes = [1, 8], strides = [1, 1]} : vector<2x8xf32> to vector<1x8xf32>
    %cst_39 = arith.constant 0.000000e+00 : f32
    %108 = vector.broadcast %cst_39 : f32 to vector<8x32xf32>
    %109 = vector.extract_strided_slice %106 {offsets = [0, 0], sizes = [8, 8], strides = [1, 1]} : vector<8x96xf32> to vector<8x8xf32>
    %110 = vector.extract_strided_slice %106 {offsets = [0, 32], sizes = [8, 8], strides = [1, 1]} : vector<8x96xf32> to vector<8x8xf32>
    %111 = vector.extract_strided_slice %106 {offsets = [0, 64], sizes = [8, 8], strides = [1, 1]} : vector<8x96xf32> to vector<8x8xf32>
    %cst_40 = arith.constant dense<0.000000e+00> : vector<8x8xf32>
    %112 = tpu.matmul %109, %110, %cst_40 {dimension_numbers = #tpu.dot_dimension_numbers<[1], [1], [0], [0], [0, 0, 1, 0], [], []>} : vector<8x8xf32>, vector<8x8xf32>, vector<8x8xf32> -> vector<8x8xf32>
    %cst_41 = arith.constant 0.353553385 : f32
    %113 = vector.broadcast %cst_41 : f32 to vector<8x8xf32>
    %114 = arith.mulf %112, %113 : vector<8x8xf32>
    %115 = vector.broadcast %107 : vector<1x8xf32> to vector<8x8xf32>
    %116 = arith.addf %114, %115 : vector<8x8xf32>
    %cst_42 = arith.constant dense<0xFF800000> : vector<8xf32>
    %117 = vector.multi_reduction <maximumf>, %116, %cst_42 [1] : vector<8x8xf32> to vector<8xf32>
    %118 = vector.shape_cast %117 : vector<8xf32> to vector<8x1xf32>
    %119 = vector.broadcast %118 : vector<8x1xf32> to vector<8x8xf32>
    %120 = arith.subf %116, %119 : vector<8x8xf32>
    %121 = math.exp %120 : vector<8x8xf32>
    %cst_43 = arith.constant dense<0.000000e+00> : vector<8xf32>
    %122 = vector.multi_reduction <add>, %121, %cst_43 [1] : vector<8x8xf32> to vector<8xf32>
    %123 = vector.shape_cast %122 : vector<8xf32> to vector<8x1xf32>
    %124 = tpu.reciprocal %123 {approx = true} : vector<8x1xf32> -> vector<8x1xf32>
    %125 = vector.broadcast %124 : vector<8x1xf32> to vector<8x8xf32>
    %126 = arith.mulf %121, %125 : vector<8x8xf32>
    %cst_44 = arith.constant dense<0.000000e+00> : vector<8x8xf32>
    %127 = tpu.matmul %126, %111, %cst_44 {dimension_numbers = #tpu.dot_dimension_numbers<[1], [0], [0], [1], [0, 0, 1, 1], [], []>} : vector<8x8xf32>, vector<8x8xf32>, vector<8x8xf32> -> vector<8x8xf32>
    %128 = vector.extract_strided_slice %7 {offsets = [0, 0], sizes = [8, 32], strides = [1, 1]} : vector<32x32xf32> to vector<8x32xf32>
    %cst_45 = arith.constant dense<0.000000e+00> : vector<8x32xf32>
    %129 = tpu.matmul %127, %128, %cst_45 {dimension_numbers = #tpu.dot_dimension_numbers<[1], [0], [0], [1], [0, 0, 1, 1], [], []>} : vector<8x8xf32>, vector<8x32xf32>, vector<8x32xf32> -> vector<8x32xf32>
    %130 = arith.addf %108, %129 : vector<8x32xf32>
    %131 = vector.extract_strided_slice %106 {offsets = [0, 8], sizes = [8, 8], strides = [1, 1]} : vector<8x96xf32> to vector<8x8xf32>
    %132 = vector.extract_strided_slice %106 {offsets = [0, 40], sizes = [8, 8], strides = [1, 1]} : vector<8x96xf32> to vector<8x8xf32>
    %133 = vector.extract_strided_slice %106 {offsets = [0, 72], sizes = [8, 8], strides = [1, 1]} : vector<8x96xf32> to vector<8x8xf32>
    %cst_46 = arith.constant dense<0.000000e+00> : vector<8x8xf32>
    %134 = tpu.matmul %131, %132, %cst_46 {dimension_numbers = #tpu.dot_dimension_numbers<[1], [1], [0], [0], [0, 0, 1, 0], [], []>} : vector<8x8xf32>, vector<8x8xf32>, vector<8x8xf32> -> vector<8x8xf32>
    %cst_47 = arith.constant 0.353553385 : f32
    %135 = vector.broadcast %cst_47 : f32 to vector<8x8xf32>
    %136 = arith.mulf %134, %135 : vector<8x8xf32>
    %137 = vector.broadcast %107 : vector<1x8xf32> to vector<8x8xf32>
    %138 = arith.addf %136, %137 : vector<8x8xf32>
    %cst_48 = arith.constant dense<0xFF800000> : vector<8xf32>
    %139 = vector.multi_reduction <maximumf>, %138, %cst_48 [1] : vector<8x8xf32> to vector<8xf32>
    %140 = vector.shape_cast %139 : vector<8xf32> to vector<8x1xf32>
    %141 = vector.broadcast %140 : vector<8x1xf32> to vector<8x8xf32>
    %142 = arith.subf %138, %141 : vector<8x8xf32>
    %143 = math.exp %142 : vector<8x8xf32>
    %cst_49 = arith.constant dense<0.000000e+00> : vector<8xf32>
    %144 = vector.multi_reduction <add>, %143, %cst_49 [1] : vector<8x8xf32> to vector<8xf32>
    %145 = vector.shape_cast %144 : vector<8xf32> to vector<8x1xf32>
    %146 = tpu.reciprocal %145 {approx = true} : vector<8x1xf32> -> vector<8x1xf32>
    %147 = vector.broadcast %146 : vector<8x1xf32> to vector<8x8xf32>
    %148 = arith.mulf %143, %147 : vector<8x8xf32>
    %cst_50 = arith.constant dense<0.000000e+00> : vector<8x8xf32>
    %149 = tpu.matmul %148, %133, %cst_50 {dimension_numbers = #tpu.dot_dimension_numbers<[1], [0], [0], [1], [0, 0, 1, 1], [], []>} : vector<8x8xf32>, vector<8x8xf32>, vector<8x8xf32> -> vector<8x8xf32>
    %150 = vector.extract_strided_slice %7 {offsets = [8, 0], sizes = [8, 32], strides = [1, 1]} : vector<32x32xf32> to vector<8x32xf32>
    %cst_51 = arith.constant dense<0.000000e+00> : vector<8x32xf32>
    %151 = tpu.matmul %149, %150, %cst_51 {dimension_numbers = #tpu.dot_dimension_numbers<[1], [0], [0], [1], [0, 0, 1, 1], [], []>} : vector<8x8xf32>, vector<8x32xf32>, vector<8x32xf32> -> vector<8x32xf32>
    %152 = arith.addf %130, %151 : vector<8x32xf32>
    %153 = vector.extract_strided_slice %106 {offsets = [0, 16], sizes = [8, 8], strides = [1, 1]} : vector<8x96xf32> to vector<8x8xf32>
    %154 = vector.extract_strided_slice %106 {offsets = [0, 48], sizes = [8, 8], strides = [1, 1]} : vector<8x96xf32> to vector<8x8xf32>
    %155 = vector.extract_strided_slice %106 {offsets = [0, 80], sizes = [8, 8], strides = [1, 1]} : vector<8x96xf32> to vector<8x8xf32>
    %cst_52 = arith.constant dense<0.000000e+00> : vector<8x8xf32>
    %156 = tpu.matmul %153, %154, %cst_52 {dimension_numbers = #tpu.dot_dimension_numbers<[1], [1], [0], [0], [0, 0, 1, 0], [], []>} : vector<8x8xf32>, vector<8x8xf32>, vector<8x8xf32> -> vector<8x8xf32>
    %cst_53 = arith.constant 0.353553385 : f32
    %157 = vector.broadcast %cst_53 : f32 to vector<8x8xf32>
    %158 = arith.mulf %156, %157 : vector<8x8xf32>
    %159 = vector.broadcast %107 : vector<1x8xf32> to vector<8x8xf32>
    %160 = arith.addf %158, %159 : vector<8x8xf32>
    %cst_54 = arith.constant dense<0xFF800000> : vector<8xf32>
    %161 = vector.multi_reduction <maximumf>, %160, %cst_54 [1] : vector<8x8xf32> to vector<8xf32>
    %162 = vector.shape_cast %161 : vector<8xf32> to vector<8x1xf32>
    %163 = vector.broadcast %162 : vector<8x1xf32> to vector<8x8xf32>
    %164 = arith.subf %160, %163 : vector<8x8xf32>
    %165 = math.exp %164 : vector<8x8xf32>
    %cst_55 = arith.constant dense<0.000000e+00> : vector<8xf32>
    %166 = vector.multi_reduction <add>, %165, %cst_55 [1] : vector<8x8xf32> to vector<8xf32>
    %167 = vector.shape_cast %166 : vector<8xf32> to vector<8x1xf32>
    %168 = tpu.reciprocal %167 {approx = true} : vector<8x1xf32> -> vector<8x1xf32>
    %169 = vector.broadcast %168 : vector<8x1xf32> to vector<8x8xf32>
    %170 = arith.mulf %165, %169 : vector<8x8xf32>
    %cst_56 = arith.constant dense<0.000000e+00> : vector<8x8xf32>
    %171 = tpu.matmul %170, %155, %cst_56 {dimension_numbers = #tpu.dot_dimension_numbers<[1], [0], [0], [1], [0, 0, 1, 1], [], []>} : vector<8x8xf32>, vector<8x8xf32>, vector<8x8xf32> -> vector<8x8xf32>
    %172 = vector.extract_strided_slice %7 {offsets = [16, 0], sizes = [8, 32], strides = [1, 1]} : vector<32x32xf32> to vector<8x32xf32>
    %cst_57 = arith.constant dense<0.000000e+00> : vector<8x32xf32>
    %173 = tpu.matmul %171, %172, %cst_57 {dimension_numbers = #tpu.dot_dimension_numbers<[1], [0], [0], [1], [0, 0, 1, 1], [], []>} : vector<8x8xf32>, vector<8x32xf32>, vector<8x32xf32> -> vector<8x32xf32>
    %174 = arith.addf %152, %173 : vector<8x32xf32>
    %175 = vector.extract_strided_slice %106 {offsets = [0, 24], sizes = [8, 8], strides = [1, 1]} : vector<8x96xf32> to vector<8x8xf32>
    %176 = vector.extract_strided_slice %106 {offsets = [0, 56], sizes = [8, 8], strides = [1, 1]} : vector<8x96xf32> to vector<8x8xf32>
    %177 = vector.extract_strided_slice %106 {offsets = [0, 88], sizes = [8, 8], strides = [1, 1]} : vector<8x96xf32> to vector<8x8xf32>
    %cst_58 = arith.constant dense<0.000000e+00> : vector<8x8xf32>
    %178 = tpu.matmul %175, %176, %cst_58 {dimension_numbers = #tpu.dot_dimension_numbers<[1], [1], [0], [0], [0, 0, 1, 0], [], []>} : vector<8x8xf32>, vector<8x8xf32>, vector<8x8xf32> -> vector<8x8xf32>
    %cst_59 = arith.constant 0.353553385 : f32
    %179 = vector.broadcast %cst_59 : f32 to vector<8x8xf32>
    %180 = arith.mulf %178, %179 : vector<8x8xf32>
    %181 = vector.broadcast %107 : vector<1x8xf32> to vector<8x8xf32>
    %182 = arith.addf %180, %181 : vector<8x8xf32>
    %cst_60 = arith.constant dense<0xFF800000> : vector<8xf32>
    %183 = vector.multi_reduction <maximumf>, %182, %cst_60 [1] : vector<8x8xf32> to vector<8xf32>
    %184 = vector.shape_cast %183 : vector<8xf32> to vector<8x1xf32>
    %185 = vector.broadcast %184 : vector<8x1xf32> to vector<8x8xf32>
    %186 = arith.subf %182, %185 : vector<8x8xf32>
    %187 = math.exp %186 : vector<8x8xf32>
    %cst_61 = arith.constant dense<0.000000e+00> : vector<8xf32>
    %188 = vector.multi_reduction <add>, %187, %cst_61 [1] : vector<8x8xf32> to vector<8xf32>
    %189 = vector.shape_cast %188 : vector<8xf32> to vector<8x1xf32>
    %190 = tpu.reciprocal %189 {approx = true} : vector<8x1xf32> -> vector<8x1xf32>
    %191 = vector.broadcast %190 : vector<8x1xf32> to vector<8x8xf32>
    %192 = arith.mulf %187, %191 : vector<8x8xf32>
    %cst_62 = arith.constant dense<0.000000e+00> : vector<8x8xf32>
    %193 = tpu.matmul %192, %177, %cst_62 {dimension_numbers = #tpu.dot_dimension_numbers<[1], [0], [0], [1], [0, 0, 1, 1], [], []>} : vector<8x8xf32>, vector<8x8xf32>, vector<8x8xf32> -> vector<8x8xf32>
    %194 = vector.extract_strided_slice %7 {offsets = [24, 0], sizes = [8, 32], strides = [1, 1]} : vector<32x32xf32> to vector<8x32xf32>
    %cst_63 = arith.constant dense<0.000000e+00> : vector<8x32xf32>
    %195 = tpu.matmul %193, %194, %cst_63 {dimension_numbers = #tpu.dot_dimension_numbers<[1], [0], [0], [1], [0, 0, 1, 1], [], []>} : vector<8x8xf32>, vector<8x32xf32>, vector<8x32xf32> -> vector<8x32xf32>
    %196 = arith.addf %174, %195 : vector<8x32xf32>
    %197 = tpu.concatenate %105, %196 in 0 : vector<8x32xf32>, vector<8x32xf32> -> vector<16x32xf32>
    %c0_64 = arith.constant 0 : index
    %c0_65 = arith.constant 0 : index
    %c0_66 = arith.constant 0 : index
    %198 = vector.load %arg6[%c0_64, %c0_65, %c0_66] : memref<3x1x32xf32, #tpu.memory_space<vmem>>, vector<1x1x32xf32>
    %199 = vector.shape_cast %198 : vector<1x1x32xf32> to vector<1x32xf32>
    %200 = vector.broadcast %199 : vector<1x32xf32> to vector<16x32xf32>
    %201 = arith.addf %197, %200 : vector<16x32xf32>
    %202 = arith.addf %0, %201 : vector<16x32xf32>
    %c0_67 = arith.constant 0 : index
    %c0_68 = arith.constant 0 : index
    %c0_69 = arith.constant 0 : index
    %203 = vector.load %arg7[%c0_67, %c0_68, %c0_69] : memref<3x1x32xf32, #tpu.memory_space<vmem>>, vector<1x1x32xf32>
    %204 = vector.shape_cast %203 : vector<1x1x32xf32> to vector<1x32xf32>
    %c0_70 = arith.constant 0 : index
    %c0_71 = arith.constant 0 : index
    %c0_72 = arith.constant 0 : index
    %205 = vector.load %arg8[%c0_70, %c0_71, %c0_72] : memref<3x1x32xf32, #tpu.memory_space<vmem>>, vector<1x1x32xf32>
    %206 = vector.shape_cast %205 : vector<1x1x32xf32> to vector<1x32xf32>
    %cst_73 = arith.constant dense<0.000000e+00> : vector<16xf32>
    %207 = vector.multi_reduction <add>, %202, %cst_73 [1] : vector<16x32xf32> to vector<16xf32>
    %208 = vector.shape_cast %207 : vector<16xf32> to vector<16x1xf32>
    %cst_74 = arith.constant 3.200000e+01 : f32
    %209 = vector.broadcast %cst_74 : f32 to vector<16x1xf32>
    %210 = arith.divf %208, %209 : vector<16x1xf32>
    %211 = vector.broadcast %210 : vector<16x1xf32> to vector<16x32xf32>
    %212 = arith.subf %202, %211 : vector<16x32xf32>
    %213 = arith.mulf %212, %212 : vector<16x32xf32>
    %cst_75 = arith.constant dense<0.000000e+00> : vector<16xf32>
    %214 = vector.multi_reduction <add>, %213, %cst_75 [1] : vector<16x32xf32> to vector<16xf32>
    %215 = vector.shape_cast %214 : vector<16xf32> to vector<16x1xf32>
    %cst_76 = arith.constant 3.200000e+01 : f32
    %216 = vector.broadcast %cst_76 : f32 to vector<16x1xf32>
    %217 = arith.divf %215, %216 : vector<16x1xf32>
    %218 = vector.broadcast %210 : vector<16x1xf32> to vector<16x32xf32>
    %219 = arith.subf %202, %218 : vector<16x32xf32>
    %cst_77 = arith.constant 9.99999974E-6 : f32
    %220 = vector.broadcast %cst_77 : f32 to vector<16x1xf32>
    %221 = arith.addf %217, %220 : vector<16x1xf32>
    %222 = math.rsqrt %221 : vector<16x1xf32>
    %223 = vector.broadcast %222 : vector<16x1xf32> to vector<16x32xf32>
    %224 = arith.mulf %219, %223 : vector<16x32xf32>
    %225 = vector.broadcast %204 : vector<1x32xf32> to vector<16x32xf32>
    %226 = arith.mulf %224, %225 : vector<16x32xf32>
    %227 = vector.broadcast %206 : vector<1x32xf32> to vector<16x32xf32>
    %228 = arith.addf %226, %227 : vector<16x32xf32>
    %c0_78 = arith.constant 0 : index
    %c0_79 = arith.constant 0 : index
    %c0_80 = arith.constant 0 : index
    %229 = vector.load %arg9[%c0_78, %c0_79, %c0_80] : memref<3x32x128xf32, #tpu.memory_space<vmem>>, vector<1x32x128xf32>
    %230 = vector.shape_cast %229 : vector<1x32x128xf32> to vector<32x128xf32>
    %cst_81 = arith.constant dense<0.000000e+00> : vector<16x128xf32>
    %231 = tpu.matmul %228, %230, %cst_81 {dimension_numbers = #tpu.dot_dimension_numbers<[1], [0], [0], [1], [0, 0, 1, 1], [], []>} : vector<16x32xf32>, vector<32x128xf32>, vector<16x128xf32> -> vector<16x128xf32>
    %c0_82 = arith.constant 0 : index
    %c0_83 = arith.constant 0 : index
    %c0_84 = arith.constant 0 : index
    %232 = vector.load %arg10[%c0_82, %c0_83, %c0_84] : memref<3x1x128xf32, #tpu.memory_space<vmem>>, vector<1x1x128xf32>
    %233 = vector.shape_cast %232 : vector<1x1x128xf32> to vector<1x128xf32>
    %234 = vector.broadcast %233 : vector<1x128xf32> to vector<16x128xf32>
    %235 = arith.addf %231, %234 : vector<16x128xf32>
    %cst_85 = arith.constant 5.000000e-01 : f32
    %236 = vector.broadcast %cst_85 : f32 to vector<16x128xf32>
    %237 = arith.mulf %236, %235 : vector<16x128xf32>
    %cst_86 = arith.constant 4.471500e-02 : f32
    %238 = vector.broadcast %cst_86 : f32 to vector<16x128xf32>
    %239 = arith.mulf %238, %235 : vector<16x128xf32>
    %240 = arith.mulf %239, %235 : vector<16x128xf32>
    %241 = arith.mulf %240, %235 : vector<16x128xf32>
    %242 = arith.addf %235, %241 : vector<16x128xf32>
    %cst_87 = arith.constant 0.797884583 : f32
    %243 = vector.broadcast %cst_87 : f32 to vector<16x128xf32>
    %244 = arith.mulf %243, %242 : vector<16x128xf32>
    %245 = math.tanh %244 : vector<16x128xf32>
    %cst_88 = arith.constant 1.000000e+00 : f32
    %246 = vector.broadcast %cst_88 : f32 to vector<16x128xf32>
    %247 = arith.addf %246, %245 : vector<16x128xf32>
    %248 = arith.mulf %237, %247 : vector<16x128xf32>
    %c0_89 = arith.constant 0 : index
    %c0_90 = arith.constant 0 : index
    %c0_91 = arith.constant 0 : index
    %249 = vector.load %arg11[%c0_89, %c0_90, %c0_91] : memref<3x128x32xf32, #tpu.memory_space<vmem>>, vector<1x128x32xf32>
    %250 = vector.shape_cast %249 : vector<1x128x32xf32> to vector<128x32xf32>
    %cst_92 = arith.constant dense<0.000000e+00> : vector<16x32xf32>
    %251 = tpu.matmul %248, %250, %cst_92 {dimension_numbers = #tpu.dot_dimension_numbers<[1], [0], [0], [1], [0, 0, 1, 1], [], []>} : vector<16x128xf32>, vector<128x32xf32>, vector<16x32xf32> -> vector<16x32xf32>
    %c0_93 = arith.constant 0 : index
    %c0_94 = arith.constant 0 : index
    %c0_95 = arith.constant 0 : index
    %252 = vector.load %arg12[%c0_93, %c0_94, %c0_95] : memref<3x1x32xf32, #tpu.memory_space<vmem>>, vector<1x1x32xf32>
    %253 = vector.shape_cast %252 : vector<1x1x32xf32> to vector<1x32xf32>
    %254 = vector.broadcast %253 : vector<1x32xf32> to vector<16x32xf32>
    %255 = arith.addf %251, %254 : vector<16x32xf32>
    %256 = arith.addf %228, %255 : vector<16x32xf32>
    %c0_96 = arith.constant 0 : index
    %c0_97 = arith.constant 0 : index
    %c0_98 = arith.constant 0 : index
    %257 = vector.load %arg13[%c0_96, %c0_97, %c0_98] : memref<3x1x32xf32, #tpu.memory_space<vmem>>, vector<1x1x32xf32>
    %258 = vector.shape_cast %257 : vector<1x1x32xf32> to vector<1x32xf32>
    %c0_99 = arith.constant 0 : index
    %c0_100 = arith.constant 0 : index
    %c0_101 = arith.constant 0 : index
    %259 = vector.load %arg14[%c0_99, %c0_100, %c0_101] : memref<3x1x32xf32, #tpu.memory_space<vmem>>, vector<1x1x32xf32>
    %260 = vector.shape_cast %259 : vector<1x1x32xf32> to vector<1x32xf32>
    %cst_102 = arith.constant dense<0.000000e+00> : vector<16xf32>
    %261 = vector.multi_reduction <add>, %256, %cst_102 [1] : vector<16x32xf32> to vector<16xf32>
    %262 = vector.shape_cast %261 : vector<16xf32> to vector<16x1xf32>
    %cst_103 = arith.constant 3.200000e+01 : f32
    %263 = vector.broadcast %cst_103 : f32 to vector<16x1xf32>
    %264 = arith.divf %262, %263 : vector<16x1xf32>
    %265 = vector.broadcast %264 : vector<16x1xf32> to vector<16x32xf32>
    %266 = arith.subf %256, %265 : vector<16x32xf32>
    %267 = arith.mulf %266, %266 : vector<16x32xf32>
    %cst_104 = arith.constant dense<0.000000e+00> : vector<16xf32>
    %268 = vector.multi_reduction <add>, %267, %cst_104 [1] : vector<16x32xf32> to vector<16xf32>
    %269 = vector.shape_cast %268 : vector<16xf32> to vector<16x1xf32>
    %cst_105 = arith.constant 3.200000e+01 : f32
    %270 = vector.broadcast %cst_105 : f32 to vector<16x1xf32>
    %271 = arith.divf %269, %270 : vector<16x1xf32>
    %272 = vector.broadcast %264 : vector<16x1xf32> to vector<16x32xf32>
    %273 = arith.subf %256, %272 : vector<16x32xf32>
    %cst_106 = arith.constant 9.99999974E-6 : f32
    %274 = vector.broadcast %cst_106 : f32 to vector<16x1xf32>
    %275 = arith.addf %271, %274 : vector<16x1xf32>
    %276 = math.rsqrt %275 : vector<16x1xf32>
    %277 = vector.broadcast %276 : vector<16x1xf32> to vector<16x32xf32>
    %278 = arith.mulf %273, %277 : vector<16x32xf32>
    %279 = vector.broadcast %258 : vector<1x32xf32> to vector<16x32xf32>
    %280 = arith.mulf %278, %279 : vector<16x32xf32>
    %281 = vector.broadcast %260 : vector<1x32xf32> to vector<16x32xf32>
    %282 = arith.addf %280, %281 : vector<16x32xf32>
    %c1 = arith.constant 1 : index
    %c0_107 = arith.constant 0 : index
    %c0_108 = arith.constant 0 : index
    %283 = vector.load %arg5[%c1, %c0_107, %c0_108] : memref<3x32x32xf32, #tpu.memory_space<vmem>>, vector<1x32x32xf32>
    %284 = vector.shape_cast %283 : vector<1x32x32xf32> to vector<32x32xf32>
    %c1_109 = arith.constant 1 : index
    %c0_110 = arith.constant 0 : index
    %c0_111 = arith.constant 0 : index
    %285 = vector.load %arg3[%c1_109, %c0_110, %c0_111] : memref<3x32x96xf32, #tpu.memory_space<vmem>>, vector<1x32x96xf32>
    %286 = vector.shape_cast %285 : vector<1x32x96xf32> to vector<32x96xf32>
    %cst_112 = arith.constant dense<0.000000e+00> : vector<16x96xf32>
    %287 = tpu.matmul %282, %286, %cst_112 {dimension_numbers = #tpu.dot_dimension_numbers<[1], [0], [0], [1], [0, 0, 1, 1], [], []>} : vector<16x32xf32>, vector<32x96xf32>, vector<16x96xf32> -> vector<16x96xf32>
    %c1_113 = arith.constant 1 : index
    %c0_114 = arith.constant 0 : index
    %c0_115 = arith.constant 0 : index
    %288 = vector.load %arg4[%c1_113, %c0_114, %c0_115] : memref<3x1x96xf32, #tpu.memory_space<vmem>>, vector<1x1x96xf32>
    %289 = vector.shape_cast %288 : vector<1x1x96xf32> to vector<1x96xf32>
    %290 = vector.broadcast %289 : vector<1x96xf32> to vector<16x96xf32>
    %291 = arith.addf %287, %290 : vector<16x96xf32>
    %292 = vector.extract_strided_slice %291 {offsets = [0, 0], sizes = [8, 96], strides = [1, 1]} : vector<16x96xf32> to vector<8x96xf32>
    %293 = vector.extract_strided_slice %5 {offsets = [0, 0], sizes = [1, 8], strides = [1, 1]} : vector<2x8xf32> to vector<1x8xf32>
    %cst_116 = arith.constant 0.000000e+00 : f32
    %294 = vector.broadcast %cst_116 : f32 to vector<8x32xf32>
    %295 = vector.extract_strided_slice %292 {offsets = [0, 0], sizes = [8, 8], strides = [1, 1]} : vector<8x96xf32> to vector<8x8xf32>
    %296 = vector.extract_strided_slice %292 {offsets = [0, 32], sizes = [8, 8], strides = [1, 1]} : vector<8x96xf32> to vector<8x8xf32>
    %297 = vector.extract_strided_slice %292 {offsets = [0, 64], sizes = [8, 8], strides = [1, 1]} : vector<8x96xf32> to vector<8x8xf32>
    %cst_117 = arith.constant dense<0.000000e+00> : vector<8x8xf32>
    %298 = tpu.matmul %295, %296, %cst_117 {dimension_numbers = #tpu.dot_dimension_numbers<[1], [1], [0], [0], [0, 0, 1, 0], [], []>} : vector<8x8xf32>, vector<8x8xf32>, vector<8x8xf32> -> vector<8x8xf32>
    %cst_118 = arith.constant 0.353553385 : f32
    %299 = vector.broadcast %cst_118 : f32 to vector<8x8xf32>
    %300 = arith.mulf %298, %299 : vector<8x8xf32>
    %301 = vector.broadcast %293 : vector<1x8xf32> to vector<8x8xf32>
    %302 = arith.addf %300, %301 : vector<8x8xf32>
    %cst_119 = arith.constant dense<0xFF800000> : vector<8xf32>
    %303 = vector.multi_reduction <maximumf>, %302, %cst_119 [1] : vector<8x8xf32> to vector<8xf32>
    %304 = vector.shape_cast %303 : vector<8xf32> to vector<8x1xf32>
    %305 = vector.broadcast %304 : vector<8x1xf32> to vector<8x8xf32>
    %306 = arith.subf %302, %305 : vector<8x8xf32>
    %307 = math.exp %306 : vector<8x8xf32>
    %cst_120 = arith.constant dense<0.000000e+00> : vector<8xf32>
    %308 = vector.multi_reduction <add>, %307, %cst_120 [1] : vector<8x8xf32> to vector<8xf32>
    %309 = vector.shape_cast %308 : vector<8xf32> to vector<8x1xf32>
    %310 = tpu.reciprocal %309 {approx = true} : vector<8x1xf32> -> vector<8x1xf32>
    %311 = vector.broadcast %310 : vector<8x1xf32> to vector<8x8xf32>
    %312 = arith.mulf %307, %311 : vector<8x8xf32>
    %cst_121 = arith.constant dense<0.000000e+00> : vector<8x8xf32>
    %313 = tpu.matmul %312, %297, %cst_121 {dimension_numbers = #tpu.dot_dimension_numbers<[1], [0], [0], [1], [0, 0, 1, 1], [], []>} : vector<8x8xf32>, vector<8x8xf32>, vector<8x8xf32> -> vector<8x8xf32>
    %314 = vector.extract_strided_slice %284 {offsets = [0, 0], sizes = [8, 32], strides = [1, 1]} : vector<32x32xf32> to vector<8x32xf32>
    %cst_122 = arith.constant dense<0.000000e+00> : vector<8x32xf32>
    %315 = tpu.matmul %313, %314, %cst_122 {dimension_numbers = #tpu.dot_dimension_numbers<[1], [0], [0], [1], [0, 0, 1, 1], [], []>} : vector<8x8xf32>, vector<8x32xf32>, vector<8x32xf32> -> vector<8x32xf32>
    %316 = arith.addf %294, %315 : vector<8x32xf32>
    %317 = vector.extract_strided_slice %292 {offsets = [0, 8], sizes = [8, 8], strides = [1, 1]} : vector<8x96xf32> to vector<8x8xf32>
    %318 = vector.extract_strided_slice %292 {offsets = [0, 40], sizes = [8, 8], strides = [1, 1]} : vector<8x96xf32> to vector<8x8xf32>
    %319 = vector.extract_strided_slice %292 {offsets = [0, 72], sizes = [8, 8], strides = [1, 1]} : vector<8x96xf32> to vector<8x8xf32>
    %cst_123 = arith.constant dense<0.000000e+00> : vector<8x8xf32>
    %320 = tpu.matmul %317, %318, %cst_123 {dimension_numbers = #tpu.dot_dimension_numbers<[1], [1], [0], [0], [0, 0, 1, 0], [], []>} : vector<8x8xf32>, vector<8x8xf32>, vector<8x8xf32> -> vector<8x8xf32>
    %cst_124 = arith.constant 0.353553385 : f32
    %321 = vector.broadcast %cst_124 : f32 to vector<8x8xf32>
    %322 = arith.mulf %320, %321 : vector<8x8xf32>
    %323 = vector.broadcast %293 : vector<1x8xf32> to vector<8x8xf32>
    %324 = arith.addf %322, %323 : vector<8x8xf32>
    %cst_125 = arith.constant dense<0xFF800000> : vector<8xf32>
    %325 = vector.multi_reduction <maximumf>, %324, %cst_125 [1] : vector<8x8xf32> to vector<8xf32>
    %326 = vector.shape_cast %325 : vector<8xf32> to vector<8x1xf32>
    %327 = vector.broadcast %326 : vector<8x1xf32> to vector<8x8xf32>
    %328 = arith.subf %324, %327 : vector<8x8xf32>
    %329 = math.exp %328 : vector<8x8xf32>
    %cst_126 = arith.constant dense<0.000000e+00> : vector<8xf32>
    %330 = vector.multi_reduction <add>, %329, %cst_126 [1] : vector<8x8xf32> to vector<8xf32>
    %331 = vector.shape_cast %330 : vector<8xf32> to vector<8x1xf32>
    %332 = tpu.reciprocal %331 {approx = true} : vector<8x1xf32> -> vector<8x1xf32>
    %333 = vector.broadcast %332 : vector<8x1xf32> to vector<8x8xf32>
    %334 = arith.mulf %329, %333 : vector<8x8xf32>
    %cst_127 = arith.constant dense<0.000000e+00> : vector<8x8xf32>
    %335 = tpu.matmul %334, %319, %cst_127 {dimension_numbers = #tpu.dot_dimension_numbers<[1], [0], [0], [1], [0, 0, 1, 1], [], []>} : vector<8x8xf32>, vector<8x8xf32>, vector<8x8xf32> -> vector<8x8xf32>
    %336 = vector.extract_strided_slice %284 {offsets = [8, 0], sizes = [8, 32], strides = [1, 1]} : vector<32x32xf32> to vector<8x32xf32>
    %cst_128 = arith.constant dense<0.000000e+00> : vector<8x32xf32>
    %337 = tpu.matmul %335, %336, %cst_128 {dimension_numbers = #tpu.dot_dimension_numbers<[1], [0], [0], [1], [0, 0, 1, 1], [], []>} : vector<8x8xf32>, vector<8x32xf32>, vector<8x32xf32> -> vector<8x32xf32>
    %338 = arith.addf %316, %337 : vector<8x32xf32>
    %339 = vector.extract_strided_slice %292 {offsets = [0, 16], sizes = [8, 8], strides = [1, 1]} : vector<8x96xf32> to vector<8x8xf32>
    %340 = vector.extract_strided_slice %292 {offsets = [0, 48], sizes = [8, 8], strides = [1, 1]} : vector<8x96xf32> to vector<8x8xf32>
    %341 = vector.extract_strided_slice %292 {offsets = [0, 80], sizes = [8, 8], strides = [1, 1]} : vector<8x96xf32> to vector<8x8xf32>
    %cst_129 = arith.constant dense<0.000000e+00> : vector<8x8xf32>
    %342 = tpu.matmul %339, %340, %cst_129 {dimension_numbers = #tpu.dot_dimension_numbers<[1], [1], [0], [0], [0, 0, 1, 0], [], []>} : vector<8x8xf32>, vector<8x8xf32>, vector<8x8xf32> -> vector<8x8xf32>
    %cst_130 = arith.constant 0.353553385 : f32
    %343 = vector.broadcast %cst_130 : f32 to vector<8x8xf32>
    %344 = arith.mulf %342, %343 : vector<8x8xf32>
    %345 = vector.broadcast %293 : vector<1x8xf32> to vector<8x8xf32>
    %346 = arith.addf %344, %345 : vector<8x8xf32>
    %cst_131 = arith.constant dense<0xFF800000> : vector<8xf32>
    %347 = vector.multi_reduction <maximumf>, %346, %cst_131 [1] : vector<8x8xf32> to vector<8xf32>
    %348 = vector.shape_cast %347 : vector<8xf32> to vector<8x1xf32>
    %349 = vector.broadcast %348 : vector<8x1xf32> to vector<8x8xf32>
    %350 = arith.subf %346, %349 : vector<8x8xf32>
    %351 = math.exp %350 : vector<8x8xf32>
    %cst_132 = arith.constant dense<0.000000e+00> : vector<8xf32>
    %352 = vector.multi_reduction <add>, %351, %cst_132 [1] : vector<8x8xf32> to vector<8xf32>
    %353 = vector.shape_cast %352 : vector<8xf32> to vector<8x1xf32>
    %354 = tpu.reciprocal %353 {approx = true} : vector<8x1xf32> -> vector<8x1xf32>
    %355 = vector.broadcast %354 : vector<8x1xf32> to vector<8x8xf32>
    %356 = arith.mulf %351, %355 : vector<8x8xf32>
    %cst_133 = arith.constant dense<0.000000e+00> : vector<8x8xf32>
    %357 = tpu.matmul %356, %341, %cst_133 {dimension_numbers = #tpu.dot_dimension_numbers<[1], [0], [0], [1], [0, 0, 1, 1], [], []>} : vector<8x8xf32>, vector<8x8xf32>, vector<8x8xf32> -> vector<8x8xf32>
    %358 = vector.extract_strided_slice %284 {offsets = [16, 0], sizes = [8, 32], strides = [1, 1]} : vector<32x32xf32> to vector<8x32xf32>
    %cst_134 = arith.constant dense<0.000000e+00> : vector<8x32xf32>
    %359 = tpu.matmul %357, %358, %cst_134 {dimension_numbers = #tpu.dot_dimension_numbers<[1], [0], [0], [1], [0, 0, 1, 1], [], []>} : vector<8x8xf32>, vector<8x32xf32>, vector<8x32xf32> -> vector<8x32xf32>
    %360 = arith.addf %338, %359 : vector<8x32xf32>
    %361 = vector.extract_strided_slice %292 {offsets = [0, 24], sizes = [8, 8], strides = [1, 1]} : vector<8x96xf32> to vector<8x8xf32>
    %362 = vector.extract_strided_slice %292 {offsets = [0, 56], sizes = [8, 8], strides = [1, 1]} : vector<8x96xf32> to vector<8x8xf32>
    %363 = vector.extract_strided_slice %292 {offsets = [0, 88], sizes = [8, 8], strides = [1, 1]} : vector<8x96xf32> to vector<8x8xf32>
    %cst_135 = arith.constant dense<0.000000e+00> : vector<8x8xf32>
    %364 = tpu.matmul %361, %362, %cst_135 {dimension_numbers = #tpu.dot_dimension_numbers<[1], [1], [0], [0], [0, 0, 1, 0], [], []>} : vector<8x8xf32>, vector<8x8xf32>, vector<8x8xf32> -> vector<8x8xf32>
    %cst_136 = arith.constant 0.353553385 : f32
    %365 = vector.broadcast %cst_136 : f32 to vector<8x8xf32>
    %366 = arith.mulf %364, %365 : vector<8x8xf32>
    %367 = vector.broadcast %293 : vector<1x8xf32> to vector<8x8xf32>
    %368 = arith.addf %366, %367 : vector<8x8xf32>
    %cst_137 = arith.constant dense<0xFF800000> : vector<8xf32>
    %369 = vector.multi_reduction <maximumf>, %368, %cst_137 [1] : vector<8x8xf32> to vector<8xf32>
    %370 = vector.shape_cast %369 : vector<8xf32> to vector<8x1xf32>
    %371 = vector.broadcast %370 : vector<8x1xf32> to vector<8x8xf32>
    %372 = arith.subf %368, %371 : vector<8x8xf32>
    %373 = math.exp %372 : vector<8x8xf32>
    %cst_138 = arith.constant dense<0.000000e+00> : vector<8xf32>
    %374 = vector.multi_reduction <add>, %373, %cst_138 [1] : vector<8x8xf32> to vector<8xf32>
    %375 = vector.shape_cast %374 : vector<8xf32> to vector<8x1xf32>
    %376 = tpu.reciprocal %375 {approx = true} : vector<8x1xf32> -> vector<8x1xf32>
    %377 = vector.broadcast %376 : vector<8x1xf32> to vector<8x8xf32>
    %378 = arith.mulf %373, %377 : vector<8x8xf32>
    %cst_139 = arith.constant dense<0.000000e+00> : vector<8x8xf32>
    %379 = tpu.matmul %378, %363, %cst_139 {dimension_numbers = #tpu.dot_dimension_numbers<[1], [0], [0], [1], [0, 0, 1, 1], [], []>} : vector<8x8xf32>, vector<8x8xf32>, vector<8x8xf32> -> vector<8x8xf32>
    %380 = vector.extract_strided_slice %284 {offsets = [24, 0], sizes = [8, 32], strides = [1, 1]} : vector<32x32xf32> to vector<8x32xf32>
    %cst_140 = arith.constant dense<0.000000e+00> : vector<8x32xf32>
    %381 = tpu.matmul %379, %380, %cst_140 {dimension_numbers = #tpu.dot_dimension_numbers<[1], [0], [0], [1], [0, 0, 1, 1], [], []>} : vector<8x8xf32>, vector<8x32xf32>, vector<8x32xf32> -> vector<8x32xf32>
    %382 = arith.addf %360, %381 : vector<8x32xf32>
    %383 = vector.extract_strided_slice %291 {offsets = [8, 0], sizes = [8, 96], strides = [1, 1]} : vector<16x96xf32> to vector<8x96xf32>
    %384 = vector.extract_strided_slice %5 {offsets = [1, 0], sizes = [1, 8], strides = [1, 1]} : vector<2x8xf32> to vector<1x8xf32>
    %cst_141 = arith.constant 0.000000e+00 : f32
    %385 = vector.broadcast %cst_141 : f32 to vector<8x32xf32>
    %386 = vector.extract_strided_slice %383 {offsets = [0, 0], sizes = [8, 8], strides = [1, 1]} : vector<8x96xf32> to vector<8x8xf32>
    %387 = vector.extract_strided_slice %383 {offsets = [0, 32], sizes = [8, 8], strides = [1, 1]} : vector<8x96xf32> to vector<8x8xf32>
    %388 = vector.extract_strided_slice %383 {offsets = [0, 64], sizes = [8, 8], strides = [1, 1]} : vector<8x96xf32> to vector<8x8xf32>
    %cst_142 = arith.constant dense<0.000000e+00> : vector<8x8xf32>
    %389 = tpu.matmul %386, %387, %cst_142 {dimension_numbers = #tpu.dot_dimension_numbers<[1], [1], [0], [0], [0, 0, 1, 0], [], []>} : vector<8x8xf32>, vector<8x8xf32>, vector<8x8xf32> -> vector<8x8xf32>
    %cst_143 = arith.constant 0.353553385 : f32
    %390 = vector.broadcast %cst_143 : f32 to vector<8x8xf32>
    %391 = arith.mulf %389, %390 : vector<8x8xf32>
    %392 = vector.broadcast %384 : vector<1x8xf32> to vector<8x8xf32>
    %393 = arith.addf %391, %392 : vector<8x8xf32>
    %cst_144 = arith.constant dense<0xFF800000> : vector<8xf32>
    %394 = vector.multi_reduction <maximumf>, %393, %cst_144 [1] : vector<8x8xf32> to vector<8xf32>
    %395 = vector.shape_cast %394 : vector<8xf32> to vector<8x1xf32>
    %396 = vector.broadcast %395 : vector<8x1xf32> to vector<8x8xf32>
    %397 = arith.subf %393, %396 : vector<8x8xf32>
    %398 = math.exp %397 : vector<8x8xf32>
    %cst_145 = arith.constant dense<0.000000e+00> : vector<8xf32>
    %399 = vector.multi_reduction <add>, %398, %cst_145 [1] : vector<8x8xf32> to vector<8xf32>
    %400 = vector.shape_cast %399 : vector<8xf32> to vector<8x1xf32>
    %401 = tpu.reciprocal %400 {approx = true} : vector<8x1xf32> -> vector<8x1xf32>
    %402 = vector.broadcast %401 : vector<8x1xf32> to vector<8x8xf32>
    %403 = arith.mulf %398, %402 : vector<8x8xf32>
    %cst_146 = arith.constant dense<0.000000e+00> : vector<8x8xf32>
    %404 = tpu.matmul %403, %388, %cst_146 {dimension_numbers = #tpu.dot_dimension_numbers<[1], [0], [0], [1], [0, 0, 1, 1], [], []>} : vector<8x8xf32>, vector<8x8xf32>, vector<8x8xf32> -> vector<8x8xf32>
    %405 = vector.extract_strided_slice %284 {offsets = [0, 0], sizes = [8, 32], strides = [1, 1]} : vector<32x32xf32> to vector<8x32xf32>
    %cst_147 = arith.constant dense<0.000000e+00> : vector<8x32xf32>
    %406 = tpu.matmul %404, %405, %cst_147 {dimension_numbers = #tpu.dot_dimension_numbers<[1], [0], [0], [1], [0, 0, 1, 1], [], []>} : vector<8x8xf32>, vector<8x32xf32>, vector<8x32xf32> -> vector<8x32xf32>
    %407 = arith.addf %385, %406 : vector<8x32xf32>
    %408 = vector.extract_strided_slice %383 {offsets = [0, 8], sizes = [8, 8], strides = [1, 1]} : vector<8x96xf32> to vector<8x8xf32>
    %409 = vector.extract_strided_slice %383 {offsets = [0, 40], sizes = [8, 8], strides = [1, 1]} : vector<8x96xf32> to vector<8x8xf32>
    %410 = vector.extract_strided_slice %383 {offsets = [0, 72], sizes = [8, 8], strides = [1, 1]} : vector<8x96xf32> to vector<8x8xf32>
    %cst_148 = arith.constant dense<0.000000e+00> : vector<8x8xf32>
    %411 = tpu.matmul %408, %409, %cst_148 {dimension_numbers = #tpu.dot_dimension_numbers<[1], [1], [0], [0], [0, 0, 1, 0], [], []>} : vector<8x8xf32>, vector<8x8xf32>, vector<8x8xf32> -> vector<8x8xf32>
    %cst_149 = arith.constant 0.353553385 : f32
    %412 = vector.broadcast %cst_149 : f32 to vector<8x8xf32>
    %413 = arith.mulf %411, %412 : vector<8x8xf32>
    %414 = vector.broadcast %384 : vector<1x8xf32> to vector<8x8xf32>
    %415 = arith.addf %413, %414 : vector<8x8xf32>
    %cst_150 = arith.constant dense<0xFF800000> : vector<8xf32>
    %416 = vector.multi_reduction <maximumf>, %415, %cst_150 [1] : vector<8x8xf32> to vector<8xf32>
    %417 = vector.shape_cast %416 : vector<8xf32> to vector<8x1xf32>
    %418 = vector.broadcast %417 : vector<8x1xf32> to vector<8x8xf32>
    %419 = arith.subf %415, %418 : vector<8x8xf32>
    %420 = math.exp %419 : vector<8x8xf32>
    %cst_151 = arith.constant dense<0.000000e+00> : vector<8xf32>
    %421 = vector.multi_reduction <add>, %420, %cst_151 [1] : vector<8x8xf32> to vector<8xf32>
    %422 = vector.shape_cast %421 : vector<8xf32> to vector<8x1xf32>
    %423 = tpu.reciprocal %422 {approx = true} : vector<8x1xf32> -> vector<8x1xf32>
    %424 = vector.broadcast %423 : vector<8x1xf32> to vector<8x8xf32>
    %425 = arith.mulf %420, %424 : vector<8x8xf32>
    %cst_152 = arith.constant dense<0.000000e+00> : vector<8x8xf32>
    %426 = tpu.matmul %425, %410, %cst_152 {dimension_numbers = #tpu.dot_dimension_numbers<[1], [0], [0], [1], [0, 0, 1, 1], [], []>} : vector<8x8xf32>, vector<8x8xf32>, vector<8x8xf32> -> vector<8x8xf32>
    %427 = vector.extract_strided_slice %284 {offsets = [8, 0], sizes = [8, 32], strides = [1, 1]} : vector<32x32xf32> to vector<8x32xf32>
    %cst_153 = arith.constant dense<0.000000e+00> : vector<8x32xf32>
    %428 = tpu.matmul %426, %427, %cst_153 {dimension_numbers = #tpu.dot_dimension_numbers<[1], [0], [0], [1], [0, 0, 1, 1], [], []>} : vector<8x8xf32>, vector<8x32xf32>, vector<8x32xf32> -> vector<8x32xf32>
    %429 = arith.addf %407, %428 : vector<8x32xf32>
    %430 = vector.extract_strided_slice %383 {offsets = [0, 16], sizes = [8, 8], strides = [1, 1]} : vector<8x96xf32> to vector<8x8xf32>
    %431 = vector.extract_strided_slice %383 {offsets = [0, 48], sizes = [8, 8], strides = [1, 1]} : vector<8x96xf32> to vector<8x8xf32>
    %432 = vector.extract_strided_slice %383 {offsets = [0, 80], sizes = [8, 8], strides = [1, 1]} : vector<8x96xf32> to vector<8x8xf32>
    %cst_154 = arith.constant dense<0.000000e+00> : vector<8x8xf32>
    %433 = tpu.matmul %430, %431, %cst_154 {dimension_numbers = #tpu.dot_dimension_numbers<[1], [1], [0], [0], [0, 0, 1, 0], [], []>} : vector<8x8xf32>, vector<8x8xf32>, vector<8x8xf32> -> vector<8x8xf32>
    %cst_155 = arith.constant 0.353553385 : f32
    %434 = vector.broadcast %cst_155 : f32 to vector<8x8xf32>
    %435 = arith.mulf %433, %434 : vector<8x8xf32>
    %436 = vector.broadcast %384 : vector<1x8xf32> to vector<8x8xf32>
    %437 = arith.addf %435, %436 : vector<8x8xf32>
    %cst_156 = arith.constant dense<0xFF800000> : vector<8xf32>
    %438 = vector.multi_reduction <maximumf>, %437, %cst_156 [1] : vector<8x8xf32> to vector<8xf32>
    %439 = vector.shape_cast %438 : vector<8xf32> to vector<8x1xf32>
    %440 = vector.broadcast %439 : vector<8x1xf32> to vector<8x8xf32>
    %441 = arith.subf %437, %440 : vector<8x8xf32>
    %442 = math.exp %441 : vector<8x8xf32>
    %cst_157 = arith.constant dense<0.000000e+00> : vector<8xf32>
    %443 = vector.multi_reduction <add>, %442, %cst_157 [1] : vector<8x8xf32> to vector<8xf32>
    %444 = vector.shape_cast %443 : vector<8xf32> to vector<8x1xf32>
    %445 = tpu.reciprocal %444 {approx = true} : vector<8x1xf32> -> vector<8x1xf32>
    %446 = vector.broadcast %445 : vector<8x1xf32> to vector<8x8xf32>
    %447 = arith.mulf %442, %446 : vector<8x8xf32>
    %cst_158 = arith.constant dense<0.000000e+00> : vector<8x8xf32>
    %448 = tpu.matmul %447, %432, %cst_158 {dimension_numbers = #tpu.dot_dimension_numbers<[1], [0], [0], [1], [0, 0, 1, 1], [], []>} : vector<8x8xf32>, vector<8x8xf32>, vector<8x8xf32> -> vector<8x8xf32>
    %449 = vector.extract_strided_slice %284 {offsets = [16, 0], sizes = [8, 32], strides = [1, 1]} : vector<32x32xf32> to vector<8x32xf32>
    %cst_159 = arith.constant dense<0.000000e+00> : vector<8x32xf32>
    %450 = tpu.matmul %448, %449, %cst_159 {dimension_numbers = #tpu.dot_dimension_numbers<[1], [0], [0], [1], [0, 0, 1, 1], [], []>} : vector<8x8xf32>, vector<8x32xf32>, vector<8x32xf32> -> vector<8x32xf32>
    %451 = arith.addf %429, %450 : vector<8x32xf32>
    %452 = vector.extract_strided_slice %383 {offsets = [0, 24], sizes = [8, 8], strides = [1, 1]} : vector<8x96xf32> to vector<8x8xf32>
    %453 = vector.extract_strided_slice %383 {offsets = [0, 56], sizes = [8, 8], strides = [1, 1]} : vector<8x96xf32> to vector<8x8xf32>
    %454 = vector.extract_strided_slice %383 {offsets = [0, 88], sizes = [8, 8], strides = [1, 1]} : vector<8x96xf32> to vector<8x8xf32>
    %cst_160 = arith.constant dense<0.000000e+00> : vector<8x8xf32>
    %455 = tpu.matmul %452, %453, %cst_160 {dimension_numbers = #tpu.dot_dimension_numbers<[1], [1], [0], [0], [0, 0, 1, 0], [], []>} : vector<8x8xf32>, vector<8x8xf32>, vector<8x8xf32> -> vector<8x8xf32>
    %cst_161 = arith.constant 0.353553385 : f32
    %456 = vector.broadcast %cst_161 : f32 to vector<8x8xf32>
    %457 = arith.mulf %455, %456 : vector<8x8xf32>
    %458 = vector.broadcast %384 : vector<1x8xf32> to vector<8x8xf32>
    %459 = arith.addf %457, %458 : vector<8x8xf32>
    %cst_162 = arith.constant dense<0xFF800000> : vector<8xf32>
    %460 = vector.multi_reduction <maximumf>, %459, %cst_162 [1] : vector<8x8xf32> to vector<8xf32>
    %461 = vector.shape_cast %460 : vector<8xf32> to vector<8x1xf32>
    %462 = vector.broadcast %461 : vector<8x1xf32> to vector<8x8xf32>
    %463 = arith.subf %459, %462 : vector<8x8xf32>
    %464 = math.exp %463 : vector<8x8xf32>
    %cst_163 = arith.constant dense<0.000000e+00> : vector<8xf32>
    %465 = vector.multi_reduction <add>, %464, %cst_163 [1] : vector<8x8xf32> to vector<8xf32>
    %466 = vector.shape_cast %465 : vector<8xf32> to vector<8x1xf32>
    %467 = tpu.reciprocal %466 {approx = true} : vector<8x1xf32> -> vector<8x1xf32>
    %468 = vector.broadcast %467 : vector<8x1xf32> to vector<8x8xf32>
    %469 = arith.mulf %464, %468 : vector<8x8xf32>
    %cst_164 = arith.constant dense<0.000000e+00> : vector<8x8xf32>
    %470 = tpu.matmul %469, %454, %cst_164 {dimension_numbers = #tpu.dot_dimension_numbers<[1], [0], [0], [1], [0, 0, 1, 1], [], []>} : vector<8x8xf32>, vector<8x8xf32>, vector<8x8xf32> -> vector<8x8xf32>
    %471 = vector.extract_strided_slice %284 {offsets = [24, 0], sizes = [8, 32], strides = [1, 1]} : vector<32x32xf32> to vector<8x32xf32>
    %cst_165 = arith.constant dense<0.000000e+00> : vector<8x32xf32>
    %472 = tpu.matmul %470, %471, %cst_165 {dimension_numbers = #tpu.dot_dimension_numbers<[1], [0], [0], [1], [0, 0, 1, 1], [], []>} : vector<8x8xf32>, vector<8x32xf32>, vector<8x32xf32> -> vector<8x32xf32>
    %473 = arith.addf %451, %472 : vector<8x32xf32>
    %474 = tpu.concatenate %382, %473 in 0 : vector<8x32xf32>, vector<8x32xf32> -> vector<16x32xf32>
    %c1_166 = arith.constant 1 : index
    %c0_167 = arith.constant 0 : index
    %c0_168 = arith.constant 0 : index
    %475 = vector.load %arg6[%c1_166, %c0_167, %c0_168] : memref<3x1x32xf32, #tpu.memory_space<vmem>>, vector<1x1x32xf32>
    %476 = vector.shape_cast %475 : vector<1x1x32xf32> to vector<1x32xf32>
    %477 = vector.broadcast %476 : vector<1x32xf32> to vector<16x32xf32>
    %478 = arith.addf %474, %477 : vector<16x32xf32>
    %479 = arith.addf %282, %478 : vector<16x32xf32>
    %c1_169 = arith.constant 1 : index
    %c0_170 = arith.constant 0 : index
    %c0_171 = arith.constant 0 : index
    %480 = vector.load %arg7[%c1_169, %c0_170, %c0_171] : memref<3x1x32xf32, #tpu.memory_space<vmem>>, vector<1x1x32xf32>
    %481 = vector.shape_cast %480 : vector<1x1x32xf32> to vector<1x32xf32>
    %c1_172 = arith.constant 1 : index
    %c0_173 = arith.constant 0 : index
    %c0_174 = arith.constant 0 : index
    %482 = vector.load %arg8[%c1_172, %c0_173, %c0_174] : memref<3x1x32xf32, #tpu.memory_space<vmem>>, vector<1x1x32xf32>
    %483 = vector.shape_cast %482 : vector<1x1x32xf32> to vector<1x32xf32>
    %cst_175 = arith.constant dense<0.000000e+00> : vector<16xf32>
    %484 = vector.multi_reduction <add>, %479, %cst_175 [1] : vector<16x32xf32> to vector<16xf32>
    %485 = vector.shape_cast %484 : vector<16xf32> to vector<16x1xf32>
    %cst_176 = arith.constant 3.200000e+01 : f32
    %486 = vector.broadcast %cst_176 : f32 to vector<16x1xf32>
    %487 = arith.divf %485, %486 : vector<16x1xf32>
    %488 = vector.broadcast %487 : vector<16x1xf32> to vector<16x32xf32>
    %489 = arith.subf %479, %488 : vector<16x32xf32>
    %490 = arith.mulf %489, %489 : vector<16x32xf32>
    %cst_177 = arith.constant dense<0.000000e+00> : vector<16xf32>
    %491 = vector.multi_reduction <add>, %490, %cst_177 [1] : vector<16x32xf32> to vector<16xf32>
    %492 = vector.shape_cast %491 : vector<16xf32> to vector<16x1xf32>
    %cst_178 = arith.constant 3.200000e+01 : f32
    %493 = vector.broadcast %cst_178 : f32 to vector<16x1xf32>
    %494 = arith.divf %492, %493 : vector<16x1xf32>
    %495 = vector.broadcast %487 : vector<16x1xf32> to vector<16x32xf32>
    %496 = arith.subf %479, %495 : vector<16x32xf32>
    %cst_179 = arith.constant 9.99999974E-6 : f32
    %497 = vector.broadcast %cst_179 : f32 to vector<16x1xf32>
    %498 = arith.addf %494, %497 : vector<16x1xf32>
    %499 = math.rsqrt %498 : vector<16x1xf32>
    %500 = vector.broadcast %499 : vector<16x1xf32> to vector<16x32xf32>
    %501 = arith.mulf %496, %500 : vector<16x32xf32>
    %502 = vector.broadcast %481 : vector<1x32xf32> to vector<16x32xf32>
    %503 = arith.mulf %501, %502 : vector<16x32xf32>
    %504 = vector.broadcast %483 : vector<1x32xf32> to vector<16x32xf32>
    %505 = arith.addf %503, %504 : vector<16x32xf32>
    %c1_180 = arith.constant 1 : index
    %c0_181 = arith.constant 0 : index
    %c0_182 = arith.constant 0 : index
    %506 = vector.load %arg9[%c1_180, %c0_181, %c0_182] : memref<3x32x128xf32, #tpu.memory_space<vmem>>, vector<1x32x128xf32>
    %507 = vector.shape_cast %506 : vector<1x32x128xf32> to vector<32x128xf32>
    %cst_183 = arith.constant dense<0.000000e+00> : vector<16x128xf32>
    %508 = tpu.matmul %505, %507, %cst_183 {dimension_numbers = #tpu.dot_dimension_numbers<[1], [0], [0], [1], [0, 0, 1, 1], [], []>} : vector<16x32xf32>, vector<32x128xf32>, vector<16x128xf32> -> vector<16x128xf32>
    %c1_184 = arith.constant 1 : index
    %c0_185 = arith.constant 0 : index
    %c0_186 = arith.constant 0 : index
    %509 = vector.load %arg10[%c1_184, %c0_185, %c0_186] : memref<3x1x128xf32, #tpu.memory_space<vmem>>, vector<1x1x128xf32>
    %510 = vector.shape_cast %509 : vector<1x1x128xf32> to vector<1x128xf32>
    %511 = vector.broadcast %510 : vector<1x128xf32> to vector<16x128xf32>
    %512 = arith.addf %508, %511 : vector<16x128xf32>
    %cst_187 = arith.constant 5.000000e-01 : f32
    %513 = vector.broadcast %cst_187 : f32 to vector<16x128xf32>
    %514 = arith.mulf %513, %512 : vector<16x128xf32>
    %cst_188 = arith.constant 4.471500e-02 : f32
    %515 = vector.broadcast %cst_188 : f32 to vector<16x128xf32>
    %516 = arith.mulf %515, %512 : vector<16x128xf32>
    %517 = arith.mulf %516, %512 : vector<16x128xf32>
    %518 = arith.mulf %517, %512 : vector<16x128xf32>
    %519 = arith.addf %512, %518 : vector<16x128xf32>
    %cst_189 = arith.constant 0.797884583 : f32
    %520 = vector.broadcast %cst_189 : f32 to vector<16x128xf32>
    %521 = arith.mulf %520, %519 : vector<16x128xf32>
    %522 = math.tanh %521 : vector<16x128xf32>
    %cst_190 = arith.constant 1.000000e+00 : f32
    %523 = vector.broadcast %cst_190 : f32 to vector<16x128xf32>
    %524 = arith.addf %523, %522 : vector<16x128xf32>
    %525 = arith.mulf %514, %524 : vector<16x128xf32>
    %c1_191 = arith.constant 1 : index
    %c0_192 = arith.constant 0 : index
    %c0_193 = arith.constant 0 : index
    %526 = vector.load %arg11[%c1_191, %c0_192, %c0_193] : memref<3x128x32xf32, #tpu.memory_space<vmem>>, vector<1x128x32xf32>
    %527 = vector.shape_cast %526 : vector<1x128x32xf32> to vector<128x32xf32>
    %cst_194 = arith.constant dense<0.000000e+00> : vector<16x32xf32>
    %528 = tpu.matmul %525, %527, %cst_194 {dimension_numbers = #tpu.dot_dimension_numbers<[1], [0], [0], [1], [0, 0, 1, 1], [], []>} : vector<16x128xf32>, vector<128x32xf32>, vector<16x32xf32> -> vector<16x32xf32>
    %c1_195 = arith.constant 1 : index
    %c0_196 = arith.constant 0 : index
    %c0_197 = arith.constant 0 : index
    %529 = vector.load %arg12[%c1_195, %c0_196, %c0_197] : memref<3x1x32xf32, #tpu.memory_space<vmem>>, vector<1x1x32xf32>
    %530 = vector.shape_cast %529 : vector<1x1x32xf32> to vector<1x32xf32>
    %531 = vector.broadcast %530 : vector<1x32xf32> to vector<16x32xf32>
    %532 = arith.addf %528, %531 : vector<16x32xf32>
    %533 = arith.addf %505, %532 : vector<16x32xf32>
    %c1_198 = arith.constant 1 : index
    %c0_199 = arith.constant 0 : index
    %c0_200 = arith.constant 0 : index
    %534 = vector.load %arg13[%c1_198, %c0_199, %c0_200] : memref<3x1x32xf32, #tpu.memory_space<vmem>>, vector<1x1x32xf32>
    %535 = vector.shape_cast %534 : vector<1x1x32xf32> to vector<1x32xf32>
    %c1_201 = arith.constant 1 : index
    %c0_202 = arith.constant 0 : index
    %c0_203 = arith.constant 0 : index
    %536 = vector.load %arg14[%c1_201, %c0_202, %c0_203] : memref<3x1x32xf32, #tpu.memory_space<vmem>>, vector<1x1x32xf32>
    %537 = vector.shape_cast %536 : vector<1x1x32xf32> to vector<1x32xf32>
    %cst_204 = arith.constant dense<0.000000e+00> : vector<16xf32>
    %538 = vector.multi_reduction <add>, %533, %cst_204 [1] : vector<16x32xf32> to vector<16xf32>
    %539 = vector.shape_cast %538 : vector<16xf32> to vector<16x1xf32>
    %cst_205 = arith.constant 3.200000e+01 : f32
    %540 = vector.broadcast %cst_205 : f32 to vector<16x1xf32>
    %541 = arith.divf %539, %540 : vector<16x1xf32>
    %542 = vector.broadcast %541 : vector<16x1xf32> to vector<16x32xf32>
    %543 = arith.subf %533, %542 : vector<16x32xf32>
    %544 = arith.mulf %543, %543 : vector<16x32xf32>
    %cst_206 = arith.constant dense<0.000000e+00> : vector<16xf32>
    %545 = vector.multi_reduction <add>, %544, %cst_206 [1] : vector<16x32xf32> to vector<16xf32>
    %546 = vector.shape_cast %545 : vector<16xf32> to vector<16x1xf32>
    %cst_207 = arith.constant 3.200000e+01 : f32
    %547 = vector.broadcast %cst_207 : f32 to vector<16x1xf32>
    %548 = arith.divf %546, %547 : vector<16x1xf32>
    %549 = vector.broadcast %541 : vector<16x1xf32> to vector<16x32xf32>
    %550 = arith.subf %533, %549 : vector<16x32xf32>
    %cst_208 = arith.constant 9.99999974E-6 : f32
    %551 = vector.broadcast %cst_208 : f32 to vector<16x1xf32>
    %552 = arith.addf %548, %551 : vector<16x1xf32>
    %553 = math.rsqrt %552 : vector<16x1xf32>
    %554 = vector.broadcast %553 : vector<16x1xf32> to vector<16x32xf32>
    %555 = arith.mulf %550, %554 : vector<16x32xf32>
    %556 = vector.broadcast %535 : vector<1x32xf32> to vector<16x32xf32>
    %557 = arith.mulf %555, %556 : vector<16x32xf32>
    %558 = vector.broadcast %537 : vector<1x32xf32> to vector<16x32xf32>
    %559 = arith.addf %557, %558 : vector<16x32xf32>
    %c2 = arith.constant 2 : index
    %c0_209 = arith.constant 0 : index
    %c0_210 = arith.constant 0 : index
    %560 = vector.load %arg5[%c2, %c0_209, %c0_210] : memref<3x32x32xf32, #tpu.memory_space<vmem>>, vector<1x32x32xf32>
    %561 = vector.shape_cast %560 : vector<1x32x32xf32> to vector<32x32xf32>
    %c2_211 = arith.constant 2 : index
    %c0_212 = arith.constant 0 : index
    %c0_213 = arith.constant 0 : index
    %562 = vector.load %arg3[%c2_211, %c0_212, %c0_213] : memref<3x32x96xf32, #tpu.memory_space<vmem>>, vector<1x32x96xf32>
    %563 = vector.shape_cast %562 : vector<1x32x96xf32> to vector<32x96xf32>
    %cst_214 = arith.constant dense<0.000000e+00> : vector<16x96xf32>
    %564 = tpu.matmul %559, %563, %cst_214 {dimension_numbers = #tpu.dot_dimension_numbers<[1], [0], [0], [1], [0, 0, 1, 1], [], []>} : vector<16x32xf32>, vector<32x96xf32>, vector<16x96xf32> -> vector<16x96xf32>
    %c2_215 = arith.constant 2 : index
    %c0_216 = arith.constant 0 : index
    %c0_217 = arith.constant 0 : index
    %565 = vector.load %arg4[%c2_215, %c0_216, %c0_217] : memref<3x1x96xf32, #tpu.memory_space<vmem>>, vector<1x1x96xf32>
    %566 = vector.shape_cast %565 : vector<1x1x96xf32> to vector<1x96xf32>
    %567 = vector.broadcast %566 : vector<1x96xf32> to vector<16x96xf32>
    %568 = arith.addf %564, %567 : vector<16x96xf32>
    %569 = vector.extract_strided_slice %568 {offsets = [0, 0], sizes = [8, 96], strides = [1, 1]} : vector<16x96xf32> to vector<8x96xf32>
    %570 = vector.extract_strided_slice %5 {offsets = [0, 0], sizes = [1, 8], strides = [1, 1]} : vector<2x8xf32> to vector<1x8xf32>
    %cst_218 = arith.constant 0.000000e+00 : f32
    %571 = vector.broadcast %cst_218 : f32 to vector<8x32xf32>
    %572 = vector.extract_strided_slice %569 {offsets = [0, 0], sizes = [8, 8], strides = [1, 1]} : vector<8x96xf32> to vector<8x8xf32>
    %573 = vector.extract_strided_slice %569 {offsets = [0, 32], sizes = [8, 8], strides = [1, 1]} : vector<8x96xf32> to vector<8x8xf32>
    %574 = vector.extract_strided_slice %569 {offsets = [0, 64], sizes = [8, 8], strides = [1, 1]} : vector<8x96xf32> to vector<8x8xf32>
    %cst_219 = arith.constant dense<0.000000e+00> : vector<8x8xf32>
    %575 = tpu.matmul %572, %573, %cst_219 {dimension_numbers = #tpu.dot_dimension_numbers<[1], [1], [0], [0], [0, 0, 1, 0], [], []>} : vector<8x8xf32>, vector<8x8xf32>, vector<8x8xf32> -> vector<8x8xf32>
    %cst_220 = arith.constant 0.353553385 : f32
    %576 = vector.broadcast %cst_220 : f32 to vector<8x8xf32>
    %577 = arith.mulf %575, %576 : vector<8x8xf32>
    %578 = vector.broadcast %570 : vector<1x8xf32> to vector<8x8xf32>
    %579 = arith.addf %577, %578 : vector<8x8xf32>
    %cst_221 = arith.constant dense<0xFF800000> : vector<8xf32>
    %580 = vector.multi_reduction <maximumf>, %579, %cst_221 [1] : vector<8x8xf32> to vector<8xf32>
    %581 = vector.shape_cast %580 : vector<8xf32> to vector<8x1xf32>
    %582 = vector.broadcast %581 : vector<8x1xf32> to vector<8x8xf32>
    %583 = arith.subf %579, %582 : vector<8x8xf32>
    %584 = math.exp %583 : vector<8x8xf32>
    %cst_222 = arith.constant dense<0.000000e+00> : vector<8xf32>
    %585 = vector.multi_reduction <add>, %584, %cst_222 [1] : vector<8x8xf32> to vector<8xf32>
    %586 = vector.shape_cast %585 : vector<8xf32> to vector<8x1xf32>
    %587 = tpu.reciprocal %586 {approx = true} : vector<8x1xf32> -> vector<8x1xf32>
    %588 = vector.broadcast %587 : vector<8x1xf32> to vector<8x8xf32>
    %589 = arith.mulf %584, %588 : vector<8x8xf32>
    %cst_223 = arith.constant dense<0.000000e+00> : vector<8x8xf32>
    %590 = tpu.matmul %589, %574, %cst_223 {dimension_numbers = #tpu.dot_dimension_numbers<[1], [0], [0], [1], [0, 0, 1, 1], [], []>} : vector<8x8xf32>, vector<8x8xf32>, vector<8x8xf32> -> vector<8x8xf32>
    %591 = vector.extract_strided_slice %561 {offsets = [0, 0], sizes = [8, 32], strides = [1, 1]} : vector<32x32xf32> to vector<8x32xf32>
    %cst_224 = arith.constant dense<0.000000e+00> : vector<8x32xf32>
    %592 = tpu.matmul %590, %591, %cst_224 {dimension_numbers = #tpu.dot_dimension_numbers<[1], [0], [0], [1], [0, 0, 1, 1], [], []>} : vector<8x8xf32>, vector<8x32xf32>, vector<8x32xf32> -> vector<8x32xf32>
    %593 = arith.addf %571, %592 : vector<8x32xf32>
    %594 = vector.extract_strided_slice %569 {offsets = [0, 8], sizes = [8, 8], strides = [1, 1]} : vector<8x96xf32> to vector<8x8xf32>
    %595 = vector.extract_strided_slice %569 {offsets = [0, 40], sizes = [8, 8], strides = [1, 1]} : vector<8x96xf32> to vector<8x8xf32>
    %596 = vector.extract_strided_slice %569 {offsets = [0, 72], sizes = [8, 8], strides = [1, 1]} : vector<8x96xf32> to vector<8x8xf32>
    %cst_225 = arith.constant dense<0.000000e+00> : vector<8x8xf32>
    %597 = tpu.matmul %594, %595, %cst_225 {dimension_numbers = #tpu.dot_dimension_numbers<[1], [1], [0], [0], [0, 0, 1, 0], [], []>} : vector<8x8xf32>, vector<8x8xf32>, vector<8x8xf32> -> vector<8x8xf32>
    %cst_226 = arith.constant 0.353553385 : f32
    %598 = vector.broadcast %cst_226 : f32 to vector<8x8xf32>
    %599 = arith.mulf %597, %598 : vector<8x8xf32>
    %600 = vector.broadcast %570 : vector<1x8xf32> to vector<8x8xf32>
    %601 = arith.addf %599, %600 : vector<8x8xf32>
    %cst_227 = arith.constant dense<0xFF800000> : vector<8xf32>
    %602 = vector.multi_reduction <maximumf>, %601, %cst_227 [1] : vector<8x8xf32> to vector<8xf32>
    %603 = vector.shape_cast %602 : vector<8xf32> to vector<8x1xf32>
    %604 = vector.broadcast %603 : vector<8x1xf32> to vector<8x8xf32>
    %605 = arith.subf %601, %604 : vector<8x8xf32>
    %606 = math.exp %605 : vector<8x8xf32>
    %cst_228 = arith.constant dense<0.000000e+00> : vector<8xf32>
    %607 = vector.multi_reduction <add>, %606, %cst_228 [1] : vector<8x8xf32> to vector<8xf32>
    %608 = vector.shape_cast %607 : vector<8xf32> to vector<8x1xf32>
    %609 = tpu.reciprocal %608 {approx = true} : vector<8x1xf32> -> vector<8x1xf32>
    %610 = vector.broadcast %609 : vector<8x1xf32> to vector<8x8xf32>
    %611 = arith.mulf %606, %610 : vector<8x8xf32>
    %cst_229 = arith.constant dense<0.000000e+00> : vector<8x8xf32>
    %612 = tpu.matmul %611, %596, %cst_229 {dimension_numbers = #tpu.dot_dimension_numbers<[1], [0], [0], [1], [0, 0, 1, 1], [], []>} : vector<8x8xf32>, vector<8x8xf32>, vector<8x8xf32> -> vector<8x8xf32>
    %613 = vector.extract_strided_slice %561 {offsets = [8, 0], sizes = [8, 32], strides = [1, 1]} : vector<32x32xf32> to vector<8x32xf32>
    %cst_230 = arith.constant dense<0.000000e+00> : vector<8x32xf32>
    %614 = tpu.matmul %612, %613, %cst_230 {dimension_numbers = #tpu.dot_dimension_numbers<[1], [0], [0], [1], [0, 0, 1, 1], [], []>} : vector<8x8xf32>, vector<8x32xf32>, vector<8x32xf32> -> vector<8x32xf32>
    %615 = arith.addf %593, %614 : vector<8x32xf32>
    %616 = vector.extract_strided_slice %569 {offsets = [0, 16], sizes = [8, 8], strides = [1, 1]} : vector<8x96xf32> to vector<8x8xf32>
    %617 = vector.extract_strided_slice %569 {offsets = [0, 48], sizes = [8, 8], strides = [1, 1]} : vector<8x96xf32> to vector<8x8xf32>
    %618 = vector.extract_strided_slice %569 {offsets = [0, 80], sizes = [8, 8], strides = [1, 1]} : vector<8x96xf32> to vector<8x8xf32>
    %cst_231 = arith.constant dense<0.000000e+00> : vector<8x8xf32>
    %619 = tpu.matmul %616, %617, %cst_231 {dimension_numbers = #tpu.dot_dimension_numbers<[1], [1], [0], [0], [0, 0, 1, 0], [], []>} : vector<8x8xf32>, vector<8x8xf32>, vector<8x8xf32> -> vector<8x8xf32>
    %cst_232 = arith.constant 0.353553385 : f32
    %620 = vector.broadcast %cst_232 : f32 to vector<8x8xf32>
    %621 = arith.mulf %619, %620 : vector<8x8xf32>
    %622 = vector.broadcast %570 : vector<1x8xf32> to vector<8x8xf32>
    %623 = arith.addf %621, %622 : vector<8x8xf32>
    %cst_233 = arith.constant dense<0xFF800000> : vector<8xf32>
    %624 = vector.multi_reduction <maximumf>, %623, %cst_233 [1] : vector<8x8xf32> to vector<8xf32>
    %625 = vector.shape_cast %624 : vector<8xf32> to vector<8x1xf32>
    %626 = vector.broadcast %625 : vector<8x1xf32> to vector<8x8xf32>
    %627 = arith.subf %623, %626 : vector<8x8xf32>
    %628 = math.exp %627 : vector<8x8xf32>
    %cst_234 = arith.constant dense<0.000000e+00> : vector<8xf32>
    %629 = vector.multi_reduction <add>, %628, %cst_234 [1] : vector<8x8xf32> to vector<8xf32>
    %630 = vector.shape_cast %629 : vector<8xf32> to vector<8x1xf32>
    %631 = tpu.reciprocal %630 {approx = true} : vector<8x1xf32> -> vector<8x1xf32>
    %632 = vector.broadcast %631 : vector<8x1xf32> to vector<8x8xf32>
    %633 = arith.mulf %628, %632 : vector<8x8xf32>
    %cst_235 = arith.constant dense<0.000000e+00> : vector<8x8xf32>
    %634 = tpu.matmul %633, %618, %cst_235 {dimension_numbers = #tpu.dot_dimension_numbers<[1], [0], [0], [1], [0, 0, 1, 1], [], []>} : vector<8x8xf32>, vector<8x8xf32>, vector<8x8xf32> -> vector<8x8xf32>
    %635 = vector.extract_strided_slice %561 {offsets = [16, 0], sizes = [8, 32], strides = [1, 1]} : vector<32x32xf32> to vector<8x32xf32>
    %cst_236 = arith.constant dense<0.000000e+00> : vector<8x32xf32>
    %636 = tpu.matmul %634, %635, %cst_236 {dimension_numbers = #tpu.dot_dimension_numbers<[1], [0], [0], [1], [0, 0, 1, 1], [], []>} : vector<8x8xf32>, vector<8x32xf32>, vector<8x32xf32> -> vector<8x32xf32>
    %637 = arith.addf %615, %636 : vector<8x32xf32>
    %638 = vector.extract_strided_slice %569 {offsets = [0, 24], sizes = [8, 8], strides = [1, 1]} : vector<8x96xf32> to vector<8x8xf32>
    %639 = vector.extract_strided_slice %569 {offsets = [0, 56], sizes = [8, 8], strides = [1, 1]} : vector<8x96xf32> to vector<8x8xf32>
    %640 = vector.extract_strided_slice %569 {offsets = [0, 88], sizes = [8, 8], strides = [1, 1]} : vector<8x96xf32> to vector<8x8xf32>
    %cst_237 = arith.constant dense<0.000000e+00> : vector<8x8xf32>
    %641 = tpu.matmul %638, %639, %cst_237 {dimension_numbers = #tpu.dot_dimension_numbers<[1], [1], [0], [0], [0, 0, 1, 0], [], []>} : vector<8x8xf32>, vector<8x8xf32>, vector<8x8xf32> -> vector<8x8xf32>
    %cst_238 = arith.constant 0.353553385 : f32
    %642 = vector.broadcast %cst_238 : f32 to vector<8x8xf32>
    %643 = arith.mulf %641, %642 : vector<8x8xf32>
    %644 = vector.broadcast %570 : vector<1x8xf32> to vector<8x8xf32>
    %645 = arith.addf %643, %644 : vector<8x8xf32>
    %cst_239 = arith.constant dense<0xFF800000> : vector<8xf32>
    %646 = vector.multi_reduction <maximumf>, %645, %cst_239 [1] : vector<8x8xf32> to vector<8xf32>
    %647 = vector.shape_cast %646 : vector<8xf32> to vector<8x1xf32>
    %648 = vector.broadcast %647 : vector<8x1xf32> to vector<8x8xf32>
    %649 = arith.subf %645, %648 : vector<8x8xf32>
    %650 = math.exp %649 : vector<8x8xf32>
    %cst_240 = arith.constant dense<0.000000e+00> : vector<8xf32>
    %651 = vector.multi_reduction <add>, %650, %cst_240 [1] : vector<8x8xf32> to vector<8xf32>
    %652 = vector.shape_cast %651 : vector<8xf32> to vector<8x1xf32>
    %653 = tpu.reciprocal %652 {approx = true} : vector<8x1xf32> -> vector<8x1xf32>
    %654 = vector.broadcast %653 : vector<8x1xf32> to vector<8x8xf32>
    %655 = arith.mulf %650, %654 : vector<8x8xf32>
    %cst_241 = arith.constant dense<0.000000e+00> : vector<8x8xf32>
    %656 = tpu.matmul %655, %640, %cst_241 {dimension_numbers = #tpu.dot_dimension_numbers<[1], [0], [0], [1], [0, 0, 1, 1], [], []>} : vector<8x8xf32>, vector<8x8xf32>, vector<8x8xf32> -> vector<8x8xf32>
    %657 = vector.extract_strided_slice %561 {offsets = [24, 0], sizes = [8, 32], strides = [1, 1]} : vector<32x32xf32> to vector<8x32xf32>
    %cst_242 = arith.constant dense<0.000000e+00> : vector<8x32xf32>
    %658 = tpu.matmul %656, %657, %cst_242 {dimension_numbers = #tpu.dot_dimension_numbers<[1], [0], [0], [1], [0, 0, 1, 1], [], []>} : vector<8x8xf32>, vector<8x32xf32>, vector<8x32xf32> -> vector<8x32xf32>
    %659 = arith.addf %637, %658 : vector<8x32xf32>
    %660 = vector.extract_strided_slice %568 {offsets = [8, 0], sizes = [8, 96], strides = [1, 1]} : vector<16x96xf32> to vector<8x96xf32>
    %661 = vector.extract_strided_slice %5 {offsets = [1, 0], sizes = [1, 8], strides = [1, 1]} : vector<2x8xf32> to vector<1x8xf32>
    %cst_243 = arith.constant 0.000000e+00 : f32
    %662 = vector.broadcast %cst_243 : f32 to vector<8x32xf32>
    %663 = vector.extract_strided_slice %660 {offsets = [0, 0], sizes = [8, 8], strides = [1, 1]} : vector<8x96xf32> to vector<8x8xf32>
    %664 = vector.extract_strided_slice %660 {offsets = [0, 32], sizes = [8, 8], strides = [1, 1]} : vector<8x96xf32> to vector<8x8xf32>
    %665 = vector.extract_strided_slice %660 {offsets = [0, 64], sizes = [8, 8], strides = [1, 1]} : vector<8x96xf32> to vector<8x8xf32>
    %cst_244 = arith.constant dense<0.000000e+00> : vector<8x8xf32>
    %666 = tpu.matmul %663, %664, %cst_244 {dimension_numbers = #tpu.dot_dimension_numbers<[1], [1], [0], [0], [0, 0, 1, 0], [], []>} : vector<8x8xf32>, vector<8x8xf32>, vector<8x8xf32> -> vector<8x8xf32>
    %cst_245 = arith.constant 0.353553385 : f32
    %667 = vector.broadcast %cst_245 : f32 to vector<8x8xf32>
    %668 = arith.mulf %666, %667 : vector<8x8xf32>
    %669 = vector.broadcast %661 : vector<1x8xf32> to vector<8x8xf32>
    %670 = arith.addf %668, %669 : vector<8x8xf32>
    %cst_246 = arith.constant dense<0xFF800000> : vector<8xf32>
    %671 = vector.multi_reduction <maximumf>, %670, %cst_246 [1] : vector<8x8xf32> to vector<8xf32>
    %672 = vector.shape_cast %671 : vector<8xf32> to vector<8x1xf32>
    %673 = vector.broadcast %672 : vector<8x1xf32> to vector<8x8xf32>
    %674 = arith.subf %670, %673 : vector<8x8xf32>
    %675 = math.exp %674 : vector<8x8xf32>
    %cst_247 = arith.constant dense<0.000000e+00> : vector<8xf32>
    %676 = vector.multi_reduction <add>, %675, %cst_247 [1] : vector<8x8xf32> to vector<8xf32>
    %677 = vector.shape_cast %676 : vector<8xf32> to vector<8x1xf32>
    %678 = tpu.reciprocal %677 {approx = true} : vector<8x1xf32> -> vector<8x1xf32>
    %679 = vector.broadcast %678 : vector<8x1xf32> to vector<8x8xf32>
    %680 = arith.mulf %675, %679 : vector<8x8xf32>
    %cst_248 = arith.constant dense<0.000000e+00> : vector<8x8xf32>
    %681 = tpu.matmul %680, %665, %cst_248 {dimension_numbers = #tpu.dot_dimension_numbers<[1], [0], [0], [1], [0, 0, 1, 1], [], []>} : vector<8x8xf32>, vector<8x8xf32>, vector<8x8xf32> -> vector<8x8xf32>
    %682 = vector.extract_strided_slice %561 {offsets = [0, 0], sizes = [8, 32], strides = [1, 1]} : vector<32x32xf32> to vector<8x32xf32>
    %cst_249 = arith.constant dense<0.000000e+00> : vector<8x32xf32>
    %683 = tpu.matmul %681, %682, %cst_249 {dimension_numbers = #tpu.dot_dimension_numbers<[1], [0], [0], [1], [0, 0, 1, 1], [], []>} : vector<8x8xf32>, vector<8x32xf32>, vector<8x32xf32> -> vector<8x32xf32>
    %684 = arith.addf %662, %683 : vector<8x32xf32>
    %685 = vector.extract_strided_slice %660 {offsets = [0, 8], sizes = [8, 8], strides = [1, 1]} : vector<8x96xf32> to vector<8x8xf32>
    %686 = vector.extract_strided_slice %660 {offsets = [0, 40], sizes = [8, 8], strides = [1, 1]} : vector<8x96xf32> to vector<8x8xf32>
    %687 = vector.extract_strided_slice %660 {offsets = [0, 72], sizes = [8, 8], strides = [1, 1]} : vector<8x96xf32> to vector<8x8xf32>
    %cst_250 = arith.constant dense<0.000000e+00> : vector<8x8xf32>
    %688 = tpu.matmul %685, %686, %cst_250 {dimension_numbers = #tpu.dot_dimension_numbers<[1], [1], [0], [0], [0, 0, 1, 0], [], []>} : vector<8x8xf32>, vector<8x8xf32>, vector<8x8xf32> -> vector<8x8xf32>
    %cst_251 = arith.constant 0.353553385 : f32
    %689 = vector.broadcast %cst_251 : f32 to vector<8x8xf32>
    %690 = arith.mulf %688, %689 : vector<8x8xf32>
    %691 = vector.broadcast %661 : vector<1x8xf32> to vector<8x8xf32>
    %692 = arith.addf %690, %691 : vector<8x8xf32>
    %cst_252 = arith.constant dense<0xFF800000> : vector<8xf32>
    %693 = vector.multi_reduction <maximumf>, %692, %cst_252 [1] : vector<8x8xf32> to vector<8xf32>
    %694 = vector.shape_cast %693 : vector<8xf32> to vector<8x1xf32>
    %695 = vector.broadcast %694 : vector<8x1xf32> to vector<8x8xf32>
    %696 = arith.subf %692, %695 : vector<8x8xf32>
    %697 = math.exp %696 : vector<8x8xf32>
    %cst_253 = arith.constant dense<0.000000e+00> : vector<8xf32>
    %698 = vector.multi_reduction <add>, %697, %cst_253 [1] : vector<8x8xf32> to vector<8xf32>
    %699 = vector.shape_cast %698 : vector<8xf32> to vector<8x1xf32>
    %700 = tpu.reciprocal %699 {approx = true} : vector<8x1xf32> -> vector<8x1xf32>
    %701 = vector.broadcast %700 : vector<8x1xf32> to vector<8x8xf32>
    %702 = arith.mulf %697, %701 : vector<8x8xf32>
    %cst_254 = arith.constant dense<0.000000e+00> : vector<8x8xf32>
    %703 = tpu.matmul %702, %687, %cst_254 {dimension_numbers = #tpu.dot_dimension_numbers<[1], [0], [0], [1], [0, 0, 1, 1], [], []>} : vector<8x8xf32>, vector<8x8xf32>, vector<8x8xf32> -> vector<8x8xf32>
    %704 = vector.extract_strided_slice %561 {offsets = [8, 0], sizes = [8, 32], strides = [1, 1]} : vector<32x32xf32> to vector<8x32xf32>
    %cst_255 = arith.constant dense<0.000000e+00> : vector<8x32xf32>
    %705 = tpu.matmul %703, %704, %cst_255 {dimension_numbers = #tpu.dot_dimension_numbers<[1], [0], [0], [1], [0, 0, 1, 1], [], []>} : vector<8x8xf32>, vector<8x32xf32>, vector<8x32xf32> -> vector<8x32xf32>
    %706 = arith.addf %684, %705 : vector<8x32xf32>
    %707 = vector.extract_strided_slice %660 {offsets = [0, 16], sizes = [8, 8], strides = [1, 1]} : vector<8x96xf32> to vector<8x8xf32>
    %708 = vector.extract_strided_slice %660 {offsets = [0, 48], sizes = [8, 8], strides = [1, 1]} : vector<8x96xf32> to vector<8x8xf32>
    %709 = vector.extract_strided_slice %660 {offsets = [0, 80], sizes = [8, 8], strides = [1, 1]} : vector<8x96xf32> to vector<8x8xf32>
    %cst_256 = arith.constant dense<0.000000e+00> : vector<8x8xf32>
    %710 = tpu.matmul %707, %708, %cst_256 {dimension_numbers = #tpu.dot_dimension_numbers<[1], [1], [0], [0], [0, 0, 1, 0], [], []>} : vector<8x8xf32>, vector<8x8xf32>, vector<8x8xf32> -> vector<8x8xf32>
    %cst_257 = arith.constant 0.353553385 : f32
    %711 = vector.broadcast %cst_257 : f32 to vector<8x8xf32>
    %712 = arith.mulf %710, %711 : vector<8x8xf32>
    %713 = vector.broadcast %661 : vector<1x8xf32> to vector<8x8xf32>
    %714 = arith.addf %712, %713 : vector<8x8xf32>
    %cst_258 = arith.constant dense<0xFF800000> : vector<8xf32>
    %715 = vector.multi_reduction <maximumf>, %714, %cst_258 [1] : vector<8x8xf32> to vector<8xf32>
    %716 = vector.shape_cast %715 : vector<8xf32> to vector<8x1xf32>
    %717 = vector.broadcast %716 : vector<8x1xf32> to vector<8x8xf32>
    %718 = arith.subf %714, %717 : vector<8x8xf32>
    %719 = math.exp %718 : vector<8x8xf32>
    %cst_259 = arith.constant dense<0.000000e+00> : vector<8xf32>
    %720 = vector.multi_reduction <add>, %719, %cst_259 [1] : vector<8x8xf32> to vector<8xf32>
    %721 = vector.shape_cast %720 : vector<8xf32> to vector<8x1xf32>
    %722 = tpu.reciprocal %721 {approx = true} : vector<8x1xf32> -> vector<8x1xf32>
    %723 = vector.broadcast %722 : vector<8x1xf32> to vector<8x8xf32>
    %724 = arith.mulf %719, %723 : vector<8x8xf32>
    %cst_260 = arith.constant dense<0.000000e+00> : vector<8x8xf32>
    %725 = tpu.matmul %724, %709, %cst_260 {dimension_numbers = #tpu.dot_dimension_numbers<[1], [0], [0], [1], [0, 0, 1, 1], [], []>} : vector<8x8xf32>, vector<8x8xf32>, vector<8x8xf32> -> vector<8x8xf32>
    %726 = vector.extract_strided_slice %561 {offsets = [16, 0], sizes = [8, 32], strides = [1, 1]} : vector<32x32xf32> to vector<8x32xf32>
    %cst_261 = arith.constant dense<0.000000e+00> : vector<8x32xf32>
    %727 = tpu.matmul %725, %726, %cst_261 {dimension_numbers = #tpu.dot_dimension_numbers<[1], [0], [0], [1], [0, 0, 1, 1], [], []>} : vector<8x8xf32>, vector<8x32xf32>, vector<8x32xf32> -> vector<8x32xf32>
    %728 = arith.addf %706, %727 : vector<8x32xf32>
    %729 = vector.extract_strided_slice %660 {offsets = [0, 24], sizes = [8, 8], strides = [1, 1]} : vector<8x96xf32> to vector<8x8xf32>
    %730 = vector.extract_strided_slice %660 {offsets = [0, 56], sizes = [8, 8], strides = [1, 1]} : vector<8x96xf32> to vector<8x8xf32>
    %731 = vector.extract_strided_slice %660 {offsets = [0, 88], sizes = [8, 8], strides = [1, 1]} : vector<8x96xf32> to vector<8x8xf32>
    %cst_262 = arith.constant dense<0.000000e+00> : vector<8x8xf32>
    %732 = tpu.matmul %729, %730, %cst_262 {dimension_numbers = #tpu.dot_dimension_numbers<[1], [1], [0], [0], [0, 0, 1, 0], [], []>} : vector<8x8xf32>, vector<8x8xf32>, vector<8x8xf32> -> vector<8x8xf32>
    %cst_263 = arith.constant 0.353553385 : f32
    %733 = vector.broadcast %cst_263 : f32 to vector<8x8xf32>
    %734 = arith.mulf %732, %733 : vector<8x8xf32>
    %735 = vector.broadcast %661 : vector<1x8xf32> to vector<8x8xf32>
    %736 = arith.addf %734, %735 : vector<8x8xf32>
    %cst_264 = arith.constant dense<0xFF800000> : vector<8xf32>
    %737 = vector.multi_reduction <maximumf>, %736, %cst_264 [1] : vector<8x8xf32> to vector<8xf32>
    %738 = vector.shape_cast %737 : vector<8xf32> to vector<8x1xf32>
    %739 = vector.broadcast %738 : vector<8x1xf32> to vector<8x8xf32>
    %740 = arith.subf %736, %739 : vector<8x8xf32>
    %741 = math.exp %740 : vector<8x8xf32>
    %cst_265 = arith.constant dense<0.000000e+00> : vector<8xf32>
    %742 = vector.multi_reduction <add>, %741, %cst_265 [1] : vector<8x8xf32> to vector<8xf32>
    %743 = vector.shape_cast %742 : vector<8xf32> to vector<8x1xf32>
    %744 = tpu.reciprocal %743 {approx = true} : vector<8x1xf32> -> vector<8x1xf32>
    %745 = vector.broadcast %744 : vector<8x1xf32> to vector<8x8xf32>
    %746 = arith.mulf %741, %745 : vector<8x8xf32>
    %cst_266 = arith.constant dense<0.000000e+00> : vector<8x8xf32>
    %747 = tpu.matmul %746, %731, %cst_266 {dimension_numbers = #tpu.dot_dimension_numbers<[1], [0], [0], [1], [0, 0, 1, 1], [], []>} : vector<8x8xf32>, vector<8x8xf32>, vector<8x8xf32> -> vector<8x8xf32>
    %748 = vector.extract_strided_slice %561 {offsets = [24, 0], sizes = [8, 32], strides = [1, 1]} : vector<32x32xf32> to vector<8x32xf32>
    %cst_267 = arith.constant dense<0.000000e+00> : vector<8x32xf32>
    %749 = tpu.matmul %747, %748, %cst_267 {dimension_numbers = #tpu.dot_dimension_numbers<[1], [0], [0], [1], [0, 0, 1, 1], [], []>} : vector<8x8xf32>, vector<8x32xf32>, vector<8x32xf32> -> vector<8x32xf32>
    %750 = arith.addf %728, %749 : vector<8x32xf32>
    %751 = tpu.concatenate %659, %750 in 0 : vector<8x32xf32>, vector<8x32xf32> -> vector<16x32xf32>
    %c2_268 = arith.constant 2 : index
    %c0_269 = arith.constant 0 : index
    %c0_270 = arith.constant 0 : index
    %752 = vector.load %arg6[%c2_268, %c0_269, %c0_270] : memref<3x1x32xf32, #tpu.memory_space<vmem>>, vector<1x1x32xf32>
    %753 = vector.shape_cast %752 : vector<1x1x32xf32> to vector<1x32xf32>
    %754 = vector.broadcast %753 : vector<1x32xf32> to vector<16x32xf32>
    %755 = arith.addf %751, %754 : vector<16x32xf32>
    %756 = arith.addf %559, %755 : vector<16x32xf32>
    %c2_271 = arith.constant 2 : index
    %c0_272 = arith.constant 0 : index
    %c0_273 = arith.constant 0 : index
    %757 = vector.load %arg7[%c2_271, %c0_272, %c0_273] : memref<3x1x32xf32, #tpu.memory_space<vmem>>, vector<1x1x32xf32>
    %758 = vector.shape_cast %757 : vector<1x1x32xf32> to vector<1x32xf32>
    %c2_274 = arith.constant 2 : index
    %c0_275 = arith.constant 0 : index
    %c0_276 = arith.constant 0 : index
    %759 = vector.load %arg8[%c2_274, %c0_275, %c0_276] : memref<3x1x32xf32, #tpu.memory_space<vmem>>, vector<1x1x32xf32>
    %760 = vector.shape_cast %759 : vector<1x1x32xf32> to vector<1x32xf32>
    %cst_277 = arith.constant dense<0.000000e+00> : vector<16xf32>
    %761 = vector.multi_reduction <add>, %756, %cst_277 [1] : vector<16x32xf32> to vector<16xf32>
    %762 = vector.shape_cast %761 : vector<16xf32> to vector<16x1xf32>
    %cst_278 = arith.constant 3.200000e+01 : f32
    %763 = vector.broadcast %cst_278 : f32 to vector<16x1xf32>
    %764 = arith.divf %762, %763 : vector<16x1xf32>
    %765 = vector.broadcast %764 : vector<16x1xf32> to vector<16x32xf32>
    %766 = arith.subf %756, %765 : vector<16x32xf32>
    %767 = arith.mulf %766, %766 : vector<16x32xf32>
    %cst_279 = arith.constant dense<0.000000e+00> : vector<16xf32>
    %768 = vector.multi_reduction <add>, %767, %cst_279 [1] : vector<16x32xf32> to vector<16xf32>
    %769 = vector.shape_cast %768 : vector<16xf32> to vector<16x1xf32>
    %cst_280 = arith.constant 3.200000e+01 : f32
    %770 = vector.broadcast %cst_280 : f32 to vector<16x1xf32>
    %771 = arith.divf %769, %770 : vector<16x1xf32>
    %772 = vector.broadcast %764 : vector<16x1xf32> to vector<16x32xf32>
    %773 = arith.subf %756, %772 : vector<16x32xf32>
    %cst_281 = arith.constant 9.99999974E-6 : f32
    %774 = vector.broadcast %cst_281 : f32 to vector<16x1xf32>
    %775 = arith.addf %771, %774 : vector<16x1xf32>
    %776 = math.rsqrt %775 : vector<16x1xf32>
    %777 = vector.broadcast %776 : vector<16x1xf32> to vector<16x32xf32>
    %778 = arith.mulf %773, %777 : vector<16x32xf32>
    %779 = vector.broadcast %758 : vector<1x32xf32> to vector<16x32xf32>
    %780 = arith.mulf %778, %779 : vector<16x32xf32>
    %781 = vector.broadcast %760 : vector<1x32xf32> to vector<16x32xf32>
    %782 = arith.addf %780, %781 : vector<16x32xf32>
    %c2_282 = arith.constant 2 : index
    %c0_283 = arith.constant 0 : index
    %c0_284 = arith.constant 0 : index
    %783 = vector.load %arg9[%c2_282, %c0_283, %c0_284] : memref<3x32x128xf32, #tpu.memory_space<vmem>>, vector<1x32x128xf32>
    %784 = vector.shape_cast %783 : vector<1x32x128xf32> to vector<32x128xf32>
    %cst_285 = arith.constant dense<0.000000e+00> : vector<16x128xf32>
    %785 = tpu.matmul %782, %784, %cst_285 {dimension_numbers = #tpu.dot_dimension_numbers<[1], [0], [0], [1], [0, 0, 1, 1], [], []>} : vector<16x32xf32>, vector<32x128xf32>, vector<16x128xf32> -> vector<16x128xf32>
    %c2_286 = arith.constant 2 : index
    %c0_287 = arith.constant 0 : index
    %c0_288 = arith.constant 0 : index
    %786 = vector.load %arg10[%c2_286, %c0_287, %c0_288] : memref<3x1x128xf32, #tpu.memory_space<vmem>>, vector<1x1x128xf32>
    %787 = vector.shape_cast %786 : vector<1x1x128xf32> to vector<1x128xf32>
    %788 = vector.broadcast %787 : vector<1x128xf32> to vector<16x128xf32>
    %789 = arith.addf %785, %788 : vector<16x128xf32>
    %cst_289 = arith.constant 5.000000e-01 : f32
    %790 = vector.broadcast %cst_289 : f32 to vector<16x128xf32>
    %791 = arith.mulf %790, %789 : vector<16x128xf32>
    %cst_290 = arith.constant 4.471500e-02 : f32
    %792 = vector.broadcast %cst_290 : f32 to vector<16x128xf32>
    %793 = arith.mulf %792, %789 : vector<16x128xf32>
    %794 = arith.mulf %793, %789 : vector<16x128xf32>
    %795 = arith.mulf %794, %789 : vector<16x128xf32>
    %796 = arith.addf %789, %795 : vector<16x128xf32>
    %cst_291 = arith.constant 0.797884583 : f32
    %797 = vector.broadcast %cst_291 : f32 to vector<16x128xf32>
    %798 = arith.mulf %797, %796 : vector<16x128xf32>
    %799 = math.tanh %798 : vector<16x128xf32>
    %cst_292 = arith.constant 1.000000e+00 : f32
    %800 = vector.broadcast %cst_292 : f32 to vector<16x128xf32>
    %801 = arith.addf %800, %799 : vector<16x128xf32>
    %802 = arith.mulf %791, %801 : vector<16x128xf32>
    %c2_293 = arith.constant 2 : index
    %c0_294 = arith.constant 0 : index
    %c0_295 = arith.constant 0 : index
    %803 = vector.load %arg11[%c2_293, %c0_294, %c0_295] : memref<3x128x32xf32, #tpu.memory_space<vmem>>, vector<1x128x32xf32>
    %804 = vector.shape_cast %803 : vector<1x128x32xf32> to vector<128x32xf32>
    %cst_296 = arith.constant dense<0.000000e+00> : vector<16x32xf32>
    %805 = tpu.matmul %802, %804, %cst_296 {dimension_numbers = #tpu.dot_dimension_numbers<[1], [0], [0], [1], [0, 0, 1, 1], [], []>} : vector<16x128xf32>, vector<128x32xf32>, vector<16x32xf32> -> vector<16x32xf32>
    %c2_297 = arith.constant 2 : index
    %c0_298 = arith.constant 0 : index
    %c0_299 = arith.constant 0 : index
    %806 = vector.load %arg12[%c2_297, %c0_298, %c0_299] : memref<3x1x32xf32, #tpu.memory_space<vmem>>, vector<1x1x32xf32>
    %807 = vector.shape_cast %806 : vector<1x1x32xf32> to vector<1x32xf32>
    %808 = vector.broadcast %807 : vector<1x32xf32> to vector<16x32xf32>
    %809 = arith.addf %805, %808 : vector<16x32xf32>
    %810 = arith.addf %782, %809 : vector<16x32xf32>
    %c2_300 = arith.constant 2 : index
    %c0_301 = arith.constant 0 : index
    %c0_302 = arith.constant 0 : index
    %811 = vector.load %arg13[%c2_300, %c0_301, %c0_302] : memref<3x1x32xf32, #tpu.memory_space<vmem>>, vector<1x1x32xf32>
    %812 = vector.shape_cast %811 : vector<1x1x32xf32> to vector<1x32xf32>
    %c2_303 = arith.constant 2 : index
    %c0_304 = arith.constant 0 : index
    %c0_305 = arith.constant 0 : index
    %813 = vector.load %arg14[%c2_303, %c0_304, %c0_305] : memref<3x1x32xf32, #tpu.memory_space<vmem>>, vector<1x1x32xf32>
    %814 = vector.shape_cast %813 : vector<1x1x32xf32> to vector<1x32xf32>
    %cst_306 = arith.constant dense<0.000000e+00> : vector<16xf32>
    %815 = vector.multi_reduction <add>, %810, %cst_306 [1] : vector<16x32xf32> to vector<16xf32>
    %816 = vector.shape_cast %815 : vector<16xf32> to vector<16x1xf32>
    %cst_307 = arith.constant 3.200000e+01 : f32
    %817 = vector.broadcast %cst_307 : f32 to vector<16x1xf32>
    %818 = arith.divf %816, %817 : vector<16x1xf32>
    %819 = vector.broadcast %818 : vector<16x1xf32> to vector<16x32xf32>
    %820 = arith.subf %810, %819 : vector<16x32xf32>
    %821 = arith.mulf %820, %820 : vector<16x32xf32>
    %cst_308 = arith.constant dense<0.000000e+00> : vector<16xf32>
    %822 = vector.multi_reduction <add>, %821, %cst_308 [1] : vector<16x32xf32> to vector<16xf32>
    %823 = vector.shape_cast %822 : vector<16xf32> to vector<16x1xf32>
    %cst_309 = arith.constant 3.200000e+01 : f32
    %824 = vector.broadcast %cst_309 : f32 to vector<16x1xf32>
    %825 = arith.divf %823, %824 : vector<16x1xf32>
    %826 = vector.broadcast %818 : vector<16x1xf32> to vector<16x32xf32>
    %827 = arith.subf %810, %826 : vector<16x32xf32>
    %cst_310 = arith.constant 9.99999974E-6 : f32
    %828 = vector.broadcast %cst_310 : f32 to vector<16x1xf32>
    %829 = arith.addf %825, %828 : vector<16x1xf32>
    %830 = math.rsqrt %829 : vector<16x1xf32>
    %831 = vector.broadcast %830 : vector<16x1xf32> to vector<16x32xf32>
    %832 = arith.mulf %827, %831 : vector<16x32xf32>
    %833 = vector.broadcast %812 : vector<1x32xf32> to vector<16x32xf32>
    %834 = arith.mulf %832, %833 : vector<16x32xf32>
    %835 = vector.broadcast %814 : vector<1x32xf32> to vector<16x32xf32>
    %836 = arith.addf %834, %835 : vector<16x32xf32>
    %837 = tpu.concatenate %589, %611, %633, %655, %680, %702, %724, %746 in 0 : vector<8x8xf32>, vector<8x8xf32>, vector<8x8xf32>, vector<8x8xf32>, vector<8x8xf32>, vector<8x8xf32>, vector<8x8xf32>, vector<8x8xf32> -> vector<64x8xf32>
    %c0_311 = arith.constant 0 : index
    %c0_312 = arith.constant 0 : index
    %838 = vector.load %arg42[%c0_311, %c0_312] : memref<64x8xf32, #tpu.memory_space<vmem>>, vector<64x8xf32>
    tpu.vector_store %arg42[%c0_311, %c0_312], %837 {strides = array<i32>} : memref<64x8xf32, #tpu.memory_space<vmem>>, vector<64x8xf32>,
    %839 = vector.extract_strided_slice %836 {offsets = [0, 0], sizes = [1, 32], strides = [1, 1]} : vector<16x32xf32> to vector<1x32xf32>
    %840 = vector.extract_strided_slice %836 {offsets = [8, 0], sizes = [1, 32], strides = [1, 1]} : vector<16x32xf32> to vector<1x32xf32>
    %841 = tpu.concatenate %839, %840 in 0 : vector<1x32xf32>, vector<1x32xf32> -> vector<2x32xf32>
    %c0_313 = arith.constant 0 : index
    %c0_314 = arith.constant 0 : index
    %842 = vector.load %arg31[%c0_313, %c0_314] : memref<32x16xf32, #tpu.memory_space<vmem>>, vector<32x16xf32>
    %cst_315 = arith.constant dense<0.000000e+00> : vector<2x16xf32>
    %843 = tpu.matmul %841, %842, %cst_315 {dimension_numbers = #tpu.dot_dimension_numbers<[1], [0], [0], [1], [0, 0, 1, 1], [], []>} : vector<2x32xf32>, vector<32x16xf32>, vector<2x16xf32> -> vector<2x16xf32>
    %c0_316 = arith.constant 0 : index
    %c0_317 = arith.constant 0 : index
    %844 = vector.load %arg32[%c0_316, %c0_317] : memref<1x16xf32, #tpu.memory_space<vmem>>, vector<1x16xf32>
    %845 = vector.broadcast %844 : vector<1x16xf32> to vector<2x16xf32>
    %846 = arith.addf %843, %845 : vector<2x16xf32>
    %c0_318 = arith.constant 0 : index
    %c0_319 = arith.constant 0 : index
    %847 = vector.load %arg33[%c0_318, %c0_319] : memref<1x16xf32, #tpu.memory_space<vmem>>, vector<1x16xf32>
    %c0_320 = arith.constant 0 : index
    %c0_321 = arith.constant 0 : index
    %848 = vector.load %arg34[%c0_320, %c0_321] : memref<1x16xf32, #tpu.memory_space<vmem>>, vector<1x16xf32>
    %cst_322 = arith.constant dense<0.000000e+00> : vector<2xf32>
    %849 = vector.multi_reduction <add>, %846, %cst_322 [1] : vector<2x16xf32> to vector<2xf32>
    %850 = vector.shape_cast %849 : vector<2xf32> to vector<2x1xf32>
    %cst_323 = arith.constant 1.600000e+01 : f32
    %851 = vector.broadcast %cst_323 : f32 to vector<2x1xf32>
    %852 = arith.divf %850, %851 : vector<2x1xf32>
    %853 = vector.broadcast %852 : vector<2x1xf32> to vector<2x16xf32>
    %854 = arith.subf %846, %853 : vector<2x16xf32>
    %855 = arith.mulf %854, %854 : vector<2x16xf32>
    %cst_324 = arith.constant dense<0.000000e+00> : vector<2xf32>
    %856 = vector.multi_reduction <add>, %855, %cst_324 [1] : vector<2x16xf32> to vector<2xf32>
    %857 = vector.shape_cast %856 : vector<2xf32> to vector<2x1xf32>
    %cst_325 = arith.constant 1.600000e+01 : f32
    %858 = vector.broadcast %cst_325 : f32 to vector<2x1xf32>
    %859 = arith.divf %857, %858 : vector<2x1xf32>
    %860 = vector.broadcast %852 : vector<2x1xf32> to vector<2x16xf32>
    %861 = arith.subf %846, %860 : vector<2x16xf32>
    %cst_326 = arith.constant 9.99999974E-6 : f32
    %862 = vector.broadcast %cst_326 : f32 to vector<2x1xf32>
    %863 = arith.addf %859, %862 : vector<2x1xf32>
    %864 = math.rsqrt %863 : vector<2x1xf32>
    %865 = vector.broadcast %864 : vector<2x1xf32> to vector<2x16xf32>
    %866 = arith.mulf %861, %865 : vector<2x16xf32>
    %867 = vector.broadcast %847 : vector<1x16xf32> to vector<2x16xf32>
    %868 = arith.mulf %866, %867 : vector<2x16xf32>
    %869 = vector.broadcast %848 : vector<1x16xf32> to vector<2x16xf32>
    %870 = arith.addf %868, %869 : vector<2x16xf32>
    %cst_327 = arith.constant 5.000000e-01 : f32
    %871 = vector.broadcast %cst_327 : f32 to vector<2x16xf32>
    %872 = arith.mulf %871, %870 : vector<2x16xf32>
    %cst_328 = arith.constant 4.471500e-02 : f32
    %873 = vector.broadcast %cst_328 : f32 to vector<2x16xf32>
    %874 = arith.mulf %873, %870 : vector<2x16xf32>
    %875 = arith.mulf %874, %870 : vector<2x16xf32>
    %876 = arith.mulf %875, %870 : vector<2x16xf32>
    %877 = arith.addf %870, %876 : vector<2x16xf32>
    %cst_329 = arith.constant 0.797884583 : f32
    %878 = vector.broadcast %cst_329 : f32 to vector<2x16xf32>
    %879 = arith.mulf %878, %877 : vector<2x16xf32>
    %880 = math.tanh %879 : vector<2x16xf32>
    %cst_330 = arith.constant 1.000000e+00 : f32
    %881 = vector.broadcast %cst_330 : f32 to vector<2x16xf32>
    %882 = arith.addf %881, %880 : vector<2x16xf32>
    %883 = arith.mulf %872, %882 : vector<2x16xf32>
    %c0_331 = arith.constant 0 : index
    %c0_332 = arith.constant 0 : index
    %884 = vector.load %arg35[%c0_331, %c0_332] : memref<16x7xf32, #tpu.memory_space<vmem>>, vector<16x7xf32>
    %cst_333 = arith.constant dense<0.000000e+00> : vector<2x7xf32>
    %885 = tpu.matmul %883, %884, %cst_333 {dimension_numbers = #tpu.dot_dimension_numbers<[1], [0], [0], [1], [0, 0, 1, 1], [], []>} : vector<2x16xf32>, vector<16x7xf32>, vector<2x7xf32> -> vector<2x7xf32>
    %c0_334 = arith.constant 0 : index
    %c0_335 = arith.constant 0 : index
    %886 = vector.load %arg36[%c0_334, %c0_335] : memref<1x7xf32, #tpu.memory_space<vmem>>, vector<1x7xf32>
    %887 = vector.broadcast %886 : vector<1x7xf32> to vector<2x7xf32>
    %888 = arith.addf %885, %887 : vector<2x7xf32>
    %cst_336 = arith.constant dense<0xFF800000> : vector<2xf32>
    %889 = vector.multi_reduction <maximumf>, %888, %cst_336 [1] : vector<2x7xf32> to vector<2xf32>
    %890 = vector.shape_cast %889 : vector<2xf32> to vector<2x1xf32>
    %891 = vector.broadcast %890 : vector<2x1xf32> to vector<2x7xf32>
    %892 = arith.subf %888, %891 : vector<2x7xf32>
    %893 = math.exp %892 : vector<2x7xf32>
    %cst_337 = arith.constant dense<0.000000e+00> : vector<2xf32>
    %894 = vector.multi_reduction <add>, %893, %cst_337 [1] : vector<2x7xf32> to vector<2xf32>
    %895 = vector.shape_cast %894 : vector<2xf32> to vector<2x1xf32>
    %896 = tpu.reciprocal %895 {approx = true} : vector<2x1xf32> -> vector<2x1xf32>
    %897 = vector.broadcast %896 : vector<2x1xf32> to vector<2x7xf32>
    %898 = arith.mulf %893, %897 : vector<2x7xf32>
    %c0_338 = arith.constant 0 : index
    %c0_339 = arith.constant 0 : index
    %899 = vector.load %arg43[%c0_338, %c0_339] : memref<2x7xf32, #tpu.memory_space<vmem>>, vector<2x7xf32>
    tpu.vector_store %arg43[%c0_338, %c0_339], %898 {strides = array<i32>} : memref<2x7xf32, #tpu.memory_space<vmem>>, vector<2x7xf32>,
    %c0_340 = arith.constant 0 : index
    %c0_341 = arith.constant 0 : index
    %900 = vector.load %arg2[%c0_340, %c0_341] : memref<16x1xf32, #tpu.memory_space<vmem>>, vector<16x1xf32>
    %c0_342 = arith.constant 0 : index
    %c0_343 = arith.constant 0 : index
    %901 = vector.load %arg15[%c0_342, %c0_343] : memref<32x16xf32, #tpu.memory_space<vmem>>, vector<32x16xf32>
    %cst_344 = arith.constant dense<0.000000e+00> : vector<16x16xf32>
    %902 = tpu.matmul %836, %901, %cst_344 {dimension_numbers = #tpu.dot_dimension_numbers<[1], [0], [0], [1], [0, 0, 1, 1], [], []>} : vector<16x32xf32>, vector<32x16xf32>, vector<16x16xf32> -> vector<16x16xf32>
    %c0_345 = arith.constant 0 : index
    %c0_346 = arith.constant 0 : index
    %903 = vector.load %arg16[%c0_345, %c0_346] : memref<1x16xf32, #tpu.memory_space<vmem>>, vector<1x16xf32>
    %904 = vector.broadcast %903 : vector<1x16xf32> to vector<16x16xf32>
    %905 = arith.addf %902, %904 : vector<16x16xf32>
    %cst_347 = arith.constant 5.000000e-01 : f32
    %906 = vector.broadcast %cst_347 : f32 to vector<16x16xf32>
    %907 = arith.mulf %906, %905 : vector<16x16xf32>
    %cst_348 = arith.constant 4.471500e-02 : f32
    %908 = vector.broadcast %cst_348 : f32 to vector<16x16xf32>
    %909 = arith.mulf %908, %905 : vector<16x16xf32>
    %910 = arith.mulf %909, %905 : vector<16x16xf32>
    %911 = arith.mulf %910, %905 : vector<16x16xf32>
    %912 = arith.addf %905, %911 : vector<16x16xf32>
    %cst_349 = arith.constant 0.797884583 : f32
    %913 = vector.broadcast %cst_349 : f32 to vector<16x16xf32>
    %914 = arith.mulf %913, %912 : vector<16x16xf32>
    %915 = math.tanh %914 : vector<16x16xf32>
    %cst_350 = arith.constant 1.000000e+00 : f32
    %916 = vector.broadcast %cst_350 : f32 to vector<16x16xf32>
    %917 = arith.addf %916, %915 : vector<16x16xf32>
    %918 = arith.mulf %907, %917 : vector<16x16xf32>
    %c0_351 = arith.constant 0 : index
    %c0_352 = arith.constant 0 : index
    %919 = vector.load %arg17[%c0_351, %c0_352] : memref<16x1xf32, #tpu.memory_space<vmem>>, vector<16x1xf32>
    %cst_353 = arith.constant dense<0.000000e+00> : vector<16x1xf32>
    %920 = tpu.matmul %918, %919, %cst_353 {dimension_numbers = #tpu.dot_dimension_numbers<[1], [0], [0], [1], [0, 0, 1, 1], [], []>} : vector<16x16xf32>, vector<16x1xf32>, vector<16x1xf32> -> vector<16x1xf32>
    %c0_354 = arith.constant 0 : index
    %c0_355 = arith.constant 0 : index
    %921 = vector.load %arg18[%c0_354, %c0_355] : memref<1x1xf32, #tpu.memory_space<vmem>>, vector<1x1xf32>
    %922 = vector.broadcast %921 : vector<1x1xf32> to vector<16x1xf32>
    %923 = arith.addf %920, %922 : vector<16x1xf32>
    %924 = arith.negf %923 : vector<16x1xf32>
    %925 = math.exp %924 : vector<16x1xf32>
    %cst_356 = arith.constant 1.000000e+00 : f32
    %926 = vector.broadcast %cst_356 : f32 to vector<16x1xf32>
    %927 = arith.addf %926, %925 : vector<16x1xf32>
    %928 = arith.divf %926, %927 : vector<16x1xf32>
    %929 = arith.mulf %928, %900 : vector<16x1xf32>
    %cst_357 = arith.constant 1.000000e+00 : f32
    %930 = vector.broadcast %cst_357 : f32 to vector<16x1xf32>
    %931 = arith.subf %930, %929 : vector<16x1xf32>
    %932 = arith.mulf %931, %900 : vector<16x1xf32>
    %933 = vector.extract_strided_slice %932 {offsets = [0, 0], sizes = [8, 1], strides = [1, 1]} : vector<16x1xf32> to vector<8x1xf32>
    %934 = vector.extract_strided_slice %836 {offsets = [0, 0], sizes = [8, 32], strides = [1, 1]} : vector<16x32xf32> to vector<8x32xf32>
    %cst_358 = arith.constant dense<0.000000e+00> : vector<1xf32>
    %935 = vector.multi_reduction <add>, %933, %cst_358 [0] : vector<8x1xf32> to vector<1xf32>
    %936 = vector.shape_cast %935 : vector<1xf32> to vector<1x1xf32>
    %cst_359 = arith.constant 9.99999971E-10 : f32
    %937 = vector.broadcast %cst_359 : f32 to vector<1x1xf32>
    %938 = arith.addf %936, %937 : vector<1x1xf32>
    %939 = tpu.reciprocal %938 {approx = true} : vector<1x1xf32> -> vector<1x1xf32>
    %940 = vector.broadcast %939 : vector<1x1xf32> to vector<8x1xf32>
    %941 = arith.mulf %933, %940 : vector<8x1xf32>
    %942 = vector.broadcast %941 : vector<8x1xf32> to vector<8x32xf32>
    %943 = arith.mulf %942, %934 : vector<8x32xf32>
    %cst_360 = arith.constant dense<0.000000e+00> : vector<32xf32>
    %944 = vector.multi_reduction <add>, %943, %cst_360 [0] : vector<8x32xf32> to vector<32xf32>
    %945 = vector.shape_cast %944 : vector<32xf32> to vector<1x32xf32>
    %946 = vector.extract_strided_slice %932 {offsets = [8, 0], sizes = [8, 1], strides = [1, 1]} : vector<16x1xf32> to vector<8x1xf32>
    %947 = vector.extract_strided_slice %836 {offsets = [8, 0], sizes = [8, 32], strides = [1, 1]} : vector<16x32xf32> to vector<8x32xf32>
    %cst_361 = arith.constant dense<0.000000e+00> : vector<1xf32>
    %948 = vector.multi_reduction <add>, %946, %cst_361 [0] : vector<8x1xf32> to vector<1xf32>
    %949 = vector.shape_cast %948 : vector<1xf32> to vector<1x1xf32>
    %cst_362 = arith.constant 9.99999971E-10 : f32
    %950 = vector.broadcast %cst_362 : f32 to vector<1x1xf32>
    %951 = arith.addf %949, %950 : vector<1x1xf32>
    %952 = tpu.reciprocal %951 {approx = true} : vector<1x1xf32> -> vector<1x1xf32>
    %953 = vector.broadcast %952 : vector<1x1xf32> to vector<8x1xf32>
    %954 = arith.mulf %946, %953 : vector<8x1xf32>
    %955 = vector.broadcast %954 : vector<8x1xf32> to vector<8x32xf32>
    %956 = arith.mulf %955, %947 : vector<8x32xf32>
    %cst_363 = arith.constant dense<0.000000e+00> : vector<32xf32>
    %957 = vector.multi_reduction <add>, %956, %cst_363 [0] : vector<8x32xf32> to vector<32xf32>
    %958 = vector.shape_cast %957 : vector<32xf32> to vector<1x32xf32>
    %959 = tpu.concatenate %945, %958 in 0 : vector<1x32xf32>, vector<1x32xf32> -> vector<2x32xf32>
    %c0_364 = arith.constant 0 : index
    %c0_365 = arith.constant 0 : index
    %960 = vector.load %arg19[%c0_364, %c0_365] : memref<32x32xf32, #tpu.memory_space<vmem>>, vector<32x32xf32>
    %cst_366 = arith.constant dense<0.000000e+00> : vector<2x32xf32>
    %961 = tpu.matmul %959, %960, %cst_366 {dimension_numbers = #tpu.dot_dimension_numbers<[1], [0], [0], [1], [0, 0, 1, 1], [], []>} : vector<2x32xf32>, vector<32x32xf32>, vector<2x32xf32> -> vector<2x32xf32>
    %c0_367 = arith.constant 0 : index
    %c0_368 = arith.constant 0 : index
    %962 = vector.load %arg20[%c0_367, %c0_368] : memref<1x32xf32, #tpu.memory_space<vmem>>, vector<1x32xf32>
    %963 = vector.broadcast %962 : vector<1x32xf32> to vector<2x32xf32>
    %964 = arith.addf %961, %963 : vector<2x32xf32>
    %c0_369 = arith.constant 0 : index
    %c0_370 = arith.constant 0 : index
    %965 = vector.load %arg21[%c0_369, %c0_370] : memref<1x32xf32, #tpu.memory_space<vmem>>, vector<1x32xf32>
    %c0_371 = arith.constant 0 : index
    %c0_372 = arith.constant 0 : index
    %966 = vector.load %arg22[%c0_371, %c0_372] : memref<1x32xf32, #tpu.memory_space<vmem>>, vector<1x32xf32>
    %cst_373 = arith.constant dense<0.000000e+00> : vector<2xf32>
    %967 = vector.multi_reduction <add>, %964, %cst_373 [1] : vector<2x32xf32> to vector<2xf32>
    %968 = vector.shape_cast %967 : vector<2xf32> to vector<2x1xf32>
    %cst_374 = arith.constant 3.200000e+01 : f32
    %969 = vector.broadcast %cst_374 : f32 to vector<2x1xf32>
    %970 = arith.divf %968, %969 : vector<2x1xf32>
    %971 = vector.broadcast %970 : vector<2x1xf32> to vector<2x32xf32>
    %972 = arith.subf %964, %971 : vector<2x32xf32>
    %973 = arith.mulf %972, %972 : vector<2x32xf32>
    %cst_375 = arith.constant dense<0.000000e+00> : vector<2xf32>
    %974 = vector.multi_reduction <add>, %973, %cst_375 [1] : vector<2x32xf32> to vector<2xf32>
    %975 = vector.shape_cast %974 : vector<2xf32> to vector<2x1xf32>
    %cst_376 = arith.constant 3.200000e+01 : f32
    %976 = vector.broadcast %cst_376 : f32 to vector<2x1xf32>
    %977 = arith.divf %975, %976 : vector<2x1xf32>
    %978 = vector.broadcast %970 : vector<2x1xf32> to vector<2x32xf32>
    %979 = arith.subf %964, %978 : vector<2x32xf32>
    %cst_377 = arith.constant 9.99999974E-6 : f32
    %980 = vector.broadcast %cst_377 : f32 to vector<2x1xf32>
    %981 = arith.addf %977, %980 : vector<2x1xf32>
    %982 = math.rsqrt %981 : vector<2x1xf32>
    %983 = vector.broadcast %982 : vector<2x1xf32> to vector<2x32xf32>
    %984 = arith.mulf %979, %983 : vector<2x32xf32>
    %985 = vector.broadcast %965 : vector<1x32xf32> to vector<2x32xf32>
    %986 = arith.mulf %984, %985 : vector<2x32xf32>
    %987 = vector.broadcast %966 : vector<1x32xf32> to vector<2x32xf32>
    %988 = arith.addf %986, %987 : vector<2x32xf32>
    %cst_378 = arith.constant 5.000000e-01 : f32
    %989 = vector.broadcast %cst_378 : f32 to vector<2x32xf32>
    %990 = arith.mulf %989, %988 : vector<2x32xf32>
    %cst_379 = arith.constant 4.471500e-02 : f32
    %991 = vector.broadcast %cst_379 : f32 to vector<2x32xf32>
    %992 = arith.mulf %991, %988 : vector<2x32xf32>
    %993 = arith.mulf %992, %988 : vector<2x32xf32>
    %994 = arith.mulf %993, %988 : vector<2x32xf32>
    %995 = arith.addf %988, %994 : vector<2x32xf32>
    %cst_380 = arith.constant 0.797884583 : f32
    %996 = vector.broadcast %cst_380 : f32 to vector<2x32xf32>
    %997 = arith.mulf %996, %995 : vector<2x32xf32>
    %998 = math.tanh %997 : vector<2x32xf32>
    %cst_381 = arith.constant 1.000000e+00 : f32
    %999 = vector.broadcast %cst_381 : f32 to vector<2x32xf32>
    %1000 = arith.addf %999, %998 : vector<2x32xf32>
    %1001 = arith.mulf %990, %1000 : vector<2x32xf32>
    %c0_382 = arith.constant 0 : index
    %c0_383 = arith.constant 0 : index
    %1002 = vector.load %arg23[%c0_382, %c0_383] : memref<32x32xf32, #tpu.memory_space<vmem>>, vector<32x32xf32>
    %cst_384 = arith.constant dense<0.000000e+00> : vector<2x32xf32>
    %1003 = tpu.matmul %1001, %1002, %cst_384 {dimension_numbers = #tpu.dot_dimension_numbers<[1], [0], [0], [1], [0, 0, 1, 1], [], []>} : vector<2x32xf32>, vector<32x32xf32>, vector<2x32xf32> -> vector<2x32xf32>
    %c0_385 = arith.constant 0 : index
    %c0_386 = arith.constant 0 : index
    %1004 = vector.load %arg24[%c0_385, %c0_386] : memref<1x32xf32, #tpu.memory_space<vmem>>, vector<1x32xf32>
    %1005 = vector.broadcast %1004 : vector<1x32xf32> to vector<2x32xf32>
    %1006 = arith.addf %1003, %1005 : vector<2x32xf32>
    %c0_387 = arith.constant 0 : index
    %c0_388 = arith.constant 0 : index
    %1007 = vector.load %arg37[%c0_387, %c0_388] : memref<32x8xf32, #tpu.memory_space<vmem>>, vector<32x8xf32>
    %cst_389 = arith.constant dense<0.000000e+00> : vector<2x8xf32>
    %1008 = tpu.matmul %841, %1007, %cst_389 {dimension_numbers = #tpu.dot_dimension_numbers<[1], [0], [0], [1], [0, 0, 1, 1], [], []>} : vector<2x32xf32>, vector<32x8xf32>, vector<2x8xf32> -> vector<2x8xf32>
    %c0_390 = arith.constant 0 : index
    %c0_391 = arith.constant 0 : index
    %1009 = vector.load %arg38[%c0_390, %c0_391] : memref<1x8xf32, #tpu.memory_space<vmem>>, vector<1x8xf32>
    %1010 = vector.broadcast %1009 : vector<1x8xf32> to vector<2x8xf32>
    %1011 = arith.addf %1008, %1010 : vector<2x8xf32>
    %cst_392 = arith.constant 0.000000e+00 : f32
    %1012 = vector.broadcast %cst_392 : f32 to vector<2x8xf32>
    %1013 = arith.maximumf %1011, %1012 : vector<2x8xf32>
    %c0_393 = arith.constant 0 : index
    %c0_394 = arith.constant 0 : index
    %1014 = vector.load %arg39[%c0_393, %c0_394] : memref<8x1xf32, #tpu.memory_space<vmem>>, vector<8x1xf32>
    %cst_395 = arith.constant dense<0.000000e+00> : vector<2x1xf32>
    %1015 = tpu.matmul %1013, %1014, %cst_395 {dimension_numbers = #tpu.dot_dimension_numbers<[1], [0], [0], [1], [0, 0, 1, 1], [], []>} : vector<2x8xf32>, vector<8x1xf32>, vector<2x1xf32> -> vector<2x1xf32>
    %c0_396 = arith.constant 0 : index
    %c0_397 = arith.constant 0 : index
    %1016 = vector.load %arg40[%c0_396, %c0_397] : memref<1x1xf32, #tpu.memory_space<vmem>>, vector<1x1xf32>
    %1017 = vector.broadcast %1016 : vector<1x1xf32> to vector<2x1xf32>
    %1018 = arith.addf %1015, %1017 : vector<2x1xf32>
    %1019 = arith.negf %1018 : vector<2x1xf32>
    %1020 = math.exp %1019 : vector<2x1xf32>
    %cst_398 = arith.constant 1.000000e+00 : f32
    %1021 = vector.broadcast %cst_398 : f32 to vector<2x1xf32>
    %1022 = arith.addf %1021, %1020 : vector<2x1xf32>
    %1023 = arith.divf %1021, %1022 : vector<2x1xf32>
    %c0_399 = arith.constant 0 : index
    %c0_400 = arith.constant 0 : index
    %1024 = vector.load %arg44[%c0_399, %c0_400] : memref<2x1xf32, #tpu.memory_space<vmem>>, vector<2x1xf32>
    tpu.vector_store %arg44[%c0_399, %c0_400], %1023 {strides = array<i32>} : memref<2x1xf32, #tpu.memory_space<vmem>>, vector<2x1xf32>,
    %c0_401 = arith.constant 0 : index
    %c0_402 = arith.constant 0 : index
    %1025 = vector.load %arg25[%c0_401, %c0_402] : memref<64x32xf32, #tpu.memory_space<vmem>>, vector<32x32xf32>
    %cst_403 = arith.constant dense<0.000000e+00> : vector<2x32xf32>
    %1026 = tpu.matmul %841, %1025, %cst_403 {dimension_numbers = #tpu.dot_dimension_numbers<[1], [0], [0], [1], [0, 0, 1, 1], [], []>} : vector<2x32xf32>, vector<32x32xf32>, vector<2x32xf32> -> vector<2x32xf32>
    %c32 = arith.constant 32 : index
    %c0_404 = arith.constant 0 : index
    %1027 = vector.load %arg25[%c32, %c0_404] : memref<64x32xf32, #tpu.memory_space<vmem>>, vector<32x32xf32>
    %cst_405 = arith.constant dense<0.000000e+00> : vector<2x32xf32>
    %1028 = tpu.matmul %1006, %1027, %cst_405 {dimension_numbers = #tpu.dot_dimension_numbers<[1], [0], [0], [1], [0, 0, 1, 1], [], []>} : vector<2x32xf32>, vector<32x32xf32>, vector<2x32xf32> -> vector<2x32xf32>
    %1029 = arith.addf %1026, %1028 : vector<2x32xf32>
    %c0_406 = arith.constant 0 : index
    %c0_407 = arith.constant 0 : index
    %1030 = vector.load %arg26[%c0_406, %c0_407] : memref<1x32xf32, #tpu.memory_space<vmem>>, vector<1x32xf32>
    %1031 = vector.broadcast %1030 : vector<1x32xf32> to vector<2x32xf32>
    %1032 = arith.addf %1029, %1031 : vector<2x32xf32>
    %c0_408 = arith.constant 0 : index
    %c0_409 = arith.constant 0 : index
    %1033 = vector.load %arg27[%c0_408, %c0_409] : memref<1x32xf32, #tpu.memory_space<vmem>>, vector<1x32xf32>
    %c0_410 = arith.constant 0 : index
    %c0_411 = arith.constant 0 : index
    %1034 = vector.load %arg28[%c0_410, %c0_411] : memref<1x32xf32, #tpu.memory_space<vmem>>, vector<1x32xf32>
    %cst_412 = arith.constant dense<0.000000e+00> : vector<2xf32>
    %1035 = vector.multi_reduction <add>, %1032, %cst_412 [1] : vector<2x32xf32> to vector<2xf32>
    %1036 = vector.shape_cast %1035 : vector<2xf32> to vector<2x1xf32>
    %cst_413 = arith.constant 3.200000e+01 : f32
    %1037 = vector.broadcast %cst_413 : f32 to vector<2x1xf32>
    %1038 = arith.divf %1036, %1037 : vector<2x1xf32>
    %1039 = vector.broadcast %1038 : vector<2x1xf32> to vector<2x32xf32>
    %1040 = arith.subf %1032, %1039 : vector<2x32xf32>
    %1041 = arith.mulf %1040, %1040 : vector<2x32xf32>
    %cst_414 = arith.constant dense<0.000000e+00> : vector<2xf32>
    %1042 = vector.multi_reduction <add>, %1041, %cst_414 [1] : vector<2x32xf32> to vector<2xf32>
    %1043 = vector.shape_cast %1042 : vector<2xf32> to vector<2x1xf32>
    %cst_415 = arith.constant 3.200000e+01 : f32
    %1044 = vector.broadcast %cst_415 : f32 to vector<2x1xf32>
    %1045 = arith.divf %1043, %1044 : vector<2x1xf32>
    %1046 = vector.broadcast %1038 : vector<2x1xf32> to vector<2x32xf32>
    %1047 = arith.subf %1032, %1046 : vector<2x32xf32>
    %cst_416 = arith.constant 9.99999974E-6 : f32
    %1048 = vector.broadcast %cst_416 : f32 to vector<2x1xf32>
    %1049 = arith.addf %1045, %1048 : vector<2x1xf32>
    %1050 = math.rsqrt %1049 : vector<2x1xf32>
    %1051 = vector.broadcast %1050 : vector<2x1xf32> to vector<2x32xf32>
    %1052 = arith.mulf %1047, %1051 : vector<2x32xf32>
    %1053 = vector.broadcast %1033 : vector<1x32xf32> to vector<2x32xf32>
    %1054 = arith.mulf %1052, %1053 : vector<2x32xf32>
    %1055 = vector.broadcast %1034 : vector<1x32xf32> to vector<2x32xf32>
    %1056 = arith.addf %1054, %1055 : vector<2x32xf32>
    %cst_417 = arith.constant 5.000000e-01 : f32
    %1057 = vector.broadcast %cst_417 : f32 to vector<2x32xf32>
    %1058 = arith.mulf %1057, %1056 : vector<2x32xf32>
    %cst_418 = arith.constant 4.471500e-02 : f32
    %1059 = vector.broadcast %cst_418 : f32 to vector<2x32xf32>
    %1060 = arith.mulf %1059, %1056 : vector<2x32xf32>
    %1061 = arith.mulf %1060, %1056 : vector<2x32xf32>
    %1062 = arith.mulf %1061, %1056 : vector<2x32xf32>
    %1063 = arith.addf %1056, %1062 : vector<2x32xf32>
    %cst_419 = arith.constant 0.797884583 : f32
    %1064 = vector.broadcast %cst_419 : f32 to vector<2x32xf32>
    %1065 = arith.mulf %1064, %1063 : vector<2x32xf32>
    %1066 = math.tanh %1065 : vector<2x32xf32>
    %cst_420 = arith.constant 1.000000e+00 : f32
    %1067 = vector.broadcast %cst_420 : f32 to vector<2x32xf32>
    %1068 = arith.addf %1067, %1066 : vector<2x32xf32>
    %1069 = arith.mulf %1058, %1068 : vector<2x32xf32>
    %c0_421 = arith.constant 0 : index
    %c0_422 = arith.constant 0 : index
    %1070 = vector.load %arg29[%c0_421, %c0_422] : memref<32x32xf32, #tpu.memory_space<vmem>>, vector<32x32xf32>
    %cst_423 = arith.constant dense<0.000000e+00> : vector<2x32xf32>
    %1071 = tpu.matmul %1069, %1070, %cst_423 {dimension_numbers = #tpu.dot_dimension_numbers<[1], [0], [0], [1], [0, 0, 1, 1], [], []>} : vector<2x32xf32>, vector<32x32xf32>, vector<2x32xf32> -> vector<2x32xf32>
    %c0_424 = arith.constant 0 : index
    %c0_425 = arith.constant 0 : index
    %1072 = vector.load %arg30[%c0_424, %c0_425] : memref<1x32xf32, #tpu.memory_space<vmem>>, vector<1x32xf32>
    %1073 = vector.broadcast %1072 : vector<1x32xf32> to vector<2x32xf32>
    %1074 = arith.addf %1071, %1073 : vector<2x32xf32>
    %c0_426 = arith.constant 0 : index
    %c0_427 = arith.constant 0 : index
    %1075 = vector.load %arg41[%c0_426, %c0_427] : memref<2x32xf32, #tpu.memory_space<vmem>>, vector<2x32xf32>
    tpu.vector_store %arg41[%c0_426, %c0_427], %1074 {strides = array<i32>} : memref<2x32xf32, #tpu.memory_space<vmem>>, vector<2x32xf32>,
    return
  }
}

</mosaic_0001>

<llo_original>
// kernel: question_expert_forward.1
$region0: #{question_expert_forward.1}
  #allocation0 [shape = 'u32[]', space=smem, size = 0x4, offset = 0x4, fixed_abs, tag = 'smem constant byte address 0x4 - core index']
  #allocation1 [shape = 'u32[72,128]{1,0:T(1,128)}', space=vmem, size = 0x9000, scoped, tag = 'internal scratch']
  #allocation2 [shape = 'f32[1,1]{1,0:T(1,128)S(1)}', space=vmem, size = 0x200, scoped, tag = 'scoped memory for question_expert_forward.1']
  #allocation3 [shape = 'f32[1,1]{1,0:T(1,128)S(1)}', space=vmem, size = 0x200, scoped, tag = 'scoped memory for question_expert_forward.1']
  %s0 = inlined_call_operand.smem [shape: u32[45], index: -1, kind: input, shape index: {}]
  %s1 = sld [smem:[%s0]]
  %s2 = scalar_lea.smem %s0, 1
  %s3 = sld [smem:[%s2]]
  %s4 = scalar_lea.smem %s0, 2
  %s5 = sld [smem:[%s4]]
  %s6 = scalar_lea.smem %s0, 3
  %s7 = sld [smem:[%s6]]
  %s8 = scalar_lea.smem %s0, 4
  %s9 = sld [smem:[%s8]]
  %s10 = scalar_lea.smem %s0, 5
  %s11 = sld [smem:[%s10]]
  %s12 = scalar_lea.smem %s0, 6
  %s13 = sld [smem:[%s12]]
  %s14 = scalar_lea.smem %s0, 7
  %s15 = sld [smem:[%s14]]
  %s16 = scalar_lea.smem %s0, 8
  %s17 = sld [smem:[%s16]]
  %s18 = scalar_lea.smem %s0, 9
  %s19 = sld [smem:[%s18]]
  %s20 = scalar_lea.smem %s0, 10
  %s21 = sld [smem:[%s20]]
  %s22 = scalar_lea.smem %s0, 11
  %s23 = sld [smem:[%s22]]
  %s24 = scalar_lea.smem %s0, 12
  %s25 = sld [smem:[%s24]]
  %s26 = scalar_lea.smem %s0, 13
  %s27 = sld [smem:[%s26]]
  %s28 = scalar_lea.smem %s0, 14
  %s29 = sld [smem:[%s28]]
  %s30 = scalar_lea.smem %s0, 15
  %s31 = sld [smem:[%s30]]
  %s32 = scalar_lea.smem %s0, 16
  %s33 = sld [smem:[%s32]]
  %s34 = scalar_lea.smem %s0, 17
  %s35 = sld [smem:[%s34]]
  %s36 = scalar_lea.smem %s0, 18
  %s37 = sld [smem:[%s36]]
  %s38 = scalar_lea.smem %s0, 19
  %s39 = sld [smem:[%s38]]
  %s40 = scalar_lea.smem %s0, 20
  %s41 = sld [smem:[%s40]]
  %s42 = scalar_lea.smem %s0, 21
  %s43 = sld [smem:[%s42]]
  %s44 = scalar_lea.smem %s0, 22
  %s45 = sld [smem:[%s44]]
  %s46 = scalar_lea.smem %s0, 23
  %s47 = sld [smem:[%s46]]
  %s48 = scalar_lea.smem %s0, 24
  %s49 = sld [smem:[%s48]]
  %s50 = scalar_lea.smem %s0, 25
  %s51 = sld [smem:[%s50]]
  %s52 = scalar_lea.smem %s0, 26
  %s53 = sld [smem:[%s52]]
  %s54 = scalar_lea.smem %s0, 27
  %s55 = sld [smem:[%s54]]
  %s56 = scalar_lea.smem %s0, 28
  %s57 = sld [smem:[%s56]]
  %s58 = scalar_lea.smem %s0, 29
  %s59 = sld [smem:[%s58]]
  %s60 = scalar_lea.smem %s0, 30
  %s61 = sld [smem:[%s60]]
  %s62 = scalar_lea.smem %s0, 31
  %s63 = sld [smem:[%s62]]
  %s64 = scalar_lea.smem %s0, 32
  %s65 = sld [smem:[%s64]]
  %s66 = scalar_lea.smem %s0, 33
  %s67 = sld [smem:[%s66]]
  %s68 = scalar_lea.smem %s0, 34
  %s69 = sld [smem:[%s68]]
  %s70 = scalar_lea.smem %s0, 35
  %s71 = sld [smem:[%s70]]
  %s72 = scalar_lea.smem %s0, 36
  %s73 = sld [smem:[%s72]]
  %s74 = scalar_lea.smem %s0, 37
  %s75 = sld [smem:[%s74]]
  %s76 = scalar_lea.smem %s0, 38
  %s77 = sld [smem:[%s76]]
  %s78 = scalar_lea.smem %s0, 39
  %s79 = sld [smem:[%s78]]
  %s80 = scalar_lea.smem %s0, 40
  %s81 = sld [smem:[%s80]]
  %s82 = scalar_lea.smem %s0, 41
  %s83 = sld [smem:[%s82]]
  %s84 = scalar_lea.smem %s0, 42
  %s85 = sld [smem:[%s84]]
  %s86 = scalar_lea.smem %s0, 43
  %s87 = sld [smem:[%s86]]
  %s88 = scalar_lea.smem %s0, 44
  %s89 = sld [smem:[%s88]]
  %90 = xla_tuple %s83, %s85, %s87, %s89
  %s91 = sld [smem:[#allocation0]]
  $region198: #{question_expert_forward.1} parent=0
    _
  %s93 = ssub.s32 1, %s91
  %s94 = scalar_select 0, %s93, %s91
  %v95 = vstv %s37
  %96 = vst [vmem:[#allocation2] sm:$0x1] %v95
  %v97 = vstv %s81
  %98 = vst [vmem:[#allocation3] sm:$0x1] %v97
  $region1: #{question_expert_forward.1} parent=0
    #allocation4 [shape = 'u8[1024]{0}', space=vmem, size = 0x400, scoped, tag = 'output window, operand 0, single buffered']
    #allocation5 [shape = 's32[1]{0}', space=sflag, size = 0x4, scoped, tag = 'scoped memory for question_expert_forward.1']
    #allocation6 [shape = 'u8[32768]{0}', space=vmem, size = 0x8000, scoped, tag = 'output window, operand 1, single buffered']
    #allocation7 [shape = 's32[1]{0}', space=sflag, size = 0x4, scoped, tag = 'scoped memory for question_expert_forward.1']
    #allocation8 [shape = 'u8[1024]{0}', space=vmem, size = 0x400, scoped, tag = 'output window, operand 2, single buffered']
    %99 = vsyncpa [#allocation5], 0
    %100 = vsyncpa [#allocation7], 0
    // Predicated region
    $region2: #{question_expert_forward.1} parent=1 // pred_check
      _
    $region3: #{question_expert_forward.1} parent=1 // pred_check_branch
      %102 = sbr.rel (0) target = $region5
    $region4: #{question_expert_forward.1} parent=1 // pred_region
      _
    $region5: #{question_expert_forward.1} parent=1 // pred_fallthru
      _
    // Predicated region
    $region6: #{question_expert_forward.1} parent=1 // pred_check
      _
    $region7: #{question_expert_forward.1} parent=1 // pred_check_branch
      %104 = sbr.rel (0) target = $region9
    $region8: #{question_expert_forward.1} parent=1 // pred_region
      _
    $region9: #{question_expert_forward.1} parent=1 // pred_fallthru
      _
    // Predicated region
    $region10: #{question_expert_forward.1} parent=1 // pred_check
      _
    $region11: #{question_expert_forward.1} parent=1 // pred_check_branch
      %106 = sbr.rel (0) target = $region13
    $region12: #{question_expert_forward.1} parent=1 // pred_region
      _
    $region13: #{question_expert_forward.1} parent=1 // pred_fallthru
      _
    // Predicated region
    $region14: #{question_expert_forward.1} parent=1 // pred_check
      _
    $region15: #{question_expert_forward.1} parent=1 // pred_check_branch
      %108 = sbr.rel (0) target = $region17
    $region16: #{question_expert_forward.1} parent=1 // pred_region
      _
    $region17: #{question_expert_forward.1} parent=1 // pred_fallthru
      _
    // Predicated region
    $region18: #{question_expert_forward.1} parent=1 // pred_check
      _
    $region19: #{question_expert_forward.1} parent=1 // pred_check_branch
      %110 = sbr.rel (0) target = $region21
    $region20: #{question_expert_forward.1} parent=1 // pred_region
      _
    $region21: #{question_expert_forward.1} parent=1 // pred_fallthru
      _
    // Predicated region
    $region22: #{question_expert_forward.1} parent=1 // pred_check
      _
    $region23: #{question_expert_forward.1} parent=1 // pred_check_branch
      %112 = sbr.rel (0) target = $region25
    $region24: #{question_expert_forward.1} parent=1 // pred_region
      _
    $region25: #{question_expert_forward.1} parent=1 // pred_fallthru
      _
    // Predicated region
    $region26: #{question_expert_forward.1} parent=1 // pred_check
      _
    $region27: #{question_expert_forward.1} parent=1 // pred_check_branch
      %114 = sbr.rel (0) target = $region29
    $region28: #{question_expert_forward.1} parent=1 // pred_region
      _
    $region29: #{question_expert_forward.1} parent=1 // pred_fallthru
      _
    // Predicated region
    $region30: #{question_expert_forward.1} parent=1 // pred_check
      _
    $region31: #{question_expert_forward.1} parent=1 // pred_check_branch
      %116 = sbr.rel (0) target = $region33
    $region32: #{question_expert_forward.1} parent=1 // pred_region
      _
    $region33: #{question_expert_forward.1} parent=1 // pred_fallthru
      _
    // Predicated region
    $region34: #{question_expert_forward.1} parent=1 // pred_check
      _
    $region35: #{question_expert_forward.1} parent=1 // pred_check_branch
      %118 = sbr.rel (0) target = $region37
    $region36: #{question_expert_forward.1} parent=1 // pred_region
      _
    $region37: #{question_expert_forward.1} parent=1 // pred_fallthru
      _
    // Predicated region
    $region38: #{question_expert_forward.1} parent=1 // pred_check
      _
    $region39: #{question_expert_forward.1} parent=1 // pred_check_branch
      %120 = sbr.rel (0) target = $region41
    $region40: #{question_expert_forward.1} parent=1 // pred_region
      _
    $region41: #{question_expert_forward.1} parent=1 // pred_fallthru
      _
    // Predicated region
    $region42: #{question_expert_forward.1} parent=1 // pred_check
      _
    $region43: #{question_expert_forward.1} parent=1 // pred_check_branch
      %122 = sbr.rel (0) target = $region45
    $region44: #{question_expert_forward.1} parent=1 // pred_region
      _
    $region45: #{question_expert_forward.1} parent=1 // pred_fallthru
      _
    // Predicated region
    $region46: #{question_expert_forward.1} parent=1 // pred_check
      _
    $region47: #{question_expert_forward.1} parent=1 // pred_check_branch
      %124 = sbr.rel (0) target = $region49
    $region48: #{question_expert_forward.1} parent=1 // pred_region
      _
    $region49: #{question_expert_forward.1} parent=1 // pred_fallthru
      _
    // Predicated region
    $region50: #{question_expert_forward.1} parent=1 // pred_check
      _
    $region51: #{question_expert_forward.1} parent=1 // pred_check_branch
      %126 = sbr.rel (0) target = $region53
    $region52: #{question_expert_forward.1} parent=1 // pred_region
      _
    $region53: #{question_expert_forward.1} parent=1 // pred_fallthru
      _
    // Predicated region
    $region54: #{question_expert_forward.1} parent=1 // pred_check
      _
    $region55: #{question_expert_forward.1} parent=1 // pred_check_branch
      %128 = sbr.rel (0) target = $region57
    $region56: #{question_expert_forward.1} parent=1 // pred_region
      _
    $region57: #{question_expert_forward.1} parent=1 // pred_fallthru
      _
    // Predicated region
    $region58: #{question_expert_forward.1} parent=1 // pred_check
      _
    $region59: #{question_expert_forward.1} parent=1 // pred_check_branch
      %130 = sbr.rel (0) target = $region61
    $region60: #{question_expert_forward.1} parent=1 // pred_region
      _
    $region61: #{question_expert_forward.1} parent=1 // pred_fallthru
      _
    // Predicated region
    $region62: #{question_expert_forward.1} parent=1 // pred_check
      _
    $region63: #{question_expert_forward.1} parent=1 // pred_check_branch
      %132 = sbr.rel (0) target = $region65
    $region64: #{question_expert_forward.1} parent=1 // pred_region
      _
    $region65: #{question_expert_forward.1} parent=1 // pred_fallthru
      _
    // Predicated region
    $region66: #{question_expert_forward.1} parent=1 // pred_check
      _
    $region67: #{question_expert_forward.1} parent=1 // pred_check_branch
      %134 = sbr.rel (0) target = $region69
    $region68: #{question_expert_forward.1} parent=1 // pred_region
      _
    $region69: #{question_expert_forward.1} parent=1 // pred_fallthru
      _
    // Predicated region
    $region70: #{question_expert_forward.1} parent=1 // pred_check
      _
    $region71: #{question_expert_forward.1} parent=1 // pred_check_branch
      %136 = sbr.rel (0) target = $region73
    $region72: #{question_expert_forward.1} parent=1 // pred_region
      _
    $region73: #{question_expert_forward.1} parent=1 // pred_fallthru
      _
    // Predicated region
    $region74: #{question_expert_forward.1} parent=1 // pred_check
      _
    $region75: #{question_expert_forward.1} parent=1 // pred_check_branch
      %138 = sbr.rel (0) target = $region77
    $region76: #{question_expert_forward.1} parent=1 // pred_region
      _
    $region77: #{question_expert_forward.1} parent=1 // pred_fallthru
      _
    // Predicated region
    $region78: #{question_expert_forward.1} parent=1 // pred_check
      _
    $region79: #{question_expert_forward.1} parent=1 // pred_check_branch
      %140 = sbr.rel (0) target = $region81
    $region80: #{question_expert_forward.1} parent=1 // pred_region
      _
    $region81: #{question_expert_forward.1} parent=1 // pred_fallthru
      _
    // Predicated region
    $region82: #{question_expert_forward.1} parent=1 // pred_check
      _
    $region83: #{question_expert_forward.1} parent=1 // pred_check_branch
      %142 = sbr.rel (0) target = $region85
    $region84: #{question_expert_forward.1} parent=1 // pred_region
      _
    $region85: #{question_expert_forward.1} parent=1 // pred_fallthru
      _
    // Predicated region
    $region86: #{question_expert_forward.1} parent=1 // pred_check
      _
    $region87: #{question_expert_forward.1} parent=1 // pred_check_branch
      %144 = sbr.rel (0) target = $region89
    $region88: #{question_expert_forward.1} parent=1 // pred_region
      _
    $region89: #{question_expert_forward.1} parent=1 // pred_fallthru
      _
    // Predicated region
    $region90: #{question_expert_forward.1} parent=1 // pred_check
      _
    $region91: #{question_expert_forward.1} parent=1 // pred_check_branch
      %146 = sbr.rel (0) target = $region93
    $region92: #{question_expert_forward.1} parent=1 // pred_region
      _
    $region93: #{question_expert_forward.1} parent=1 // pred_fallthru
      _
    // Predicated region
    $region94: #{question_expert_forward.1} parent=1 // pred_check
      _
    $region95: #{question_expert_forward.1} parent=1 // pred_check_branch
      %148 = sbr.rel (0) target = $region97
    $region96: #{question_expert_forward.1} parent=1 // pred_region
      _
    $region97: #{question_expert_forward.1} parent=1 // pred_fallthru
      _
    // Predicated region
    $region98: #{question_expert_forward.1} parent=1 // pred_check
      _
    $region99: #{question_expert_forward.1} parent=1 // pred_check_branch
      %150 = sbr.rel (0) target = $region101
    $region100: #{question_expert_forward.1} parent=1 // pred_region
      _
    $region101: #{question_expert_forward.1} parent=1 // pred_fallthru
      _
    // Predicated region
    $region102: #{question_expert_forward.1} parent=1 // pred_check
      _
    $region103: #{question_expert_forward.1} parent=1 // pred_check_branch
      %152 = sbr.rel (0) target = $region105
    $region104: #{question_expert_forward.1} parent=1 // pred_region
      _
    $region105: #{question_expert_forward.1} parent=1 // pred_fallthru
      _
    // Predicated region
    $region106: #{question_expert_forward.1} parent=1 // pred_check
      _
    $region107: #{question_expert_forward.1} parent=1 // pred_check_branch
      %154 = sbr.rel (0) target = $region109
    $region108: #{question_expert_forward.1} parent=1 // pred_region
      _
    $region109: #{question_expert_forward.1} parent=1 // pred_fallthru
      _
    // Predicated region
    $region110: #{question_expert_forward.1} parent=1 // pred_check
      _
    $region111: #{question_expert_forward.1} parent=1 // pred_check_branch
      %156 = sbr.rel (0) target = $region113
    $region112: #{question_expert_forward.1} parent=1 // pred_region
      _
    $region113: #{question_expert_forward.1} parent=1 // pred_fallthru
      _
    // Predicated region
    $region114: #{question_expert_forward.1} parent=1 // pred_check
      _
    $region115: #{question_expert_forward.1} parent=1 // pred_check_branch
      %158 = sbr.rel (0) target = $region117
    $region116: #{question_expert_forward.1} parent=1 // pred_region
      _
    $region117: #{question_expert_forward.1} parent=1 // pred_fallthru
      _
    // Predicated region
    $region118: #{question_expert_forward.1} parent=1 // pred_check
      _
    $region119: #{question_expert_forward.1} parent=1 // pred_check_branch
      %160 = sbr.rel (0) target = $region121
    $region120: #{question_expert_forward.1} parent=1 // pred_region
      _
    $region121: #{question_expert_forward.1} parent=1 // pred_fallthru
      _
    // Predicated region
    $region122: #{question_expert_forward.1} parent=1 // pred_check
      _
    $region123: #{question_expert_forward.1} parent=1 // pred_check_branch
      %162 = sbr.rel (0) target = $region125
    $region124: #{question_expert_forward.1} parent=1 // pred_region
      _
    $region125: #{question_expert_forward.1} parent=1 // pred_fallthru
      _
    // Predicated region
    $region126: #{question_expert_forward.1} parent=1 // pred_check
      _
    $region127: #{question_expert_forward.1} parent=1 // pred_check_branch
      %164 = sbr.rel (0) target = $region129
    $region128: #{question_expert_forward.1} parent=1 // pred_region
      _
    $region129: #{question_expert_forward.1} parent=1 // pred_fallthru
      _
    // Predicated region
    $region130: #{question_expert_forward.1} parent=1 // pred_check
      _
    $region131: #{question_expert_forward.1} parent=1 // pred_check_branch
      %166 = sbr.rel (0) target = $region133
    $region132: #{question_expert_forward.1} parent=1 // pred_region
      _
    $region133: #{question_expert_forward.1} parent=1 // pred_fallthru
      _
    // Predicated region
    $region134: #{question_expert_forward.1} parent=1 // pred_check
      _
    $region135: #{question_expert_forward.1} parent=1 // pred_check_branch
      %168 = sbr.rel (0) target = $region137
    $region136: #{question_expert_forward.1} parent=1 // pred_region
      _
    $region137: #{question_expert_forward.1} parent=1 // pred_fallthru
      _
    // Predicated region
    $region138: #{question_expert_forward.1} parent=1 // pred_check
      _
    $region139: #{question_expert_forward.1} parent=1 // pred_check_branch
      %170 = sbr.rel (0) target = $region141
    $region140: #{question_expert_forward.1} parent=1 // pred_region
      _
    $region141: #{question_expert_forward.1} parent=1 // pred_fallthru
      _
    // Predicated region
    $region142: #{question_expert_forward.1} parent=1 // pred_check
      _
    $region143: #{question_expert_forward.1} parent=1 // pred_check_branch
      %172 = sbr.rel (0) target = $region145
    $region144: #{question_expert_forward.1} parent=1 // pred_region
      _
    $region145: #{question_expert_forward.1} parent=1 // pred_fallthru
      _
    // Predicated region
    $region146: #{question_expert_forward.1} parent=1 // pred_check
      _
    $region147: #{question_expert_forward.1} parent=1 // pred_check_branch
      %174 = sbr.rel (0) target = $region149
    $region148: #{question_expert_forward.1} parent=1 // pred_region
      _
    $region149: #{question_expert_forward.1} parent=1 // pred_fallthru
      _
    // Predicated region
    $region150: #{question_expert_forward.1} parent=1 // pred_check
      _
    $region151: #{question_expert_forward.1} parent=1 // pred_check_branch
      %176 = sbr.rel (0) target = $region153
    $region152: #{question_expert_forward.1} parent=1 // pred_region
      _
    $region153: #{question_expert_forward.1} parent=1 // pred_fallthru
      _
    // Predicated region
    $region154: #{question_expert_forward.1} parent=1 // pred_check
      _
    $region155: #{question_expert_forward.1} parent=1 // pred_check_branch
      %178 = sbr.rel (0) target = $region157
    $region156: #{question_expert_forward.1} parent=1 // pred_region
      _
    $region157: #{question_expert_forward.1} parent=1 // pred_fallthru
      _
    // Predicated region
    $region158: #{question_expert_forward.1} parent=1 // pred_check
      _
    $region159: #{question_expert_forward.1} parent=1 // pred_check_branch
      %180 = sbr.rel (0) target = $region161
    $region160: #{question_expert_forward.1} parent=1 // pred_region
      _
    $region161: #{question_expert_forward.1} parent=1 // pred_fallthru
      _
    // Predicated region
    $region162: #{question_expert_forward.1} parent=1 // pred_check
      _
    $region163: #{question_expert_forward.1} parent=1 // pred_check_branch
      %182 = sbr.rel (0) target = $region165
    $region164: #{question_expert_forward.1} parent=1 // pred_region
      _
    $region165: #{question_expert_forward.1} parent=1 // pred_fallthru
      _
    %v183 = vld [vmem:[%s1] sm:$0xff]
    %v184 = vld [vmem:[%s1 + $0x8] sm:$0xff]
    %v185 = vld [vmem:[%s3] sm:$0x3]
    %v186 = vsub.f32 1.0, %v185
    %v187 = vmul.f32 %v186, -1e+09
    %v188 = vld [vmem:[%s11] sm:$0xff]
    %v189 = vld [vmem:[%s11 + $0x8] sm:$0xff]
    %v190 = vld [vmem:[%s11 + $0x10] sm:$0xff]
    %v191 = vld [vmem:[%s11 + $0x18] sm:$0xff]
    %v192 = vld [vmem:[%s7] sm:$0xff]
    %v193 = vld [vmem:[%s7 + $0x8] sm:$0xff]
    %v194 = vld [vmem:[%s7 + $0x10] sm:$0xff]
    %v195 = vld [vmem:[%s7 + $0x18] sm:$0xff]
    %v196 = vld [vmem:[%s9] sm:$0x1]
    %v198 = vperm.slane %v196, 0
    %vm200 = vcmask 261120
    %v202 = vsel %vm200, %v183, 0
    %v205 = vsel %vm200, %v184, 0
    %207 = vmatpush.msra.mxu0 0.0
    %208 = vmatpush.msra.mxu0 0.0
    %209 = vmatpush.msra.mxu0 0.0
    %210 = vmatpush.msra.mxu0 0.0
    %211 = vmatpush.msra.mxu0 0.0
    %212 = vmatpush.msra.mxu0 0.0
    %213 = vmatpush.msra.mxu0 0.0
    %214 = vmatpush.msra.mxu0 0.0
    %215 = vmatpush.msra.mxu0 0.0
    %216 = vmatpush.msra.mxu0 0.0
    %217 = vmatpush.msra.mxu0 0.0
    %218 = vmatpush.msra.mxu0 0.0
    %219 = vmatpush.msra.mxu0 %v195
    %220 = vmatpush.msra.mxu0 %v194
    %221 = vmatpush.msra.mxu0 %v193
    %222 = vmatpush.msra.mxu0 %v192
    %223 = vmatmul.f32.gmra.mxu0 %v202
    %v224 = vpop.f32.mrf.mxu0
    %v225 = vadd.f32 %v198, %v224
    %226 = vmatmul.f32.gmra.mxu0 %v205
    %v227 = vpop.f32.mrf.mxu0
    %v228 = vadd.f32 %v198, %v227
    %229 = vdwg.mxu0
    %231 = vrot.lane.b32.xlu0 %v225, 96
    %v232 = vpop.permute.xlu0 %231
    %vm233 = vcmask 64512
    %v234 = vsel %vm233, %v225, 0
    %v236 = vsel %vm233, %v232, 0
    %238 = vmatpush.xpose.msra.mxu0 0.0
    %239 = vmatpush.xpose.msra.mxu0 0.0
    %240 = vmatpush.xpose.msra.mxu0 0.0
    %241 = vmatpush.xpose.msra.mxu0 0.0
    %242 = vmatpush.xpose.msra.mxu0 0.0
    %243 = vmatpush.xpose.msra.mxu0 0.0
    %244 = vmatpush.xpose.msra.mxu0 0.0
    %245 = vmatpush.xpose.msra.mxu0 0.0
    %246 = vmatpush.xpose.msra.mxu0 0.0
    %247 = vmatpush.xpose.msra.mxu0 0.0
    %248 = vmatpush.xpose.msra.mxu0 0.0
    %249 = vmatpush.xpose.msra.mxu0 0.0
    %250 = vmatpush.xpose.msra.mxu0 0.0
    %251 = vmatpush.xpose.msra.mxu0 0.0
    %252 = vmatpush.xpose.msra.mxu0 0.0
    %253 = vmatpush.xpose.msra.mxu0 %v236
    %254 = vmatmul.f32.gmra.mxu0 %v234
    %v255 = vpop.f32.mrf.mxu0
    %v256 = vadd.f32 0.0, %v255
    %257 = vdwg.mxu0
    %v258 = vmul.f32 %v256, 0.35355338
    %v259 = vperm.slane %v187, 0
    %v260 = vadd.f32 %v258, %v259
    %v261 = vsel %vm233, %v260, -inf
    %262 = vmax.xlane.f32.xlu0 %v261
    %v263 = vpop.xlane.xlu0 %262
    %v264 = vsub.f32 %v260, %v263
    %v265 = vmul.f32 %v264, 1.442695
    %v266 = vpow.pop %v265
    %v267 = vsel %vm233, %v266, 0.0
    %268 = vadd.xlane.f32.xlu0 %v267
    %v269 = vpop.xlane.xlu0 %268
    %v270 = vrcp.pop %v269
    %v271 = vmul.f32 %v266, %v270
    %272 = vrot.lane.b32.xlu0 %v225, 64
    %v273 = vpop.permute.xlu0 %272
    %v276 = vsel %vm233, %v271, 0
    %278 = vmatpush.msra.mxu0 0.0
    %279 = vmatpush.msra.mxu0 0.0
    %280 = vmatpush.msra.mxu0 0.0
    %281 = vmatpush.msra.mxu0 0.0
    %282 = vmatpush.msra.mxu0 0.0
    %283 = vmatpush.msra.mxu0 0.0
    %284 = vmatpush.msra.mxu0 0.0
    %285 = vmatpush.msra.mxu0 0.0
    %286 = vmatpush.msra.mxu0 0.0
    %287 = vmatpush.msra.mxu0 0.0
    %288 = vmatpush.msra.mxu0 0.0
    %289 = vmatpush.msra.mxu0 0.0
    %290 = vmatpush.msra.mxu0 0.0
    %291 = vmatpush.msra.mxu0 0.0
    %292 = vmatpush.msra.mxu0 0.0
    %293 = vmatpush.msra.mxu0 %v273
    %294 = vmatmul.f32.gmra.mxu0 %v276
    %v295 = vpop.f32.mrf.mxu0
    %v296 = vadd.f32 0.0, %v295
    %297 = vdwg.mxu0
    %298 = vrot.lane.b32.xlu0 %v225, 120
    %v299 = vpop.permute.xlu0 %298
    %300 = vrot.lane.b32.xlu0 %v225, 88
    %v301 = vpop.permute.xlu0 %300
    %v302 = vsel %vm233, %v299, 0
    %v304 = vsel %vm233, %v301, 0
    %306 = vmatpush.xpose.msra.mxu0 0.0
    %307 = vmatpush.xpose.msra.mxu0 0.0
    %308 = vmatpush.xpose.msra.mxu0 0.0
    %309 = vmatpush.xpose.msra.mxu0 0.0
    %310 = vmatpush.xpose.msra.mxu0 0.0
    %311 = vmatpush.xpose.msra.mxu0 0.0
    %312 = vmatpush.xpose.msra.mxu0 0.0
    %313 = vmatpush.xpose.msra.mxu0 0.0
    %314 = vmatpush.xpose.msra.mxu0 0.0
    %315 = vmatpush.xpose.msra.mxu0 0.0
    %316 = vmatpush.xpose.msra.mxu0 0.0
    %317 = vmatpush.xpose.msra.mxu0 0.0
    %318 = vmatpush.xpose.msra.mxu0 0.0
    %319 = vmatpush.xpose.msra.mxu0 0.0
    %320 = vmatpush.xpose.msra.mxu0 0.0
    %321 = vmatpush.xpose.msra.mxu0 %v304
    %322 = vmatmul.f32.gmra.mxu0 %v302
    %v323 = vpop.f32.mrf.mxu0
    %v324 = vadd.f32 0.0, %v323
    %325 = vdwg.mxu0
    %v326 = vmul.f32 %v324, 0.35355338
    %v327 = vadd.f32 %v326, %v259
    %v328 = vsel %vm233, %v327, -inf
    %329 = vmax.xlane.f32.xlu0 %v328
    %v330 = vpop.xlane.xlu0 %329
    %v331 = vsub.f32 %v327, %v330
    %v332 = vmul.f32 %v331, 1.442695
    %v333 = vpow.pop %v332
    %v334 = vsel %vm233, %v333, 0.0
    %335 = vadd.xlane.f32.xlu0 %v334
    %v336 = vpop.xlane.xlu0 %335
    %v337 = vrcp.pop %v336
    %v338 = vmul.f32 %v333, %v337
    %339 = vrot.lane.b32.xlu0 %v225, 56
    %v340 = vpop.permute.xlu0 %339
    %v343 = vsel %vm233, %v338, 0
    %345 = vmatpush.msra.mxu0 0.0
    %346 = vmatpush.msra.mxu0 0.0
    %347 = vmatpush.msra.mxu0 0.0
    %348 = vmatpush.msra.mxu0 0.0
    %349 = vmatpush.msra.mxu0 0.0
    %350 = vmatpush.msra.mxu0 0.0
    %351 = vmatpush.msra.mxu0 0.0
    %352 = vmatpush.msra.mxu0 0.0
    %353 = vmatpush.msra.mxu0 0.0
    %354 = vmatpush.msra.mxu0 0.0
    %355 = vmatpush.msra.mxu0 0.0
    %356 = vmatpush.msra.mxu0 0.0
    %357 = vmatpush.msra.mxu0 0.0
    %358 = vmatpush.msra.mxu0 0.0
    %359 = vmatpush.msra.mxu0 0.0
    %360 = vmatpush.msra.mxu0 %v340
    %361 = vmatmul.f32.gmra.mxu0 %v343
    %v362 = vpop.f32.mrf.mxu0
    %v363 = vadd.f32 0.0, %v362
    %364 = vdwg.mxu0
    %v366 = vsel %vm233, %v363, 0
    %368 = vmatpush.msra.mxu0 0.0
    %369 = vmatpush.msra.mxu0 0.0
    %370 = vmatpush.msra.mxu0 0.0
    %371 = vmatpush.msra.mxu0 0.0
    %372 = vmatpush.msra.mxu0 0.0
    %373 = vmatpush.msra.mxu0 0.0
    %374 = vmatpush.msra.mxu0 0.0
    %375 = vmatpush.msra.mxu0 0.0
    %376 = vmatpush.msra.mxu0 0.0
    %377 = vmatpush.msra.mxu0 0.0
    %378 = vmatpush.msra.mxu0 0.0
    %379 = vmatpush.msra.mxu0 0.0
    %380 = vmatpush.msra.mxu0 0.0
    %381 = vmatpush.msra.mxu0 0.0
    %382 = vmatpush.msra.mxu0 0.0
    %383 = vmatpush.msra.mxu0 %v189
    %384 = vmatmul.f32.gmra.mxu0 %v366
    %v385 = vpop.f32.mrf.mxu0
    %v386 = vadd.f32 0.0, %v385
    %387 = vdwg.mxu0
    %v389 = vsel %vm233, %v296, 0
    %391 = vmatpush.msra.mxu0 0.0
    %392 = vmatpush.msra.mxu0 0.0
    %393 = vmatpush.msra.mxu0 0.0
    %394 = vmatpush.msra.mxu0 0.0
    %395 = vmatpush.msra.mxu0 0.0
    %396 = vmatpush.msra.mxu0 0.0
    %397 = vmatpush.msra.mxu0 0.0
    %398 = vmatpush.msra.mxu0 0.0
    %399 = vmatpush.msra.mxu0 0.0
    %400 = vmatpush.msra.mxu0 0.0
    %401 = vmatpush.msra.mxu0 0.0
    %402 = vmatpush.msra.mxu0 0.0
    %403 = vmatpush.msra.mxu0 0.0
    %404 = vmatpush.msra.mxu0 0.0
    %405 = vmatpush.msra.mxu0 0.0
    %406 = vmatpush.msra.mxu0 %v188
    %407 = vmatmul.f32.gmra.mxu0 %v389
    %v408 = vpop.f32.mrf.mxu0
    %v409 = vadd.f32 %v386, %v408
    %410 = vdwg.mxu0
    %411 = vrot.lane.b32.xlu0 %v225, 112
    %v412 = vpop.permute.xlu0 %411
    %413 = vrot.lane.b32.xlu0 %v225, 80
    %v414 = vpop.permute.xlu0 %413
    %v415 = vsel %vm233, %v412, 0
    %v417 = vsel %vm233, %v414, 0
    %419 = vmatpush.xpose.msra.mxu0 0.0
    %420 = vmatpush.xpose.msra.mxu0 0.0
    %421 = vmatpush.xpose.msra.mxu0 0.0
    %422 = vmatpush.xpose.msra.mxu0 0.0
    %423 = vmatpush.xpose.msra.mxu0 0.0
    %424 = vmatpush.xpose.msra.mxu0 0.0
    %425 = vmatpush.xpose.msra.mxu0 0.0
    %426 = vmatpush.xpose.msra.mxu0 0.0
    %427 = vmatpush.xpose.msra.mxu0 0.0
    %428 = vmatpush.xpose.msra.mxu0 0.0
    %429 = vmatpush.xpose.msra.mxu0 0.0
    %430 = vmatpush.xpose.msra.mxu0 0.0
    %431 = vmatpush.xpose.msra.mxu0 0.0
    %432 = vmatpush.xpose.msra.mxu0 0.0
    %433 = vmatpush.xpose.msra.mxu0 0.0
    %434 = vmatpush.xpose.msra.mxu0 %v417
    %435 = vmatmul.f32.gmra.mxu0 %v415
    %v436 = vpop.f32.mrf.mxu0
    %v437 = vadd.f32 0.0, %v436
    %438 = vdwg.mxu0
    %v439 = vmul.f32 %v437, 0.35355338
    %v440 = vadd.f32 %v439, %v259
    %v441 = vsel %vm233, %v440, -inf
    %442 = vmax.xlane.f32.xlu0 %v441
    %v443 = vpop.xlane.xlu0 %442
    %v444 = vsub.f32 %v440, %v443
    %v445 = vmul.f32 %v444, 1.442695
    %v446 = vpow.pop %v445
    %v447 = vsel %vm233, %v446, 0.0
    %448 = vadd.xlane.f32.xlu0 %v447
    %v449 = vpop.xlane.xlu0 %448
    %v450 = vrcp.pop %v449
    %v451 = vmul.f32 %v446, %v450
    %452 = vrot.lane.b32.xlu0 %v225, 48
    %v453 = vpop.permute.xlu0 %452
    %v456 = vsel %vm233, %v451, 0
    %458 = vmatpush.msra.mxu0 0.0
    %459 = vmatpush.msra.mxu0 0.0
    %460 = vmatpush.msra.mxu0 0.0
    %461 = vmatpush.msra.mxu0 0.0
    %462 = vmatpush.msra.mxu0 0.0
    %463 = vmatpush.msra.mxu0 0.0
    %464 = vmatpush.msra.mxu0 0.0
    %465 = vmatpush.msra.mxu0 0.0
    %466 = vmatpush.msra.mxu0 0.0
    %467 = vmatpush.msra.mxu0 0.0
    %468 = vmatpush.msra.mxu0 0.0
    %469 = vmatpush.msra.mxu0 0.0
    %470 = vmatpush.msra.mxu0 0.0
    %471 = vmatpush.msra.mxu0 0.0
    %472 = vmatpush.msra.mxu0 0.0
    %473 = vmatpush.msra.mxu0 %v453
    %474 = vmatmul.f32.gmra.mxu0 %v456
    %v475 = vpop.f32.mrf.mxu0
    %v476 = vadd.f32 0.0, %v475
    %477 = vdwg.mxu0
    %v479 = vsel %vm233, %v476, 0
    %481 = vmatpush.msra.mxu0 0.0
    %482 = vmatpush.msra.mxu0 0.0
    %483 = vmatpush.msra.mxu0 0.0
    %484 = vmatpush.msra.mxu0 0.0
    %485 = vmatpush.msra.mxu0 0.0
    %486 = vmatpush.msra.mxu0 0.0
    %487 = vmatpush.msra.mxu0 0.0
    %488 = vmatpush.msra.mxu0 0.0
    %489 = vmatpush.msra.mxu0 0.0
    %490 = vmatpush.msra.mxu0 0.0
    %491 = vmatpush.msra.mxu0 0.0
    %492 = vmatpush.msra.mxu0 0.0
    %493 = vmatpush.msra.mxu0 0.0
    %494 = vmatpush.msra.mxu0 0.0
    %495 = vmatpush.msra.mxu0 0.0
    %496 = vmatpush.msra.mxu0 %v190
    %497 = vmatmul.f32.gmra.mxu0 %v479
    %v498 = vpop.f32.mrf.mxu0
    %v499 = vadd.f32 0.0, %v498
    %500 = vdwg.mxu0
    %v501 = vadd.f32 %v409, %v499
    %502 = vrot.lane.b32.xlu0 %v225, 104
    %v503 = vpop.permute.xlu0 %502
    %504 = vrot.lane.b32.xlu0 %v225, 72
    %v505 = vpop.permute.xlu0 %504
    %v506 = vsel %vm233, %v503, 0
    %v508 = vsel %vm233, %v505, 0
    %510 = vmatpush.xpose.msra.mxu0 0.0
    %511 = vmatpush.xpose.msra.mxu0 0.0
    %512 = vmatpush.xpose.msra.mxu0 0.0
    %513 = vmatpush.xpose.msra.mxu0 0.0
    %514 = vmatpush.xpose.msra.mxu0 0.0
    %515 = vmatpush.xpose.msra.mxu0 0.0
    %516 = vmatpush.xpose.msra.mxu0 0.0
    %517 = vmatpush.xpose.msra.mxu0 0.0
    %518 = vmatpush.xpose.msra.mxu0 0.0
    %519 = vmatpush.xpose.msra.mxu0 0.0
    %520 = vmatpush.xpose.msra.mxu0 0.0
    %521 = vmatpush.xpose.msra.mxu0 0.0
    %522 = vmatpush.xpose.msra.mxu0 0.0
    %523 = vmatpush.xpose.msra.mxu0 0.0
    %524 = vmatpush.xpose.msra.mxu0 0.0
    %525 = vmatpush.xpose.msra.mxu0 %v508
    %526 = vmatmul.f32.gmra.mxu0 %v506
    %v527 = vpop.f32.mrf.mxu0
    %v528 = vadd.f32 0.0, %v527
    %529 = vdwg.mxu0
    %v530 = vmul.f32 %v528, 0.35355338
    %v531 = vadd.f32 %v530, %v259
    %v532 = vsel %vm233, %v531, -inf
    %533 = vmax.xlane.f32.xlu0 %v532
    %v534 = vpop.xlane.xlu0 %533
    %v535 = vsub.f32 %v531, %v534
    %v536 = vmul.f32 %v535, 1.442695
    %v537 = vpow.pop %v536
    %v538 = vsel %vm233, %v537, 0.0
    %539 = vadd.xlane.f32.xlu0 %v538
    %v540 = vpop.xlane.xlu0 %539
    %v541 = vrcp.pop %v540
    %v542 = vmul.f32 %v537, %v541
    %543 = vrot.lane.b32.xlu0 %v225, 40
    %v544 = vpop.permute.xlu0 %543
    %v547 = vsel %vm233, %v542, 0
    %549 = vmatpush.msra.mxu0 0.0
    %550 = vmatpush.msra.mxu0 0.0
    %551 = vmatpush.msra.mxu0 0.0
    %552 = vmatpush.msra.mxu0 0.0
    %553 = vmatpush.msra.mxu0 0.0
    %554 = vmatpush.msra.mxu0 0.0
    %555 = vmatpush.msra.mxu0 0.0
    %556 = vmatpush.msra.mxu0 0.0
    %557 = vmatpush.msra.mxu0 0.0
    %558 = vmatpush.msra.mxu0 0.0
    %559 = vmatpush.msra.mxu0 0.0
    %560 = vmatpush.msra.mxu0 0.0
    %561 = vmatpush.msra.mxu0 0.0
    %562 = vmatpush.msra.mxu0 0.0
    %563 = vmatpush.msra.mxu0 0.0
    %564 = vmatpush.msra.mxu0 %v544
    %565 = vmatmul.f32.gmra.mxu0 %v547
    %v566 = vpop.f32.mrf.mxu0
    %v567 = vadd.f32 0.0, %v566
    %568 = vdwg.mxu0
    %v570 = vsel %vm233, %v567, 0
    %572 = vmatpush.msra.mxu0 0.0
    %573 = vmatpush.msra.mxu0 0.0
    %574 = vmatpush.msra.mxu0 0.0
    %575 = vmatpush.msra.mxu0 0.0
    %576 = vmatpush.msra.mxu0 0.0
    %577 = vmatpush.msra.mxu0 0.0
    %578 = vmatpush.msra.mxu0 0.0
    %579 = vmatpush.msra.mxu0 0.0
    %580 = vmatpush.msra.mxu0 0.0
    %581 = vmatpush.msra.mxu0 0.0
    %582 = vmatpush.msra.mxu0 0.0
    %583 = vmatpush.msra.mxu0 0.0
    %584 = vmatpush.msra.mxu0 0.0
    %585 = vmatpush.msra.mxu0 0.0
    %586 = vmatpush.msra.mxu0 0.0
    %587 = vmatpush.msra.mxu0 %v191
    %588 = vmatmul.f32.gmra.mxu0 %v570
    %v589 = vpop.f32.mrf.mxu0
    %v590 = vadd.f32 0.0, %v589
    %591 = vdwg.mxu0
    %v592 = vadd.f32 %v501, %v590
    %594 = vrot.lane.b32.xlu0 %v228, 96
    %v595 = vpop.permute.xlu0 %594
    %v596 = vsel %vm233, %v228, 0
    %v598 = vsel %vm233, %v595, 0
    %600 = vmatpush.xpose.msra.mxu0 0.0
    %601 = vmatpush.xpose.msra.mxu0 0.0
    %602 = vmatpush.xpose.msra.mxu0 0.0
    %603 = vmatpush.xpose.msra.mxu0 0.0
    %604 = vmatpush.xpose.msra.mxu0 0.0
    %605 = vmatpush.xpose.msra.mxu0 0.0
    %606 = vmatpush.xpose.msra.mxu0 0.0
    %607 = vmatpush.xpose.msra.mxu0 0.0
    %608 = vmatpush.xpose.msra.mxu0 0.0
    %609 = vmatpush.xpose.msra.mxu0 0.0
    %610 = vmatpush.xpose.msra.mxu0 0.0
    %611 = vmatpush.xpose.msra.mxu0 0.0
    %612 = vmatpush.xpose.msra.mxu0 0.0
    %613 = vmatpush.xpose.msra.mxu0 0.0
    %614 = vmatpush.xpose.msra.mxu0 0.0
    %615 = vmatpush.xpose.msra.mxu0 %v598
    %616 = vmatmul.f32.gmra.mxu0 %v596
    %v617 = vpop.f32.mrf.mxu0
    %v618 = vadd.f32 0.0, %v617
    %619 = vdwg.mxu0
    %v620 = vmul.f32 %v618, 0.35355338
    %v621 = vperm.slane %v187, 1
    %v622 = vadd.f32 %v620, %v621
    %v623 = vsel %vm233, %v622, -inf
    %624 = vmax.xlane.f32.xlu0 %v623
    %v625 = vpop.xlane.xlu0 %624
    %v626 = vsub.f32 %v622, %v625
    %v627 = vmul.f32 %v626, 1.442695
    %v628 = vpow.pop %v627
    %v629 = vsel %vm233, %v628, 0.0
    %630 = vadd.xlane.f32.xlu0 %v629
    %v631 = vpop.xlane.xlu0 %630
    %v632 = vrcp.pop %v631
    %v633 = vmul.f32 %v628, %v632
    %634 = vrot.lane.b32.xlu0 %v228, 64
    %v635 = vpop.permute.xlu0 %634
    %v638 = vsel %vm233, %v633, 0
    %640 = vmatpush.msra.mxu0 0.0
    %641 = vmatpush.msra.mxu0 0.0
    %642 = vmatpush.msra.mxu0 0.0
    %643 = vmatpush.msra.mxu0 0.0
    %644 = vmatpush.msra.mxu0 0.0
    %645 = vmatpush.msra.mxu0 0.0
    %646 = vmatpush.msra.mxu0 0.0
    %647 = vmatpush.msra.mxu0 0.0
    %648 = vmatpush.msra.mxu0 0.0
    %649 = vmatpush.msra.mxu0 0.0
    %650 = vmatpush.msra.mxu0 0.0
    %651 = vmatpush.msra.mxu0 0.0
    %652 = vmatpush.msra.mxu0 0.0
    %653 = vmatpush.msra.mxu0 0.0
    %654 = vmatpush.msra.mxu0 0.0
    %655 = vmatpush.msra.mxu0 %v635
    %656 = vmatmul.f32.gmra.mxu0 %v638
    %v657 = vpop.f32.mrf.mxu0
    %v658 = vadd.f32 0.0, %v657
    %659 = vdwg.mxu0
    %660 = vrot.lane.b32.xlu0 %v228, 120
    %v661 = vpop.permute.xlu0 %660
    %662 = vrot.lane.b32.xlu0 %v228, 88
    %v663 = vpop.permute.xlu0 %662
    %v664 = vsel %vm233, %v661, 0
    %v666 = vsel %vm233, %v663, 0
    %668 = vmatpush.xpose.msra.mxu0 0.0
    %669 = vmatpush.xpose.msra.mxu0 0.0
    %670 = vmatpush.xpose.msra.mxu0 0.0
    %671 = vmatpush.xpose.msra.mxu0 0.0
    %672 = vmatpush.xpose.msra.mxu0 0.0
    %673 = vmatpush.xpose.msra.mxu0 0.0
    %674 = vmatpush.xpose.msra.mxu0 0.0
    %675 = vmatpush.xpose.msra.mxu0 0.0
    %676 = vmatpush.xpose.msra.mxu0 0.0
    %677 = vmatpush.xpose.msra.mxu0 0.0
    %678 = vmatpush.xpose.msra.mxu0 0.0
    %679 = vmatpush.xpose.msra.mxu0 0.0
    %680 = vmatpush.xpose.msra.mxu0 0.0
    %681 = vmatpush.xpose.msra.mxu0 0.0
    %682 = vmatpush.xpose.msra.mxu0 0.0
    %683 = vmatpush.xpose.msra.mxu0 %v666
    %684 = vmatmul.f32.gmra.mxu0 %v664
    %v685 = vpop.f32.mrf.mxu0
    %v686 = vadd.f32 0.0, %v685
    %687 = vdwg.mxu0
    %v688 = vmul.f32 %v686, 0.35355338
    %v689 = vadd.f32 %v688, %v621
    %v690 = vsel %vm233, %v689, -inf
    %691 = vmax.xlane.f32.xlu0 %v690
    %v692 = vpop.xlane.xlu0 %691
    %v693 = vsub.f32 %v689, %v692
    %v694 = vmul.f32 %v693, 1.442695
    %v695 = vpow.pop %v694
    %v696 = vsel %vm233, %v695, 0.0
    %697 = vadd.xlane.f32.xlu0 %v696
    %v698 = vpop.xlane.xlu0 %697
    %v699 = vrcp.pop %v698
    %v700 = vmul.f32 %v695, %v699
    %701 = vrot.lane.b32.xlu0 %v228, 56
    %v702 = vpop.permute.xlu0 %701
    %v705 = vsel %vm233, %v700, 0
    %707 = vmatpush.msra.mxu0 0.0
    %708 = vmatpush.msra.mxu0 0.0
    %709 = vmatpush.msra.mxu0 0.0
    %710 = vmatpush.msra.mxu0 0.0
    %711 = vmatpush.msra.mxu0 0.0
    %712 = vmatpush.msra.mxu0 0.0
    %713 = vmatpush.msra.mxu0 0.0
    %714 = vmatpush.msra.mxu0 0.0
    %715 = vmatpush.msra.mxu0 0.0
    %716 = vmatpush.msra.mxu0 0.0
    %717 = vmatpush.msra.mxu0 0.0
    %718 = vmatpush.msra.mxu0 0.0
    %719 = vmatpush.msra.mxu0 0.0
    %720 = vmatpush.msra.mxu0 0.0
    %721 = vmatpush.msra.mxu0 0.0
    %722 = vmatpush.msra.mxu0 %v702
    %723 = vmatmul.f32.gmra.mxu0 %v705
    %v724 = vpop.f32.mrf.mxu0
    %v725 = vadd.f32 0.0, %v724
    %726 = vdwg.mxu0
    %v728 = vsel %vm233, %v725, 0
    %730 = vmatpush.msra.mxu0 0.0
    %731 = vmatpush.msra.mxu0 0.0
    %732 = vmatpush.msra.mxu0 0.0
    %733 = vmatpush.msra.mxu0 0.0
    %734 = vmatpush.msra.mxu0 0.0
    %735 = vmatpush.msra.mxu0 0.0
    %736 = vmatpush.msra.mxu0 0.0
    %737 = vmatpush.msra.mxu0 0.0
    %738 = vmatpush.msra.mxu0 0.0
    %739 = vmatpush.msra.mxu0 0.0
    %740 = vmatpush.msra.mxu0 0.0
    %741 = vmatpush.msra.mxu0 0.0
    %742 = vmatpush.msra.mxu0 0.0
    %743 = vmatpush.msra.mxu0 0.0
    %744 = vmatpush.msra.mxu0 0.0
    %745 = vmatpush.msra.mxu0 %v189
    %746 = vmatmul.f32.gmra.mxu0 %v728
    %v747 = vpop.f32.mrf.mxu0
    %v748 = vadd.f32 0.0, %v747
    %749 = vdwg.mxu0
    %v751 = vsel %vm233, %v658, 0
    %753 = vmatpush.msra.mxu0 0.0
    %754 = vmatpush.msra.mxu0 0.0
    %755 = vmatpush.msra.mxu0 0.0
    %756 = vmatpush.msra.mxu0 0.0
    %757 = vmatpush.msra.mxu0 0.0
    %758 = vmatpush.msra.mxu0 0.0
    %759 = vmatpush.msra.mxu0 0.0
    %760 = vmatpush.msra.mxu0 0.0
    %761 = vmatpush.msra.mxu0 0.0
    %762 = vmatpush.msra.mxu0 0.0
    %763 = vmatpush.msra.mxu0 0.0
    %764 = vmatpush.msra.mxu0 0.0
    %765 = vmatpush.msra.mxu0 0.0
    %766 = vmatpush.msra.mxu0 0.0
    %767 = vmatpush.msra.mxu0 0.0
    %768 = vmatpush.msra.mxu0 %v188
    %769 = vmatmul.f32.gmra.mxu0 %v751
    %v770 = vpop.f32.mrf.mxu0
    %v771 = vadd.f32 %v748, %v770
    %772 = vdwg.mxu0
    %773 = vrot.lane.b32.xlu0 %v228, 112
    %v774 = vpop.permute.xlu0 %773
    %775 = vrot.lane.b32.xlu0 %v228, 80
    %v776 = vpop.permute.xlu0 %775
    %v777 = vsel %vm233, %v774, 0
    %v779 = vsel %vm233, %v776, 0
    %781 = vmatpush.xpose.msra.mxu0 0.0
    %782 = vmatpush.xpose.msra.mxu0 0.0
    %783 = vmatpush.xpose.msra.mxu0 0.0
    %784 = vmatpush.xpose.msra.mxu0 0.0
    %785 = vmatpush.xpose.msra.mxu0 0.0
    %786 = vmatpush.xpose.msra.mxu0 0.0
    %787 = vmatpush.xpose.msra.mxu0 0.0
    %788 = vmatpush.xpose.msra.mxu0 0.0
    %789 = vmatpush.xpose.msra.mxu0 0.0
    %790 = vmatpush.xpose.msra.mxu0 0.0
    %791 = vmatpush.xpose.msra.mxu0 0.0
    %792 = vmatpush.xpose.msra.mxu0 0.0
    %793 = vmatpush.xpose.msra.mxu0 0.0
    %794 = vmatpush.xpose.msra.mxu0 0.0
    %795 = vmatpush.xpose.msra.mxu0 0.0
    %796 = vmatpush.xpose.msra.mxu0 %v779
    %797 = vmatmul.f32.gmra.mxu0 %v777
    %v798 = vpop.f32.mrf.mxu0
    %v799 = vadd.f32 0.0, %v798
    %800 = vdwg.mxu0
    %v801 = vmul.f32 %v799, 0.35355338
    %v802 = vadd.f32 %v801, %v621
    %v803 = vsel %vm233, %v802, -inf
    %804 = vmax.xlane.f32.xlu0 %v803
    %v805 = vpop.xlane.xlu0 %804
    %v806 = vsub.f32 %v802, %v805
    %v807 = vmul.f32 %v806, 1.442695
    %v808 = vpow.pop %v807
    %v809 = vsel %vm233, %v808, 0.0
    %810 = vadd.xlane.f32.xlu0 %v809
    %v811 = vpop.xlane.xlu0 %810
    %v812 = vrcp.pop %v811
    %v813 = vmul.f32 %v808, %v812
    %814 = vrot.lane.b32.xlu0 %v228, 48
    %v815 = vpop.permute.xlu0 %814
    %v818 = vsel %vm233, %v813, 0
    %820 = vmatpush.msra.mxu0 0.0
    %821 = vmatpush.msra.mxu0 0.0
    %822 = vmatpush.msra.mxu0 0.0
    %823 = vmatpush.msra.mxu0 0.0
    %824 = vmatpush.msra.mxu0 0.0
    %825 = vmatpush.msra.mxu0 0.0
    %826 = vmatpush.msra.mxu0 0.0
    %827 = vmatpush.msra.mxu0 0.0
    %828 = vmatpush.msra.mxu0 0.0
    %829 = vmatpush.msra.mxu0 0.0
    %830 = vmatpush.msra.mxu0 0.0
    %831 = vmatpush.msra.mxu0 0.0
    %832 = vmatpush.msra.mxu0 0.0
    %833 = vmatpush.msra.mxu0 0.0
    %834 = vmatpush.msra.mxu0 0.0
    %835 = vmatpush.msra.mxu0 %v815
    %836 = vmatmul.f32.gmra.mxu0 %v818
    %v837 = vpop.f32.mrf.mxu0
    %v838 = vadd.f32 0.0, %v837
    %839 = vdwg.mxu0
    %v841 = vsel %vm233, %v838, 0
    %843 = vmatpush.msra.mxu0 0.0
    %844 = vmatpush.msra.mxu0 0.0
    %845 = vmatpush.msra.mxu0 0.0
    %846 = vmatpush.msra.mxu0 0.0
    %847 = vmatpush.msra.mxu0 0.0
    %848 = vmatpush.msra.mxu0 0.0
    %849 = vmatpush.msra.mxu0 0.0
    %850 = vmatpush.msra.mxu0 0.0
    %851 = vmatpush.msra.mxu0 0.0
    %852 = vmatpush.msra.mxu0 0.0
    %853 = vmatpush.msra.mxu0 0.0
    %854 = vmatpush.msra.mxu0 0.0
    %855 = vmatpush.msra.mxu0 0.0
    %856 = vmatpush.msra.mxu0 0.0
    %857 = vmatpush.msra.mxu0 0.0
    %858 = vmatpush.msra.mxu0 %v190
    %859 = vmatmul.f32.gmra.mxu0 %v841
    %v860 = vpop.f32.mrf.mxu0
    %v861 = vadd.f32 0.0, %v860
    %862 = vdwg.mxu0
    %v863 = vadd.f32 %v771, %v861
    %864 = vrot.lane.b32.xlu0 %v228, 104
    %v865 = vpop.permute.xlu0 %864
    %866 = vrot.lane.b32.xlu0 %v228, 72
    %v867 = vpop.permute.xlu0 %866
    %v868 = vsel %vm233, %v865, 0
    %v870 = vsel %vm233, %v867, 0
    %872 = vmatpush.xpose.msra.mxu0 0.0
    %873 = vmatpush.xpose.msra.mxu0 0.0
    %874 = vmatpush.xpose.msra.mxu0 0.0
    %875 = vmatpush.xpose.msra.mxu0 0.0
    %876 = vmatpush.xpose.msra.mxu0 0.0
    %877 = vmatpush.xpose.msra.mxu0 0.0
    %878 = vmatpush.xpose.msra.mxu0 0.0
    %879 = vmatpush.xpose.msra.mxu0 0.0
    %880 = vmatpush.xpose.msra.mxu0 0.0
    %881 = vmatpush.xpose.msra.mxu0 0.0
    %882 = vmatpush.xpose.msra.mxu0 0.0
    %883 = vmatpush.xpose.msra.mxu0 0.0
    %884 = vmatpush.xpose.msra.mxu0 0.0
    %885 = vmatpush.xpose.msra.mxu0 0.0
    %886 = vmatpush.xpose.msra.mxu0 0.0
    %887 = vmatpush.xpose.msra.mxu0 %v870
    %888 = vmatmul.f32.gmra.mxu0 %v868
    %v889 = vpop.f32.mrf.mxu0
    %v890 = vadd.f32 0.0, %v889
    %891 = vdwg.mxu0
    %v892 = vmul.f32 %v890, 0.35355338
    %v893 = vadd.f32 %v892, %v621
    %v894 = vsel %vm233, %v893, -inf
    %895 = vmax.xlane.f32.xlu0 %v894
    %v896 = vpop.xlane.xlu0 %895
    %v897 = vsub.f32 %v893, %v896
    %v898 = vmul.f32 %v897, 1.442695
    %v899 = vpow.pop %v898
    %v900 = vsel %vm233, %v899, 0.0
    %901 = vadd.xlane.f32.xlu0 %v900
    %v902 = vpop.xlane.xlu0 %901
    %v903 = vrcp.pop %v902
    %v904 = vmul.f32 %v899, %v903
    %905 = vrot.lane.b32.xlu0 %v228, 40
    %v906 = vpop.permute.xlu0 %905
    %v909 = vsel %vm233, %v904, 0
    %911 = vmatpush.msra.mxu0 0.0
    %912 = vmatpush.msra.mxu0 0.0
    %913 = vmatpush.msra.mxu0 0.0
    %914 = vmatpush.msra.mxu0 0.0
    %915 = vmatpush.msra.mxu0 0.0
    %916 = vmatpush.msra.mxu0 0.0
    %917 = vmatpush.msra.mxu0 0.0
    %918 = vmatpush.msra.mxu0 0.0
    %919 = vmatpush.msra.mxu0 0.0
    %920 = vmatpush.msra.mxu0 0.0
    %921 = vmatpush.msra.mxu0 0.0
    %922 = vmatpush.msra.mxu0 0.0
    %923 = vmatpush.msra.mxu0 0.0
    %924 = vmatpush.msra.mxu0 0.0
    %925 = vmatpush.msra.mxu0 0.0
    %926 = vmatpush.msra.mxu0 %v906
    %927 = vmatmul.f32.gmra.mxu0 %v909
    %v928 = vpop.f32.mrf.mxu0
    %v929 = vadd.f32 0.0, %v928
    %930 = vdwg.mxu0
    %v932 = vsel %vm233, %v929, 0
    %934 = vmatpush.msra.mxu0 0.0
    %935 = vmatpush.msra.mxu0 0.0
    %936 = vmatpush.msra.mxu0 0.0
    %937 = vmatpush.msra.mxu0 0.0
    %938 = vmatpush.msra.mxu0 0.0
    %939 = vmatpush.msra.mxu0 0.0
    %940 = vmatpush.msra.mxu0 0.0
    %941 = vmatpush.msra.mxu0 0.0
    %942 = vmatpush.msra.mxu0 0.0
    %943 = vmatpush.msra.mxu0 0.0
    %944 = vmatpush.msra.mxu0 0.0
    %945 = vmatpush.msra.mxu0 0.0
    %946 = vmatpush.msra.mxu0 0.0
    %947 = vmatpush.msra.mxu0 0.0
    %948 = vmatpush.msra.mxu0 0.0
    %949 = vmatpush.msra.mxu0 %v191
    %950 = vmatmul.f32.gmra.mxu0 %v932
    %v951 = vpop.f32.mrf.mxu0
    %v952 = vadd.f32 0.0, %v951
    %953 = vdwg.mxu0
    %v954 = vadd.f32 %v863, %v952
    %v955 = vld [vmem:[%s13] sm:$0x1]
    %v957 = vperm.slane %v955, 0
    %v959 = vadd.f32 %v592, %v957
    %v960 = vadd.f32 %v954, %v957
    %v961 = vadd.f32 %v183, %v959
    %v962 = vadd.f32 %v184, %v960
    %v963 = vld [vmem:[%s15] sm:$0x1]
    %v964 = vld [vmem:[%s17] sm:$0x1]
    %v965 = vsel %vm200, %v961, 0.0
    %966 = vadd.xlane.f32.xlu0 %v965
    %v967 = vpop.xlane.xlu0 %966
    %v968 = vsel %vm200, %v962, 0.0
    %969 = vadd.xlane.f32.xlu0 %v968
    %v970 = vpop.xlane.xlu0 %969
    %v971 = vrcp.pop 32.0
    %v972 = vmul.f32 32.0, %v971
    %v973 = vsub.f32 1.0, %v972
    %v974 = vmul.f32 %v971, %v973
    %v975 = vadd.f32 %v971, %v974
    %vm976 = vweird.f32 %v971
    %v977 = vsel %vm976, %v971, %v975
    %v978 = vmul.f32 %v967, %v977
    %v979 = vmul.f32 %v970, %v977
    %v980 = vsub.f32 %v961, %v978
    %v981 = vsub.f32 %v962, %v979
    %v982 = vmul.f32 %v980, %v980
    %v983 = vmul.f32 %v981, %v981
    %v984 = vsel %vm200, %v982, 0.0
    %985 = vadd.xlane.f32.xlu0 %v984
    %v986 = vpop.xlane.xlu0 %985
    %v987 = vsel %vm200, %v983, 0.0
    %988 = vadd.xlane.f32.xlu0 %v987
    %v989 = vpop.xlane.xlu0 %988
    %v990 = vmul.f32 %v986, %v977
    %v991 = vmul.f32 %v989, %v977
    %v992 = vadd.f32 %v990, 1e-05
    %v993 = vadd.f32 %v991, 1e-05
    %v994 = vrsqrt.pop %v992
    %v995 = vmul.f32 %v994, %v992
    %v996 = vmul.f32 %v995, %v994
    %v997 = vmul.f32 0.5, %v996
    %v998 = vsub.f32 1.5, %v997
    %v999 = vmul.f32 %v994, %v998
    %vm1000 = vweird.f32 %v992
    %vm1001 = vweird.f32 %v994
    %vm1002 = vmor %vm1000, %vm1001
    %v1003 = vsel %vm1002, %v994, %v999
    %v1004 = vrsqrt.pop %v993
    %v1005 = vmul.f32 %v1004, %v993
    %v1006 = vmul.f32 %v1005, %v1004
    %v1007 = vmul.f32 0.5, %v1006
    %v1008 = vsub.f32 1.5, %v1007
    %v1009 = vmul.f32 %v1004, %v1008
    %vm1010 = vweird.f32 %v993
    %vm1011 = vweird.f32 %v1004
    %vm1012 = vmor %vm1010, %vm1011
    %v1013 = vsel %vm1012, %v1004, %v1009
    %v1014 = vmul.f32 %v980, %v1003
    %v1015 = vmul.f32 %v981, %v1013
    %v1017 = vperm.slane %v963, 0
    %v1019 = vmul.f32 %v1014, %v1017
    %v1020 = vmul.f32 %v1015, %v1017
    %v1022 = vperm.slane %v964, 0
    %v1024 = vadd.f32 %v1019, %v1022
    %v1025 = vadd.f32 %v1020, %v1022
    %v1026 = vld [vmem:[%s19] sm:$0xff]
    %v1027 = vld [vmem:[%s19 + $0x8] sm:$0xff]
    %v1028 = vld [vmem:[%s19 + $0x10] sm:$0xff]
    %v1029 = vld [vmem:[%s19 + $0x18] sm:$0xff]
    %v1030 = vld [vmem:[%s21] sm:$0x1]
    %v1032 = vperm.slane %v1030, 0
    %v1035 = vsel %vm200, %v1024, 0
    %v1038 = vsel %vm200, %v1025, 0
    %1040 = vmatpush.msra.mxu0 0.0
    %1041 = vmatpush.msra.mxu0 0.0
    %1042 = vmatpush.msra.mxu0 0.0
    %1043 = vmatpush.msra.mxu0 0.0
    %1044 = vmatpush.msra.mxu0 0.0
    %1045 = vmatpush.msra.mxu0 0.0
    %1046 = vmatpush.msra.mxu0 0.0
    %1047 = vmatpush.msra.mxu0 0.0
    %1048 = vmatpush.msra.mxu0 0.0
    %1049 = vmatpush.msra.mxu0 0.0
    %1050 = vmatpush.msra.mxu0 0.0
    %1051 = vmatpush.msra.mxu0 0.0
    %1052 = vmatpush.msra.mxu0 %v1029
    %1053 = vmatpush.msra.mxu0 %v1028
    %1054 = vmatpush.msra.mxu0 %v1027
    %1055 = vmatpush.msra.mxu0 %v1026
    %1056 = vmatmul.f32.gmra.mxu0 %v1035
    %v1057 = vpop.f32.mrf.mxu0
    %v1058 = vadd.f32 %v1032, %v1057
    %1059 = vmatmul.f32.gmra.mxu0 %v1038
    %v1060 = vpop.f32.mrf.mxu0
    %v1061 = vadd.f32 %v1032, %v1060
    %1062 = vdwg.mxu0
    %v1063 = vmul.f32 %v1058, 0.5
    %v1064 = vmul.f32 %v1061, 0.5
    %v1065 = vmul.f32 %v1058, 0.044715
    %v1066 = vmul.f32 %v1061, 0.044715
    %v1067 = vmul.f32 %v1065, %v1058
    %v1068 = vmul.f32 %v1066, %v1061
    %v1069 = vmul.f32 %v1067, %v1058
    %v1070 = vmul.f32 %v1068, %v1061
    %v1071 = vadd.f32 %v1058, %v1069
    %v1072 = vadd.f32 %v1061, %v1070
    %v1073 = vmul.f32 %v1071, 0.7978846
    %v1074 = vmul.f32 %v1072, 0.7978846
    %v1075 = vtanh.pop %v1073
    %v1076 = vtanh.pop %v1074
    %v1077 = vadd.f32 %v1075, 1.0
    %v1078 = vadd.f32 %v1076, 1.0
    %v1079 = vmul.f32 %v1063, %v1077
    %v1080 = vmul.f32 %v1064, %v1078
    %v1081 = vld [vmem:[%s23] sm:$0xff]
    %v1082 = vld [vmem:[%s23 + $0x8] sm:$0xff]
    %v1083 = vld [vmem:[%s23 + $0x10] sm:$0xff]
    %v1084 = vld [vmem:[%s23 + $0x18] sm:$0xff]
    %v1085 = vld [vmem:[%s23 + $0x20] sm:$0xff]
    %v1086 = vld [vmem:[%s23 + $0x28] sm:$0xff]
    %v1087 = vld [vmem:[%s23 + $0x30] sm:$0xff]
    %v1088 = vld [vmem:[%s23 + $0x38] sm:$0xff]
    %v1089 = vld [vmem:[%s23 + $0x40] sm:$0xff]
    %v1090 = vld [vmem:[%s23 + $0x48] sm:$0xff]
    %v1091 = vld [vmem:[%s23 + $0x50] sm:$0xff]
    %v1092 = vld [vmem:[%s23 + $0x58] sm:$0xff]
    %v1093 = vld [vmem:[%s23 + $0x60] sm:$0xff]
    %v1094 = vld [vmem:[%s23 + $0x68] sm:$0xff]
    %v1095 = vld [vmem:[%s23 + $0x70] sm:$0xff]
    %v1096 = vld [vmem:[%s23 + $0x78] sm:$0xff]
    %v1097 = vld [vmem:[%s25] sm:$0x1]
    %v1099 = vperm.slane %v1097, 0
    %1101 = vmatpush.msra.mxu0 %v1096
    %1102 = vmatpush.msra.mxu0 %v1095
    %1103 = vmatpush.msra.mxu0 %v1094
    %1104 = vmatpush.msra.mxu0 %v1093
    %1105 = vmatpush.msra.mxu0 %v1092
    %1106 = vmatpush.msra.mxu0 %v1091
    %1107 = vmatpush.msra.mxu0 %v1090
    %1108 = vmatpush.msra.mxu0 %v1089
    %1109 = vmatpush.msra.mxu0 %v1088
    %1110 = vmatpush.msra.mxu0 %v1087
    %1111 = vmatpush.msra.mxu0 %v1086
    %1112 = vmatpush.msra.mxu0 %v1085
    %1113 = vmatpush.msra.mxu0 %v1084
    %1114 = vmatpush.msra.mxu0 %v1083
    %1115 = vmatpush.msra.mxu0 %v1082
    %1116 = vmatpush.msra.mxu0 %v1081
    %1117 = vmatmul.f32.gmra.mxu0 %v1079
    %v1118 = vpop.f32.mrf.mxu0
    %v1119 = vadd.f32 %v1099, %v1118
    %1120 = vmatmul.f32.gmra.mxu0 %v1080
    %v1121 = vpop.f32.mrf.mxu0
    %v1122 = vadd.f32 %v1099, %v1121
    %1123 = vdwg.mxu0
    %v1124 = vadd.f32 %v1024, %v1119
    %v1125 = vadd.f32 %v1025, %v1122
    %v1126 = vld [vmem:[%s27] sm:$0x1]
    %v1127 = vld [vmem:[%s29] sm:$0x1]
    %v1128 = vsel %vm200, %v1124, 0.0
    %1129 = vadd.xlane.f32.xlu0 %v1128
    %v1130 = vpop.xlane.xlu0 %1129
    %v1131 = vsel %vm200, %v1125, 0.0
    %1132 = vadd.xlane.f32.xlu0 %v1131
    %v1133 = vpop.xlane.xlu0 %1132
    %v1134 = vmul.f32 %v1130, %v977
    %v1135 = vmul.f32 %v1133, %v977
    %v1136 = vsub.f32 %v1124, %v1134
    %v1137 = vsub.f32 %v1125, %v1135
    %v1138 = vmul.f32 %v1136, %v1136
    %v1139 = vmul.f32 %v1137, %v1137
    %v1140 = vsel %vm200, %v1138, 0.0
    %1141 = vadd.xlane.f32.xlu0 %v1140
    %v1142 = vpop.xlane.xlu0 %1141
    %v1143 = vsel %vm200, %v1139, 0.0
    %1144 = vadd.xlane.f32.xlu0 %v1143
    %v1145 = vpop.xlane.xlu0 %1144
    %v1146 = vmul.f32 %v1142, %v977
    %v1147 = vmul.f32 %v1145, %v977
    %v1148 = vadd.f32 %v1146, 1e-05
    %v1149 = vadd.f32 %v1147, 1e-05
    %v1150 = vrsqrt.pop %v1148
    %v1151 = vmul.f32 %v1150, %v1148
    %v1152 = vmul.f32 %v1151, %v1150
    %v1153 = vmul.f32 0.5, %v1152
    %v1154 = vsub.f32 1.5, %v1153
    %v1155 = vmul.f32 %v1150, %v1154
    %vm1156 = vweird.f32 %v1148
    %vm1157 = vweird.f32 %v1150
    %vm1158 = vmor %vm1156, %vm1157
    %v1159 = vsel %vm1158, %v1150, %v1155
    %v1160 = vrsqrt.pop %v1149
    %v1161 = vmul.f32 %v1160, %v1149
    %v1162 = vmul.f32 %v1161, %v1160
    %v1163 = vmul.f32 0.5, %v1162
    %v1164 = vsub.f32 1.5, %v1163
    %v1165 = vmul.f32 %v1160, %v1164
    %vm1166 = vweird.f32 %v1149
    %vm1167 = vweird.f32 %v1160
    %vm1168 = vmor %vm1166, %vm1167
    %v1169 = vsel %vm1168, %v1160, %v1165
    %v1170 = vmul.f32 %v1136, %v1159
    %v1171 = vmul.f32 %v1137, %v1169
    %v1173 = vperm.slane %v1126, 0
    %v1175 = vmul.f32 %v1170, %v1173
    %v1176 = vmul.f32 %v1171, %v1173
    %v1178 = vperm.slane %v1127, 0
    %v1180 = vadd.f32 %v1175, %v1178
    %v1181 = vadd.f32 %v1176, %v1178
    %s1182 = scalar_lea.vmem %s11, 32
    %v1183 = vld [vmem:[%s1182] sm:$0xff]
    %v1184 = vld [vmem:[%s1182 + $0x8] sm:$0xff]
    %v1185 = vld [vmem:[%s1182 + $0x10] sm:$0xff]
    %v1186 = vld [vmem:[%s1182 + $0x18] sm:$0xff]
    %s1187 = scalar_lea.vmem %s7, 32
    %v1188 = vld [vmem:[%s1187] sm:$0xff]
    %v1189 = vld [vmem:[%s1187 + $0x8] sm:$0xff]
    %v1190 = vld [vmem:[%s1187 + $0x10] sm:$0xff]
    %v1191 = vld [vmem:[%s1187 + $0x18] sm:$0xff]
    %s1192 = scalar_lea.vmem %s9, 1
    %v1193 = vld [vmem:[%s1192] sm:$0x1]
    %v1195 = vperm.slane %v1193, 0
    %v1198 = vsel %vm200, %v1180, 0
    %v1201 = vsel %vm200, %v1181, 0
    %1203 = vmatpush.msra.mxu0 0.0
    %1204 = vmatpush.msra.mxu0 0.0
    %1205 = vmatpush.msra.mxu0 0.0
    %1206 = vmatpush.msra.mxu0 0.0
    %1207 = vmatpush.msra.mxu0 0.0
    %1208 = vmatpush.msra.mxu0 0.0
    %1209 = vmatpush.msra.mxu0 0.0
    %1210 = vmatpush.msra.mxu0 0.0
    %1211 = vmatpush.msra.mxu0 0.0
    %1212 = vmatpush.msra.mxu0 0.0
    %1213 = vmatpush.msra.mxu0 0.0
    %1214 = vmatpush.msra.mxu0 0.0
    %1215 = vmatpush.msra.mxu0 %v1191
    %1216 = vmatpush.msra.mxu0 %v1190
    %1217 = vmatpush.msra.mxu0 %v1189
    %1218 = vmatpush.msra.mxu0 %v1188
    %1219 = vmatmul.f32.gmra.mxu0 %v1198
    %v1220 = vpop.f32.mrf.mxu0
    %v1221 = vadd.f32 %v1195, %v1220
    %1222 = vmatmul.f32.gmra.mxu0 %v1201
    %v1223 = vpop.f32.mrf.mxu0
    %v1224 = vadd.f32 %v1195, %v1223
    %1225 = vdwg.mxu0
    %1227 = vrot.lane.b32.xlu0 %v1221, 96
    %v1228 = vpop.permute.xlu0 %1227
    %v1229 = vsel %vm233, %v1221, 0
    %v1231 = vsel %vm233, %v1228, 0
    %1233 = vmatpush.xpose.msra.mxu0 0.0
    %1234 = vmatpush.xpose.msra.mxu0 0.0
    %1235 = vmatpush.xpose.msra.mxu0 0.0
    %1236 = vmatpush.xpose.msra.mxu0 0.0
    %1237 = vmatpush.xpose.msra.mxu0 0.0
    %1238 = vmatpush.xpose.msra.mxu0 0.0
    %1239 = vmatpush.xpose.msra.mxu0 0.0
    %1240 = vmatpush.xpose.msra.mxu0 0.0
    %1241 = vmatpush.xpose.msra.mxu0 0.0
    %1242 = vmatpush.xpose.msra.mxu0 0.0
    %1243 = vmatpush.xpose.msra.mxu0 0.0
    %1244 = vmatpush.xpose.msra.mxu0 0.0
    %1245 = vmatpush.xpose.msra.mxu0 0.0
    %1246 = vmatpush.xpose.msra.mxu0 0.0
    %1247 = vmatpush.xpose.msra.mxu0 0.0
    %1248 = vmatpush.xpose.msra.mxu0 %v1231
    %1249 = vmatmul.f32.gmra.mxu0 %v1229
    %v1250 = vpop.f32.mrf.mxu0
    %v1251 = vadd.f32 0.0, %v1250
    %1252 = vdwg.mxu0
    %v1253 = vmul.f32 %v1251, 0.35355338
    %v1254 = vadd.f32 %v1253, %v259
    %v1255 = vsel %vm233, %v1254, -inf
    %1256 = vmax.xlane.f32.xlu0 %v1255
    %v1257 = vpop.xlane.xlu0 %1256
    %v1258 = vsub.f32 %v1254, %v1257
    %v1259 = vmul.f32 %v1258, 1.442695
    %v1260 = vpow.pop %v1259
    %v1261 = vsel %vm233, %v1260, 0.0
    %1262 = vadd.xlane.f32.xlu0 %v1261
    %v1263 = vpop.xlane.xlu0 %1262
    %v1264 = vrcp.pop %v1263
    %v1265 = vmul.f32 %v1260, %v1264
    %1266 = vrot.lane.b32.xlu0 %v1221, 64
    %v1267 = vpop.permute.xlu0 %1266
    %v1270 = vsel %vm233, %v1265, 0
    %1272 = vmatpush.msra.mxu0 0.0
    %1273 = vmatpush.msra.mxu0 0.0
    %1274 = vmatpush.msra.mxu0 0.0
    %1275 = vmatpush.msra.mxu0 0.0
    %1276 = vmatpush.msra.mxu0 0.0
    %1277 = vmatpush.msra.mxu0 0.0
    %1278 = vmatpush.msra.mxu0 0.0
    %1279 = vmatpush.msra.mxu0 0.0
    %1280 = vmatpush.msra.mxu0 0.0
    %1281 = vmatpush.msra.mxu0 0.0
    %1282 = vmatpush.msra.mxu0 0.0
    %1283 = vmatpush.msra.mxu0 0.0
    %1284 = vmatpush.msra.mxu0 0.0
    %1285 = vmatpush.msra.mxu0 0.0
    %1286 = vmatpush.msra.mxu0 0.0
    %1287 = vmatpush.msra.mxu0 %v1267
    %1288 = vmatmul.f32.gmra.mxu0 %v1270
    %v1289 = vpop.f32.mrf.mxu0
    %v1290 = vadd.f32 0.0, %v1289
    %1291 = vdwg.mxu0
    %1292 = vrot.lane.b32.xlu0 %v1221, 120
    %v1293 = vpop.permute.xlu0 %1292
    %1294 = vrot.lane.b32.xlu0 %v1221, 88
    %v1295 = vpop.permute.xlu0 %1294
    %v1296 = vsel %vm233, %v1293, 0
    %v1298 = vsel %vm233, %v1295, 0
    %1300 = vmatpush.xpose.msra.mxu0 0.0
    %1301 = vmatpush.xpose.msra.mxu0 0.0
    %1302 = vmatpush.xpose.msra.mxu0 0.0
    %1303 = vmatpush.xpose.msra.mxu0 0.0
    %1304 = vmatpush.xpose.msra.mxu0 0.0
    %1305 = vmatpush.xpose.msra.mxu0 0.0
    %1306 = vmatpush.xpose.msra.mxu0 0.0
    %1307 = vmatpush.xpose.msra.mxu0 0.0
    %1308 = vmatpush.xpose.msra.mxu0 0.0
    %1309 = vmatpush.xpose.msra.mxu0 0.0
    %1310 = vmatpush.xpose.msra.mxu0 0.0
    %1311 = vmatpush.xpose.msra.mxu0 0.0
    %1312 = vmatpush.xpose.msra.mxu0 0.0
    %1313 = vmatpush.xpose.msra.mxu0 0.0
    %1314 = vmatpush.xpose.msra.mxu0 0.0
    %1315 = vmatpush.xpose.msra.mxu0 %v1298
    %1316 = vmatmul.f32.gmra.mxu0 %v1296
    %v1317 = vpop.f32.mrf.mxu0
    %v1318 = vadd.f32 0.0, %v1317
    %1319 = vdwg.mxu0
    %v1320 = vmul.f32 %v1318, 0.35355338
    %v1321 = vadd.f32 %v1320, %v259
    %v1322 = vsel %vm233, %v1321, -inf
    %1323 = vmax.xlane.f32.xlu0 %v1322
    %v1324 = vpop.xlane.xlu0 %1323
    %v1325 = vsub.f32 %v1321, %v1324
    %v1326 = vmul.f32 %v1325, 1.442695
    %v1327 = vpow.pop %v1326
    %v1328 = vsel %vm233, %v1327, 0.0
    %1329 = vadd.xlane.f32.xlu0 %v1328
    %v1330 = vpop.xlane.xlu0 %1329
    %v1331 = vrcp.pop %v1330
    %v1332 = vmul.f32 %v1327, %v1331
    %1333 = vrot.lane.b32.xlu0 %v1221, 56
    %v1334 = vpop.permute.xlu0 %1333
    %v1337 = vsel %vm233, %v1332, 0
    %1339 = vmatpush.msra.mxu0 0.0
    %1340 = vmatpush.msra.mxu0 0.0
    %1341 = vmatpush.msra.mxu0 0.0
    %1342 = vmatpush.msra.mxu0 0.0
    %1343 = vmatpush.msra.mxu0 0.0
    %1344 = vmatpush.msra.mxu0 0.0
    %1345 = vmatpush.msra.mxu0 0.0
    %1346 = vmatpush.msra.mxu0 0.0
    %1347 = vmatpush.msra.mxu0 0.0
    %1348 = vmatpush.msra.mxu0 0.0
    %1349 = vmatpush.msra.mxu0 0.0
    %1350 = vmatpush.msra.mxu0 0.0
    %1351 = vmatpush.msra.mxu0 0.0
    %1352 = vmatpush.msra.mxu0 0.0
    %1353 = vmatpush.msra.mxu0 0.0
    %1354 = vmatpush.msra.mxu0 %v1334
    %1355 = vmatmul.f32.gmra.mxu0 %v1337
    %v1356 = vpop.f32.mrf.mxu0
    %v1357 = vadd.f32 0.0, %v1356
    %1358 = vdwg.mxu0
    %v1360 = vsel %vm233, %v1357, 0
    %1362 = vmatpush.msra.mxu0 0.0
    %1363 = vmatpush.msra.mxu0 0.0
    %1364 = vmatpush.msra.mxu0 0.0
    %1365 = vmatpush.msra.mxu0 0.0
    %1366 = vmatpush.msra.mxu0 0.0
    %1367 = vmatpush.msra.mxu0 0.0
    %1368 = vmatpush.msra.mxu0 0.0
    %1369 = vmatpush.msra.mxu0 0.0
    %1370 = vmatpush.msra.mxu0 0.0
    %1371 = vmatpush.msra.mxu0 0.0
    %1372 = vmatpush.msra.mxu0 0.0
    %1373 = vmatpush.msra.mxu0 0.0
    %1374 = vmatpush.msra.mxu0 0.0
    %1375 = vmatpush.msra.mxu0 0.0
    %1376 = vmatpush.msra.mxu0 0.0
    %1377 = vmatpush.msra.mxu0 %v1184
    %1378 = vmatmul.f32.gmra.mxu0 %v1360
    %v1379 = vpop.f32.mrf.mxu0
    %v1380 = vadd.f32 0.0, %v1379
    %1381 = vdwg.mxu0
    %v1383 = vsel %vm233, %v1290, 0
    %1385 = vmatpush.msra.mxu0 0.0
    %1386 = vmatpush.msra.mxu0 0.0
    %1387 = vmatpush.msra.mxu0 0.0
    %1388 = vmatpush.msra.mxu0 0.0
    %1389 = vmatpush.msra.mxu0 0.0
    %1390 = vmatpush.msra.mxu0 0.0
    %1391 = vmatpush.msra.mxu0 0.0
    %1392 = vmatpush.msra.mxu0 0.0
    %1393 = vmatpush.msra.mxu0 0.0
    %1394 = vmatpush.msra.mxu0 0.0
    %1395 = vmatpush.msra.mxu0 0.0
    %1396 = vmatpush.msra.mxu0 0.0
    %1397 = vmatpush.msra.mxu0 0.0
    %1398 = vmatpush.msra.mxu0 0.0
    %1399 = vmatpush.msra.mxu0 0.0
    %1400 = vmatpush.msra.mxu0 %v1183
    %1401 = vmatmul.f32.gmra.mxu0 %v1383
    %v1402 = vpop.f32.mrf.mxu0
    %v1403 = vadd.f32 %v1380, %v1402
    %1404 = vdwg.mxu0
    %1405 = vrot.lane.b32.xlu0 %v1221, 112
    %v1406 = vpop.permute.xlu0 %1405
    %1407 = vrot.lane.b32.xlu0 %v1221, 80
    %v1408 = vpop.permute.xlu0 %1407
    %v1409 = vsel %vm233, %v1406, 0
    %v1411 = vsel %vm233, %v1408, 0
    %1413 = vmatpush.xpose.msra.mxu0 0.0
    %1414 = vmatpush.xpose.msra.mxu0 0.0
    %1415 = vmatpush.xpose.msra.mxu0 0.0
    %1416 = vmatpush.xpose.msra.mxu0 0.0
    %1417 = vmatpush.xpose.msra.mxu0 0.0
    %1418 = vmatpush.xpose.msra.mxu0 0.0
    %1419 = vmatpush.xpose.msra.mxu0 0.0
    %1420 = vmatpush.xpose.msra.mxu0 0.0
    %1421 = vmatpush.xpose.msra.mxu0 0.0
    %1422 = vmatpush.xpose.msra.mxu0 0.0
    %1423 = vmatpush.xpose.msra.mxu0 0.0
    %1424 = vmatpush.xpose.msra.mxu0 0.0
    %1425 = vmatpush.xpose.msra.mxu0 0.0
    %1426 = vmatpush.xpose.msra.mxu0 0.0
    %1427 = vmatpush.xpose.msra.mxu0 0.0
    %1428 = vmatpush.xpose.msra.mxu0 %v1411
    %1429 = vmatmul.f32.gmra.mxu0 %v1409
    %v1430 = vpop.f32.mrf.mxu0
    %v1431 = vadd.f32 0.0, %v1430
    %1432 = vdwg.mxu0
    %v1433 = vmul.f32 %v1431, 0.35355338
    %v1434 = vadd.f32 %v1433, %v259
    %v1435 = vsel %vm233, %v1434, -inf
    %1436 = vmax.xlane.f32.xlu0 %v1435
    %v1437 = vpop.xlane.xlu0 %1436
    %v1438 = vsub.f32 %v1434, %v1437
    %v1439 = vmul.f32 %v1438, 1.442695
    %v1440 = vpow.pop %v1439
    %v1441 = vsel %vm233, %v1440, 0.0
    %1442 = vadd.xlane.f32.xlu0 %v1441
    %v1443 = vpop.xlane.xlu0 %1442
    %v1444 = vrcp.pop %v1443
    %v1445 = vmul.f32 %v1440, %v1444
    %1446 = vrot.lane.b32.xlu0 %v1221, 48
    %v1447 = vpop.permute.xlu0 %1446
    %v1450 = vsel %vm233, %v1445, 0
    %1452 = vmatpush.msra.mxu0 0.0
    %1453 = vmatpush.msra.mxu0 0.0
    %1454 = vmatpush.msra.mxu0 0.0
    %1455 = vmatpush.msra.mxu0 0.0
    %1456 = vmatpush.msra.mxu0 0.0
    %1457 = vmatpush.msra.mxu0 0.0
    %1458 = vmatpush.msra.mxu0 0.0
    %1459 = vmatpush.msra.mxu0 0.0
    %1460 = vmatpush.msra.mxu0 0.0
    %1461 = vmatpush.msra.mxu0 0.0
    %1462 = vmatpush.msra.mxu0 0.0
    %1463 = vmatpush.msra.mxu0 0.0
    %1464 = vmatpush.msra.mxu0 0.0
    %1465 = vmatpush.msra.mxu0 0.0
    %1466 = vmatpush.msra.mxu0 0.0
    %1467 = vmatpush.msra.mxu0 %v1447
    %1468 = vmatmul.f32.gmra.mxu0 %v1450
    %v1469 = vpop.f32.mrf.mxu0
    %v1470 = vadd.f32 0.0, %v1469
    %1471 = vdwg.mxu0
    %v1473 = vsel %vm233, %v1470, 0
    %1475 = vmatpush.msra.mxu0 0.0
    %1476 = vmatpush.msra.mxu0 0.0
    %1477 = vmatpush.msra.mxu0 0.0
    %1478 = vmatpush.msra.mxu0 0.0
    %1479 = vmatpush.msra.mxu0 0.0
    %1480 = vmatpush.msra.mxu0 0.0
    %1481 = vmatpush.msra.mxu0 0.0
    %1482 = vmatpush.msra.mxu0 0.0
    %1483 = vmatpush.msra.mxu0 0.0
    %1484 = vmatpush.msra.mxu0 0.0
    %1485 = vmatpush.msra.mxu0 0.0
    %1486 = vmatpush.msra.mxu0 0.0
    %1487 = vmatpush.msra.mxu0 0.0
    %1488 = vmatpush.msra.mxu0 0.0
    %1489 = vmatpush.msra.mxu0 0.0
    %1490 = vmatpush.msra.mxu0 %v1185
    %1491 = vmatmul.f32.gmra.mxu0 %v1473
    %v1492 = vpop.f32.mrf.mxu0
    %v1493 = vadd.f32 0.0, %v1492
    %1494 = vdwg.mxu0
    %v1495 = vadd.f32 %v1403, %v1493
    %1496 = vrot.lane.b32.xlu0 %v1221, 104
    %v1497 = vpop.permute.xlu0 %1496
    %1498 = vrot.lane.b32.xlu0 %v1221, 72
    %v1499 = vpop.permute.xlu0 %1498
    %v1500 = vsel %vm233, %v1497, 0
    %v1502 = vsel %vm233, %v1499, 0
    %1504 = vmatpush.xpose.msra.mxu0 0.0
    %1505 = vmatpush.xpose.msra.mxu0 0.0
    %1506 = vmatpush.xpose.msra.mxu0 0.0
    %1507 = vmatpush.xpose.msra.mxu0 0.0
    %1508 = vmatpush.xpose.msra.mxu0 0.0
    %1509 = vmatpush.xpose.msra.mxu0 0.0
    %1510 = vmatpush.xpose.msra.mxu0 0.0
    %1511 = vmatpush.xpose.msra.mxu0 0.0
    %1512 = vmatpush.xpose.msra.mxu0 0.0
    %1513 = vmatpush.xpose.msra.mxu0 0.0
    %1514 = vmatpush.xpose.msra.mxu0 0.0
    %1515 = vmatpush.xpose.msra.mxu0 0.0
    %1516 = vmatpush.xpose.msra.mxu0 0.0
    %1517 = vmatpush.xpose.msra.mxu0 0.0
    %1518 = vmatpush.xpose.msra.mxu0 0.0
    %1519 = vmatpush.xpose.msra.mxu0 %v1502
    %1520 = vmatmul.f32.gmra.mxu0 %v1500
    %v1521 = vpop.f32.mrf.mxu0
    %v1522 = vadd.f32 0.0, %v1521
    %1523 = vdwg.mxu0
    %v1524 = vmul.f32 %v1522, 0.35355338
    %v1525 = vadd.f32 %v1524, %v259
    %v1526 = vsel %vm233, %v1525, -inf
    %1527 = vmax.xlane.f32.xlu0 %v1526
    %v1528 = vpop.xlane.xlu0 %1527
    %v1529 = vsub.f32 %v1525, %v1528
    %v1530 = vmul.f32 %v1529, 1.442695
    %v1531 = vpow.pop %v1530
    %v1532 = vsel %vm233, %v1531, 0.0
    %1533 = vadd.xlane.f32.xlu0 %v1532
    %v1534 = vpop.xlane.xlu0 %1533
    %v1535 = vrcp.pop %v1534
    %v1536 = vmul.f32 %v1531, %v1535
    %1537 = vrot.lane.b32.xlu0 %v1221, 40
    %v1538 = vpop.permute.xlu0 %1537
    %v1541 = vsel %vm233, %v1536, 0
    %1543 = vmatpush.msra.mxu0 0.0
    %1544 = vmatpush.msra.mxu0 0.0
    %1545 = vmatpush.msra.mxu0 0.0
    %1546 = vmatpush.msra.mxu0 0.0
    %1547 = vmatpush.msra.mxu0 0.0
    %1548 = vmatpush.msra.mxu0 0.0
    %1549 = vmatpush.msra.mxu0 0.0
    %1550 = vmatpush.msra.mxu0 0.0
    %1551 = vmatpush.msra.mxu0 0.0
    %1552 = vmatpush.msra.mxu0 0.0
    %1553 = vmatpush.msra.mxu0 0.0
    %1554 = vmatpush.msra.mxu0 0.0
    %1555 = vmatpush.msra.mxu0 0.0
    %1556 = vmatpush.msra.mxu0 0.0
    %1557 = vmatpush.msra.mxu0 0.0
    %1558 = vmatpush.msra.mxu0 %v1538
    %1559 = vmatmul.f32.gmra.mxu0 %v1541
    %v1560 = vpop.f32.mrf.mxu0
    %v1561 = vadd.f32 0.0, %v1560
    %1562 = vdwg.mxu0
    %v1564 = vsel %vm233, %v1561, 0
    %1566 = vmatpush.msra.mxu0 0.0
    %1567 = vmatpush.msra.mxu0 0.0
    %1568 = vmatpush.msra.mxu0 0.0
    %1569 = vmatpush.msra.mxu0 0.0
    %1570 = vmatpush.msra.mxu0 0.0
    %1571 = vmatpush.msra.mxu0 0.0
    %1572 = vmatpush.msra.mxu0 0.0
    %1573 = vmatpush.msra.mxu0 0.0
    %1574 = vmatpush.msra.mxu0 0.0
    %1575 = vmatpush.msra.mxu0 0.0
    %1576 = vmatpush.msra.mxu0 0.0
    %1577 = vmatpush.msra.mxu0 0.0
    %1578 = vmatpush.msra.mxu0 0.0
    %1579 = vmatpush.msra.mxu0 0.0
    %1580 = vmatpush.msra.mxu0 0.0
    %1581 = vmatpush.msra.mxu0 %v1186
    %1582 = vmatmul.f32.gmra.mxu0 %v1564
    %v1583 = vpop.f32.mrf.mxu0
    %v1584 = vadd.f32 0.0, %v1583
    %1585 = vdwg.mxu0
    %v1586 = vadd.f32 %v1495, %v1584
    %1588 = vrot.lane.b32.xlu0 %v1224, 96
    %v1589 = vpop.permute.xlu0 %1588
    %v1590 = vsel %vm233, %v1224, 0
    %v1592 = vsel %vm233, %v1589, 0
    %1594 = vmatpush.xpose.msra.mxu0 0.0
    %1595 = vmatpush.xpose.msra.mxu0 0.0
    %1596 = vmatpush.xpose.msra.mxu0 0.0
    %1597 = vmatpush.xpose.msra.mxu0 0.0
    %1598 = vmatpush.xpose.msra.mxu0 0.0
    %1599 = vmatpush.xpose.msra.mxu0 0.0
    %1600 = vmatpush.xpose.msra.mxu0 0.0
    %1601 = vmatpush.xpose.msra.mxu0 0.0
    %1602 = vmatpush.xpose.msra.mxu0 0.0
    %1603 = vmatpush.xpose.msra.mxu0 0.0
    %1604 = vmatpush.xpose.msra.mxu0 0.0
    %1605 = vmatpush.xpose.msra.mxu0 0.0
    %1606 = vmatpush.xpose.msra.mxu0 0.0
    %1607 = vmatpush.xpose.msra.mxu0 0.0
    %1608 = vmatpush.xpose.msra.mxu0 0.0
    %1609 = vmatpush.xpose.msra.mxu0 %v1592
    %1610 = vmatmul.f32.gmra.mxu0 %v1590
    %v1611 = vpop.f32.mrf.mxu0
    %v1612 = vadd.f32 0.0, %v1611
    %1613 = vdwg.mxu0
    %v1614 = vmul.f32 %v1612, 0.35355338
    %v1615 = vadd.f32 %v1614, %v621
    %v1616 = vsel %vm233, %v1615, -inf
    %1617 = vmax.xlane.f32.xlu0 %v1616
    %v1618 = vpop.xlane.xlu0 %1617
    %v1619 = vsub.f32 %v1615, %v1618
    %v1620 = vmul.f32 %v1619, 1.442695
    %v1621 = vpow.pop %v1620
    %v1622 = vsel %vm233, %v1621, 0.0
    %1623 = vadd.xlane.f32.xlu0 %v1622
    %v1624 = vpop.xlane.xlu0 %1623
    %v1625 = vrcp.pop %v1624
    %v1626 = vmul.f32 %v1621, %v1625
    %1627 = vrot.lane.b32.xlu0 %v1224, 64
    %v1628 = vpop.permute.xlu0 %1627
    %v1631 = vsel %vm233, %v1626, 0
    %1633 = vmatpush.msra.mxu0 0.0
    %1634 = vmatpush.msra.mxu0 0.0
    %1635 = vmatpush.msra.mxu0 0.0
    %1636 = vmatpush.msra.mxu0 0.0
    %1637 = vmatpush.msra.mxu0 0.0
    %1638 = vmatpush.msra.mxu0 0.0
    %1639 = vmatpush.msra.mxu0 0.0
    %1640 = vmatpush.msra.mxu0 0.0
    %1641 = vmatpush.msra.mxu0 0.0
    %1642 = vmatpush.msra.mxu0 0.0
    %1643 = vmatpush.msra.mxu0 0.0
    %1644 = vmatpush.msra.mxu0 0.0
    %1645 = vmatpush.msra.mxu0 0.0
    %1646 = vmatpush.msra.mxu0 0.0
    %1647 = vmatpush.msra.mxu0 0.0
    %1648 = vmatpush.msra.mxu0 %v1628
    %1649 = vmatmul.f32.gmra.mxu0 %v1631
    %v1650 = vpop.f32.mrf.mxu0
    %v1651 = vadd.f32 0.0, %v1650
    %1652 = vdwg.mxu0
    %1653 = vrot.lane.b32.xlu0 %v1224, 120
    %v1654 = vpop.permute.xlu0 %1653
    %1655 = vrot.lane.b32.xlu0 %v1224, 88
    %v1656 = vpop.permute.xlu0 %1655
    %v1657 = vsel %vm233, %v1654, 0
    %v1659 = vsel %vm233, %v1656, 0
    %1661 = vmatpush.xpose.msra.mxu0 0.0
    %1662 = vmatpush.xpose.msra.mxu0 0.0
    %1663 = vmatpush.xpose.msra.mxu0 0.0
    %1664 = vmatpush.xpose.msra.mxu0 0.0
    %1665 = vmatpush.xpose.msra.mxu0 0.0
    %1666 = vmatpush.xpose.msra.mxu0 0.0
    %1667 = vmatpush.xpose.msra.mxu0 0.0
    %1668 = vmatpush.xpose.msra.mxu0 0.0
    %1669 = vmatpush.xpose.msra.mxu0 0.0
    %1670 = vmatpush.xpose.msra.mxu0 0.0
    %1671 = vmatpush.xpose.msra.mxu0 0.0
    %1672 = vmatpush.xpose.msra.mxu0 0.0
    %1673 = vmatpush.xpose.msra.mxu0 0.0
    %1674 = vmatpush.xpose.msra.mxu0 0.0
    %1675 = vmatpush.xpose.msra.mxu0 0.0
    %1676 = vmatpush.xpose.msra.mxu0 %v1659
    %1677 = vmatmul.f32.gmra.mxu0 %v1657
    %v1678 = vpop.f32.mrf.mxu0
    %v1679 = vadd.f32 0.0, %v1678
    %1680 = vdwg.mxu0
    %v1681 = vmul.f32 %v1679, 0.35355338
    %v1682 = vadd.f32 %v1681, %v621
    %v1683 = vsel %vm233, %v1682, -inf
    %1684 = vmax.xlane.f32.xlu0 %v1683
    %v1685 = vpop.xlane.xlu0 %1684
    %v1686 = vsub.f32 %v1682, %v1685
    %v1687 = vmul.f32 %v1686, 1.442695
    %v1688 = vpow.pop %v1687
    %v1689 = vsel %vm233, %v1688, 0.0
    %1690 = vadd.xlane.f32.xlu0 %v1689
    %v1691 = vpop.xlane.xlu0 %1690
    %v1692 = vrcp.pop %v1691
    %v1693 = vmul.f32 %v1688, %v1692
    %1694 = vrot.lane.b32.xlu0 %v1224, 56
    %v1695 = vpop.permute.xlu0 %1694
    %v1698 = vsel %vm233, %v1693, 0
    %1700 = vmatpush.msra.mxu0 0.0
    %1701 = vmatpush.msra.mxu0 0.0
    %1702 = vmatpush.msra.mxu0 0.0
    %1703 = vmatpush.msra.mxu0 0.0
    %1704 = vmatpush.msra.mxu0 0.0
    %1705 = vmatpush.msra.mxu0 0.0
    %1706 = vmatpush.msra.mxu0 0.0
    %1707 = vmatpush.msra.mxu0 0.0
    %1708 = vmatpush.msra.mxu0 0.0
    %1709 = vmatpush.msra.mxu0 0.0
    %1710 = vmatpush.msra.mxu0 0.0
    %1711 = vmatpush.msra.mxu0 0.0
    %1712 = vmatpush.msra.mxu0 0.0
    %1713 = vmatpush.msra.mxu0 0.0
    %1714 = vmatpush.msra.mxu0 0.0
    %1715 = vmatpush.msra.mxu0 %v1695
    %1716 = vmatmul.f32.gmra.mxu0 %v1698
    %v1717 = vpop.f32.mrf.mxu0
    %v1718 = vadd.f32 0.0, %v1717
    %1719 = vdwg.mxu0
    %v1721 = vsel %vm233, %v1718, 0
    %1723 = vmatpush.msra.mxu0 0.0
    %1724 = vmatpush.msra.mxu0 0.0
    %1725 = vmatpush.msra.mxu0 0.0
    %1726 = vmatpush.msra.mxu0 0.0
    %1727 = vmatpush.msra.mxu0 0.0
    %1728 = vmatpush.msra.mxu0 0.0
    %1729 = vmatpush.msra.mxu0 0.0
    %1730 = vmatpush.msra.mxu0 0.0
    %1731 = vmatpush.msra.mxu0 0.0
    %1732 = vmatpush.msra.mxu0 0.0
    %1733 = vmatpush.msra.mxu0 0.0
    %1734 = vmatpush.msra.mxu0 0.0
    %1735 = vmatpush.msra.mxu0 0.0
    %1736 = vmatpush.msra.mxu0 0.0
    %1737 = vmatpush.msra.mxu0 0.0
    %1738 = vmatpush.msra.mxu0 %v1184
    %1739 = vmatmul.f32.gmra.mxu0 %v1721
    %v1740 = vpop.f32.mrf.mxu0
    %v1741 = vadd.f32 0.0, %v1740
    %1742 = vdwg.mxu0
    %v1744 = vsel %vm233, %v1651, 0
    %1746 = vmatpush.msra.mxu0 0.0
    %1747 = vmatpush.msra.mxu0 0.0
    %1748 = vmatpush.msra.mxu0 0.0
    %1749 = vmatpush.msra.mxu0 0.0
    %1750 = vmatpush.msra.mxu0 0.0
    %1751 = vmatpush.msra.mxu0 0.0
    %1752 = vmatpush.msra.mxu0 0.0
    %1753 = vmatpush.msra.mxu0 0.0
    %1754 = vmatpush.msra.mxu0 0.0
    %1755 = vmatpush.msra.mxu0 0.0
    %1756 = vmatpush.msra.mxu0 0.0
    %1757 = vmatpush.msra.mxu0 0.0
    %1758 = vmatpush.msra.mxu0 0.0
    %1759 = vmatpush.msra.mxu0 0.0
    %1760 = vmatpush.msra.mxu0 0.0
    %1761 = vmatpush.msra.mxu0 %v1183
    %1762 = vmatmul.f32.gmra.mxu0 %v1744
    %v1763 = vpop.f32.mrf.mxu0
    %v1764 = vadd.f32 %v1741, %v1763
    %1765 = vdwg.mxu0
    %1766 = vrot.lane.b32.xlu0 %v1224, 112
    %v1767 = vpop.permute.xlu0 %1766
    %1768 = vrot.lane.b32.xlu0 %v1224, 80
    %v1769 = vpop.permute.xlu0 %1768
    %v1770 = vsel %vm233, %v1767, 0
    %v1772 = vsel %vm233, %v1769, 0
    %1774 = vmatpush.xpose.msra.mxu0 0.0
    %1775 = vmatpush.xpose.msra.mxu0 0.0
    %1776 = vmatpush.xpose.msra.mxu0 0.0
    %1777 = vmatpush.xpose.msra.mxu0 0.0
    %1778 = vmatpush.xpose.msra.mxu0 0.0
    %1779 = vmatpush.xpose.msra.mxu0 0.0
    %1780 = vmatpush.xpose.msra.mxu0 0.0
    %1781 = vmatpush.xpose.msra.mxu0 0.0
    %1782 = vmatpush.xpose.msra.mxu0 0.0
    %1783 = vmatpush.xpose.msra.mxu0 0.0
    %1784 = vmatpush.xpose.msra.mxu0 0.0
    %1785 = vmatpush.xpose.msra.mxu0 0.0
    %1786 = vmatpush.xpose.msra.mxu0 0.0
    %1787 = vmatpush.xpose.msra.mxu0 0.0
    %1788 = vmatpush.xpose.msra.mxu0 0.0
    %1789 = vmatpush.xpose.msra.mxu0 %v1772
    %1790 = vmatmul.f32.gmra.mxu0 %v1770
    %v1791 = vpop.f32.mrf.mxu0
    %v1792 = vadd.f32 0.0, %v1791
    %1793 = vdwg.mxu0
    %v1794 = vmul.f32 %v1792, 0.35355338
    %v1795 = vadd.f32 %v1794, %v621
    %v1796 = vsel %vm233, %v1795, -inf
    %1797 = vmax.xlane.f32.xlu0 %v1796
    %v1798 = vpop.xlane.xlu0 %1797
    %v1799 = vsub.f32 %v1795, %v1798
    %v1800 = vmul.f32 %v1799, 1.442695
    %v1801 = vpow.pop %v1800
    %v1802 = vsel %vm233, %v1801, 0.0
    %1803 = vadd.xlane.f32.xlu0 %v1802
    %v1804 = vpop.xlane.xlu0 %1803
    %v1805 = vrcp.pop %v1804
    %v1806 = vmul.f32 %v1801, %v1805
    %1807 = vrot.lane.b32.xlu0 %v1224, 48
    %v1808 = vpop.permute.xlu0 %1807
    %v1811 = vsel %vm233, %v1806, 0
    %1813 = vmatpush.msra.mxu0 0.0
    %1814 = vmatpush.msra.mxu0 0.0
    %1815 = vmatpush.msra.mxu0 0.0
    %1816 = vmatpush.msra.mxu0 0.0
    %1817 = vmatpush.msra.mxu0 0.0
    %1818 = vmatpush.msra.mxu0 0.0
    %1819 = vmatpush.msra.mxu0 0.0
    %1820 = vmatpush.msra.mxu0 0.0
    %1821 = vmatpush.msra.mxu0 0.0
    %1822 = vmatpush.msra.mxu0 0.0
    %1823 = vmatpush.msra.mxu0 0.0
    %1824 = vmatpush.msra.mxu0 0.0
    %1825 = vmatpush.msra.mxu0 0.0
    %1826 = vmatpush.msra.mxu0 0.0
    %1827 = vmatpush.msra.mxu0 0.0
    %1828 = vmatpush.msra.mxu0 %v1808
    %1829 = vmatmul.f32.gmra.mxu0 %v1811
    %v1830 = vpop.f32.mrf.mxu0
    %v1831 = vadd.f32 0.0, %v1830
    %1832 = vdwg.mxu0
    %v1834 = vsel %vm233, %v1831, 0
    %1836 = vmatpush.msra.mxu0 0.0
    %1837 = vmatpush.msra.mxu0 0.0
    %1838 = vmatpush.msra.mxu0 0.0
    %1839 = vmatpush.msra.mxu0 0.0
    %1840 = vmatpush.msra.mxu0 0.0
    %1841 = vmatpush.msra.mxu0 0.0
    %1842 = vmatpush.msra.mxu0 0.0
    %1843 = vmatpush.msra.mxu0 0.0
    %1844 = vmatpush.msra.mxu0 0.0
    %1845 = vmatpush.msra.mxu0 0.0
    %1846 = vmatpush.msra.mxu0 0.0
    %1847 = vmatpush.msra.mxu0 0.0
    %1848 = vmatpush.msra.mxu0 0.0
    %1849 = vmatpush.msra.mxu0 0.0
    %1850 = vmatpush.msra.mxu0 0.0
    %1851 = vmatpush.msra.mxu0 %v1185
    %1852 = vmatmul.f32.gmra.mxu0 %v1834
    %v1853 = vpop.f32.mrf.mxu0
    %v1854 = vadd.f32 0.0, %v1853
    %1855 = vdwg.mxu0
    %v1856 = vadd.f32 %v1764, %v1854
    %1857 = vrot.lane.b32.xlu0 %v1224, 104
    %v1858 = vpop.permute.xlu0 %1857
    %1859 = vrot.lane.b32.xlu0 %v1224, 72
    %v1860 = vpop.permute.xlu0 %1859
    %v1861 = vsel %vm233, %v1858, 0
    %v1863 = vsel %vm233, %v1860, 0
    %1865 = vmatpush.xpose.msra.mxu0 0.0
    %1866 = vmatpush.xpose.msra.mxu0 0.0
    %1867 = vmatpush.xpose.msra.mxu0 0.0
    %1868 = vmatpush.xpose.msra.mxu0 0.0
    %1869 = vmatpush.xpose.msra.mxu0 0.0
    %1870 = vmatpush.xpose.msra.mxu0 0.0
    %1871 = vmatpush.xpose.msra.mxu0 0.0
    %1872 = vmatpush.xpose.msra.mxu0 0.0
    %1873 = vmatpush.xpose.msra.mxu0 0.0
    %1874 = vmatpush.xpose.msra.mxu0 0.0
    %1875 = vmatpush.xpose.msra.mxu0 0.0
    %1876 = vmatpush.xpose.msra.mxu0 0.0
    %1877 = vmatpush.xpose.msra.mxu0 0.0
    %1878 = vmatpush.xpose.msra.mxu0 0.0
    %1879 = vmatpush.xpose.msra.mxu0 0.0
    %1880 = vmatpush.xpose.msra.mxu0 %v1863
    %1881 = vmatmul.f32.gmra.mxu0 %v1861
    %v1882 = vpop.f32.mrf.mxu0
    %v1883 = vadd.f32 0.0, %v1882
    %1884 = vdwg.mxu0
    %v1885 = vmul.f32 %v1883, 0.35355338
    %v1886 = vadd.f32 %v1885, %v621
    %v1887 = vsel %vm233, %v1886, -inf
    %1888 = vmax.xlane.f32.xlu0 %v1887
    %v1889 = vpop.xlane.xlu0 %1888
    %v1890 = vsub.f32 %v1886, %v1889
    %v1891 = vmul.f32 %v1890, 1.442695
    %v1892 = vpow.pop %v1891
    %v1893 = vsel %vm233, %v1892, 0.0
    %1894 = vadd.xlane.f32.xlu0 %v1893
    %v1895 = vpop.xlane.xlu0 %1894
    %v1896 = vrcp.pop %v1895
    %v1897 = vmul.f32 %v1892, %v1896
    %1898 = vrot.lane.b32.xlu0 %v1224, 40
    %v1899 = vpop.permute.xlu0 %1898
    %v1902 = vsel %vm233, %v1897, 0
    %1904 = vmatpush.msra.mxu0 0.0
    %1905 = vmatpush.msra.mxu0 0.0
    %1906 = vmatpush.msra.mxu0 0.0
    %1907 = vmatpush.msra.mxu0 0.0
    %1908 = vmatpush.msra.mxu0 0.0
    %1909 = vmatpush.msra.mxu0 0.0
    %1910 = vmatpush.msra.mxu0 0.0
    %1911 = vmatpush.msra.mxu0 0.0
    %1912 = vmatpush.msra.mxu0 0.0
    %1913 = vmatpush.msra.mxu0 0.0
    %1914 = vmatpush.msra.mxu0 0.0
    %1915 = vmatpush.msra.mxu0 0.0
    %1916 = vmatpush.msra.mxu0 0.0
    %1917 = vmatpush.msra.mxu0 0.0
    %1918 = vmatpush.msra.mxu0 0.0
    %1919 = vmatpush.msra.mxu0 %v1899
    %1920 = vmatmul.f32.gmra.mxu0 %v1902
    %v1921 = vpop.f32.mrf.mxu0
    %v1922 = vadd.f32 0.0, %v1921
    %1923 = vdwg.mxu0
    %v1925 = vsel %vm233, %v1922, 0
    %1927 = vmatpush.msra.mxu0 0.0
    %1928 = vmatpush.msra.mxu0 0.0
    %1929 = vmatpush.msra.mxu0 0.0
    %1930 = vmatpush.msra.mxu0 0.0
    %1931 = vmatpush.msra.mxu0 0.0
    %1932 = vmatpush.msra.mxu0 0.0
    %1933 = vmatpush.msra.mxu0 0.0
    %1934 = vmatpush.msra.mxu0 0.0
    %1935 = vmatpush.msra.mxu0 0.0
    %1936 = vmatpush.msra.mxu0 0.0
    %1937 = vmatpush.msra.mxu0 0.0
    %1938 = vmatpush.msra.mxu0 0.0
    %1939 = vmatpush.msra.mxu0 0.0
    %1940 = vmatpush.msra.mxu0 0.0
    %1941 = vmatpush.msra.mxu0 0.0
    %1942 = vmatpush.msra.mxu0 %v1186
    %1943 = vmatmul.f32.gmra.mxu0 %v1925
    %v1944 = vpop.f32.mrf.mxu0
    %v1945 = vadd.f32 0.0, %v1944
    %1946 = vdwg.mxu0
    %v1947 = vadd.f32 %v1856, %v1945
    %s1948 = scalar_lea.vmem %s13, 1
    %v1949 = vld [vmem:[%s1948] sm:$0x1]
    %v1951 = vperm.slane %v1949, 0
    %v1953 = vadd.f32 %v1586, %v1951
    %v1954 = vadd.f32 %v1947, %v1951
    %v1955 = vadd.f32 %v1180, %v1953
    %v1956 = vadd.f32 %v1181, %v1954
    %s1957 = scalar_lea.vmem %s15, 1
    %v1958 = vld [vmem:[%s1957] sm:$0x1]
    %s1959 = scalar_lea.vmem %s17, 1
    %v1960 = vld [vmem:[%s1959] sm:$0x1]
    %v1961 = vsel %vm200, %v1955, 0.0
    %1962 = vadd.xlane.f32.xlu0 %v1961
    %v1963 = vpop.xlane.xlu0 %1962
    %v1964 = vsel %vm200, %v1956, 0.0
    %1965 = vadd.xlane.f32.xlu0 %v1964
    %v1966 = vpop.xlane.xlu0 %1965
    %v1967 = vmul.f32 %v1963, %v977
    %v1968 = vmul.f32 %v1966, %v977
    %v1969 = vsub.f32 %v1955, %v1967
    %v1970 = vsub.f32 %v1956, %v1968
    %v1971 = vmul.f32 %v1969, %v1969
    %v1972 = vmul.f32 %v1970, %v1970
    %v1973 = vsel %vm200, %v1971, 0.0
    %1974 = vadd.xlane.f32.xlu0 %v1973
    %v1975 = vpop.xlane.xlu0 %1974
    %v1976 = vsel %vm200, %v1972, 0.0
    %1977 = vadd.xlane.f32.xlu0 %v1976
    %v1978 = vpop.xlane.xlu0 %1977
    %v1979 = vmul.f32 %v1975, %v977
    %v1980 = vmul.f32 %v1978, %v977
    %v1981 = vadd.f32 %v1979, 1e-05
    %v1982 = vadd.f32 %v1980, 1e-05
    %v1983 = vrsqrt.pop %v1981
    %v1984 = vmul.f32 %v1983, %v1981
    %v1985 = vmul.f32 %v1984, %v1983
    %v1986 = vmul.f32 0.5, %v1985
    %v1987 = vsub.f32 1.5, %v1986
    %v1988 = vmul.f32 %v1983, %v1987
    %vm1989 = vweird.f32 %v1981
    %vm1990 = vweird.f32 %v1983
    %vm1991 = vmor %vm1989, %vm1990
    %v1992 = vsel %vm1991, %v1983, %v1988
    %v1993 = vrsqrt.pop %v1982
    %v1994 = vmul.f32 %v1993, %v1982
    %v1995 = vmul.f32 %v1994, %v1993
    %v1996 = vmul.f32 0.5, %v1995
    %v1997 = vsub.f32 1.5, %v1996
    %v1998 = vmul.f32 %v1993, %v1997
    %vm1999 = vweird.f32 %v1982
    %vm2000 = vweird.f32 %v1993
    %vm2001 = vmor %vm1999, %vm2000
    %v2002 = vsel %vm2001, %v1993, %v1998
    %v2003 = vmul.f32 %v1969, %v1992
    %v2004 = vmul.f32 %v1970, %v2002
    %v2006 = vperm.slane %v1958, 0
    %v2008 = vmul.f32 %v2003, %v2006
    %v2009 = vmul.f32 %v2004, %v2006
    %v2011 = vperm.slane %v1960, 0
    %v2013 = vadd.f32 %v2008, %v2011
    %v2014 = vadd.f32 %v2009, %v2011
    %s2015 = scalar_lea.vmem %s19, 32
    %v2016 = vld [vmem:[%s2015] sm:$0xff]
    %v2017 = vld [vmem:[%s2015 + $0x8] sm:$0xff]
    %v2018 = vld [vmem:[%s2015 + $0x10] sm:$0xff]
    %v2019 = vld [vmem:[%s2015 + $0x18] sm:$0xff]
    %s2020 = scalar_lea.vmem %s21, 1
    %v2021 = vld [vmem:[%s2020] sm:$0x1]
    %v2023 = vperm.slane %v2021, 0
    %v2026 = vsel %vm200, %v2013, 0
    %v2029 = vsel %vm200, %v2014, 0
    %2031 = vmatpush.msra.mxu0 0.0
    %2032 = vmatpush.msra.mxu0 0.0
    %2033 = vmatpush.msra.mxu0 0.0
    %2034 = vmatpush.msra.mxu0 0.0
    %2035 = vmatpush.msra.mxu0 0.0
    %2036 = vmatpush.msra.mxu0 0.0
    %2037 = vmatpush.msra.mxu0 0.0
    %2038 = vmatpush.msra.mxu0 0.0
    %2039 = vmatpush.msra.mxu0 0.0
    %2040 = vmatpush.msra.mxu0 0.0
    %2041 = vmatpush.msra.mxu0 0.0
    %2042 = vmatpush.msra.mxu0 0.0
    %2043 = vmatpush.msra.mxu0 %v2019
    %2044 = vmatpush.msra.mxu0 %v2018
    %2045 = vmatpush.msra.mxu0 %v2017
    %2046 = vmatpush.msra.mxu0 %v2016
    %2047 = vmatmul.f32.gmra.mxu0 %v2026
    %v2048 = vpop.f32.mrf.mxu0
    %v2049 = vadd.f32 %v2023, %v2048
    %2050 = vmatmul.f32.gmra.mxu0 %v2029
    %v2051 = vpop.f32.mrf.mxu0
    %v2052 = vadd.f32 %v2023, %v2051
    %2053 = vdwg.mxu0
    %v2054 = vmul.f32 %v2049, 0.5
    %v2055 = vmul.f32 %v2052, 0.5
    %v2056 = vmul.f32 %v2049, 0.044715
    %v2057 = vmul.f32 %v2052, 0.044715
    %v2058 = vmul.f32 %v2056, %v2049
    %v2059 = vmul.f32 %v2057, %v2052
    %v2060 = vmul.f32 %v2058, %v2049
    %v2061 = vmul.f32 %v2059, %v2052
    %v2062 = vadd.f32 %v2049, %v2060
    %v2063 = vadd.f32 %v2052, %v2061
    %v2064 = vmul.f32 %v2062, 0.7978846
    %v2065 = vmul.f32 %v2063, 0.7978846
    %v2066 = vtanh.pop %v2064
    %v2067 = vtanh.pop %v2065
    %v2068 = vadd.f32 %v2066, 1.0
    %v2069 = vadd.f32 %v2067, 1.0
    %v2070 = vmul.f32 %v2054, %v2068
    %v2071 = vmul.f32 %v2055, %v2069
    %s2072 = scalar_lea.vmem %s23, 128
    %v2073 = vld [vmem:[%s2072] sm:$0xff]
    %v2074 = vld [vmem:[%s2072 + $0x8] sm:$0xff]
    %v2075 = vld [vmem:[%s2072 + $0x10] sm:$0xff]
    %v2076 = vld [vmem:[%s2072 + $0x18] sm:$0xff]
    %v2077 = vld [vmem:[%s2072 + $0x20] sm:$0xff]
    %v2078 = vld [vmem:[%s2072 + $0x28] sm:$0xff]
    %v2079 = vld [vmem:[%s2072 + $0x30] sm:$0xff]
    %v2080 = vld [vmem:[%s2072 + $0x38] sm:$0xff]
    %v2081 = vld [vmem:[%s2072 + $0x40] sm:$0xff]
    %v2082 = vld [vmem:[%s2072 + $0x48] sm:$0xff]
    %v2083 = vld [vmem:[%s2072 + $0x50] sm:$0xff]
    %v2084 = vld [vmem:[%s2072 + $0x58] sm:$0xff]
    %v2085 = vld [vmem:[%s2072 + $0x60] sm:$0xff]
    %v2086 = vld [vmem:[%s2072 + $0x68] sm:$0xff]
    %v2087 = vld [vmem:[%s2072 + $0x70] sm:$0xff]
    %v2088 = vld [vmem:[%s2072 + $0x78] sm:$0xff]
    %s2089 = scalar_lea.vmem %s25, 1
    %v2090 = vld [vmem:[%s2089] sm:$0x1]
    %v2092 = vperm.slane %v2090, 0
    %2094 = vmatpush.msra.mxu0 %v2088
    %2095 = vmatpush.msra.mxu0 %v2087
    %2096 = vmatpush.msra.mxu0 %v2086
    %2097 = vmatpush.msra.mxu0 %v2085
    %2098 = vmatpush.msra.mxu0 %v2084
    %2099 = vmatpush.msra.mxu0 %v2083
    %2100 = vmatpush.msra.mxu0 %v2082
    %2101 = vmatpush.msra.mxu0 %v2081
    %2102 = vmatpush.msra.mxu0 %v2080
    %2103 = vmatpush.msra.mxu0 %v2079
    %2104 = vmatpush.msra.mxu0 %v2078
    %2105 = vmatpush.msra.mxu0 %v2077
    %2106 = vmatpush.msra.mxu0 %v2076
    %2107 = vmatpush.msra.mxu0 %v2075
    %2108 = vmatpush.msra.mxu0 %v2074
    %2109 = vmatpush.msra.mxu0 %v2073
    %2110 = vmatmul.f32.gmra.mxu0 %v2070
    %v2111 = vpop.f32.mrf.mxu0
    %v2112 = vadd.f32 %v2092, %v2111
    %2113 = vmatmul.f32.gmra.mxu0 %v2071
    %v2114 = vpop.f32.mrf.mxu0
    %v2115 = vadd.f32 %v2092, %v2114
    %2116 = vdwg.mxu0
    %v2117 = vadd.f32 %v2013, %v2112
    %v2118 = vadd.f32 %v2014, %v2115
    %s2119 = scalar_lea.vmem %s27, 1
    %v2120 = vld [vmem:[%s2119] sm:$0x1]
    %s2121 = scalar_lea.vmem %s29, 1
    %v2122 = vld [vmem:[%s2121] sm:$0x1]
    %v2123 = vsel %vm200, %v2117, 0.0
    %2124 = vadd.xlane.f32.xlu0 %v2123
    %v2125 = vpop.xlane.xlu0 %2124
    %v2126 = vsel %vm200, %v2118, 0.0
    %2127 = vadd.xlane.f32.xlu0 %v2126
    %v2128 = vpop.xlane.xlu0 %2127
    %v2129 = vmul.f32 %v2125, %v977
    %v2130 = vmul.f32 %v2128, %v977
    %v2131 = vsub.f32 %v2117, %v2129
    %v2132 = vsub.f32 %v2118, %v2130
    %v2133 = vmul.f32 %v2131, %v2131
    %v2134 = vmul.f32 %v2132, %v2132
    %v2135 = vsel %vm200, %v2133, 0.0
    %2136 = vadd.xlane.f32.xlu0 %v2135
    %v2137 = vpop.xlane.xlu0 %2136
    %v2138 = vsel %vm200, %v2134, 0.0
    %2139 = vadd.xlane.f32.xlu0 %v2138
    %v2140 = vpop.xlane.xlu0 %2139
    %v2141 = vmul.f32 %v2137, %v977
    %v2142 = vmul.f32 %v2140, %v977
    %v2143 = vadd.f32 %v2141, 1e-05
    %v2144 = vadd.f32 %v2142, 1e-05
    %v2145 = vrsqrt.pop %v2143
    %v2146 = vmul.f32 %v2145, %v2143
    %v2147 = vmul.f32 %v2146, %v2145
    %v2148 = vmul.f32 0.5, %v2147
    %v2149 = vsub.f32 1.5, %v2148
    %v2150 = vmul.f32 %v2145, %v2149
    %vm2151 = vweird.f32 %v2143
    %vm2152 = vweird.f32 %v2145
    %vm2153 = vmor %vm2151, %vm2152
    %v2154 = vsel %vm2153, %v2145, %v2150
    %v2155 = vrsqrt.pop %v2144
    %v2156 = vmul.f32 %v2155, %v2144
    %v2157 = vmul.f32 %v2156, %v2155
    %v2158 = vmul.f32 0.5, %v2157
    %v2159 = vsub.f32 1.5, %v2158
    %v2160 = vmul.f32 %v2155, %v2159
    %vm2161 = vweird.f32 %v2144
    %vm2162 = vweird.f32 %v2155
    %vm2163 = vmor %vm2161, %vm2162
    %v2164 = vsel %vm2163, %v2155, %v2160
    %v2165 = vmul.f32 %v2131, %v2154
    %v2166 = vmul.f32 %v2132, %v2164
    %v2168 = vperm.slane %v2120, 0
    %v2170 = vmul.f32 %v2165, %v2168
    %v2171 = vmul.f32 %v2166, %v2168
    %v2173 = vperm.slane %v2122, 0
    %v2175 = vadd.f32 %v2170, %v2173
    %v2176 = vadd.f32 %v2171, %v2173
    %s2177 = scalar_lea.vmem %s11, 64
    %v2178 = vld [vmem:[%s2177] sm:$0xff]
    %v2179 = vld [vmem:[%s2177 + $0x8] sm:$0xff]
    %v2180 = vld [vmem:[%s2177 + $0x10] sm:$0xff]
    %v2181 = vld [vmem:[%s2177 + $0x18] sm:$0xff]
    %s2182 = scalar_lea.vmem %s7, 64
    %v2183 = vld [vmem:[%s2182] sm:$0xff]
    %v2184 = vld [vmem:[%s2182 + $0x8] sm:$0xff]
    %v2185 = vld [vmem:[%s2182 + $0x10] sm:$0xff]
    %v2186 = vld [vmem:[%s2182 + $0x18] sm:$0xff]
    %s2187 = scalar_lea.vmem %s9, 2
    %v2188 = vld [vmem:[%s2187] sm:$0x1]
    %v2190 = vperm.slane %v2188, 0
    %v2193 = vsel %vm200, %v2175, 0
    %v2196 = vsel %vm200, %v2176, 0
    %2198 = vmatpush.msra.mxu0 0.0
    %2199 = vmatpush.msra.mxu0 0.0
    %2200 = vmatpush.msra.mxu0 0.0
    %2201 = vmatpush.msra.mxu0 0.0
    %2202 = vmatpush.msra.mxu0 0.0
    %2203 = vmatpush.msra.mxu0 0.0
    %2204 = vmatpush.msra.mxu0 0.0
    %2205 = vmatpush.msra.mxu0 0.0
    %2206 = vmatpush.msra.mxu0 0.0
    %2207 = vmatpush.msra.mxu0 0.0
    %2208 = vmatpush.msra.mxu0 0.0
    %2209 = vmatpush.msra.mxu0 0.0
    %2210 = vmatpush.msra.mxu0 %v2186
    %2211 = vmatpush.msra.mxu0 %v2185
    %2212 = vmatpush.msra.mxu0 %v2184
    %2213 = vmatpush.msra.mxu0 %v2183
    %2214 = vmatmul.f32.gmra.mxu0 %v2193
    %v2215 = vpop.f32.mrf.mxu0
    %v2216 = vadd.f32 %v2190, %v2215
    %2217 = vmatmul.f32.gmra.mxu0 %v2196
    %v2218 = vpop.f32.mrf.mxu0
    %v2219 = vadd.f32 %v2190, %v2218
    %2220 = vdwg.mxu0
    %2222 = vrot.lane.b32.xlu0 %v2216, 96
    %v2223 = vpop.permute.xlu0 %2222
    %v2224 = vsel %vm233, %v2216, 0
    %v2226 = vsel %vm233, %v2223, 0
    %2228 = vmatpush.xpose.msra.mxu0 0.0
    %2229 = vmatpush.xpose.msra.mxu0 0.0
    %2230 = vmatpush.xpose.msra.mxu0 0.0
    %2231 = vmatpush.xpose.msra.mxu0 0.0
    %2232 = vmatpush.xpose.msra.mxu0 0.0
    %2233 = vmatpush.xpose.msra.mxu0 0.0
    %2234 = vmatpush.xpose.msra.mxu0 0.0
    %2235 = vmatpush.xpose.msra.mxu0 0.0
    %2236 = vmatpush.xpose.msra.mxu0 0.0
    %2237 = vmatpush.xpose.msra.mxu0 0.0
    %2238 = vmatpush.xpose.msra.mxu0 0.0
    %2239 = vmatpush.xpose.msra.mxu0 0.0
    %2240 = vmatpush.xpose.msra.mxu0 0.0
    %2241 = vmatpush.xpose.msra.mxu0 0.0
    %2242 = vmatpush.xpose.msra.mxu0 0.0
    %2243 = vmatpush.xpose.msra.mxu0 %v2226
    %2244 = vmatmul.f32.gmra.mxu0 %v2224
    %v2245 = vpop.f32.mrf.mxu0
    %v2246 = vadd.f32 0.0, %v2245
    %2247 = vdwg.mxu0
    %v2248 = vmul.f32 %v2246, 0.35355338
    %v2249 = vadd.f32 %v2248, %v259
    %v2250 = vsel %vm233, %v2249, -inf
    %2251 = vmax.xlane.f32.xlu0 %v2250
    %v2252 = vpop.xlane.xlu0 %2251
    %v2253 = vsub.f32 %v2249, %v2252
    %v2254 = vmul.f32 %v2253, 1.442695
    %v2255 = vpow.pop %v2254
    %v2256 = vsel %vm233, %v2255, 0.0
    %2257 = vadd.xlane.f32.xlu0 %v2256
    %v2258 = vpop.xlane.xlu0 %2257
    %v2259 = vrcp.pop %v2258
    %v2260 = vmul.f32 %v2255, %v2259
    %2261 = vrot.lane.b32.xlu0 %v2216, 64
    %v2262 = vpop.permute.xlu0 %2261
    %v2265 = vsel %vm233, %v2260, 0
    %2267 = vmatpush.msra.mxu0 0.0
    %2268 = vmatpush.msra.mxu0 0.0
    %2269 = vmatpush.msra.mxu0 0.0
    %2270 = vmatpush.msra.mxu0 0.0
    %2271 = vmatpush.msra.mxu0 0.0
    %2272 = vmatpush.msra.mxu0 0.0
    %2273 = vmatpush.msra.mxu0 0.0
    %2274 = vmatpush.msra.mxu0 0.0
    %2275 = vmatpush.msra.mxu0 0.0
    %2276 = vmatpush.msra.mxu0 0.0
    %2277 = vmatpush.msra.mxu0 0.0
    %2278 = vmatpush.msra.mxu0 0.0
    %2279 = vmatpush.msra.mxu0 0.0
    %2280 = vmatpush.msra.mxu0 0.0
    %2281 = vmatpush.msra.mxu0 0.0
    %2282 = vmatpush.msra.mxu0 %v2262
    %2283 = vmatmul.f32.gmra.mxu0 %v2265
    %v2284 = vpop.f32.mrf.mxu0
    %v2285 = vadd.f32 0.0, %v2284
    %2286 = vdwg.mxu0
    %2287 = vrot.lane.b32.xlu0 %v2216, 120
    %v2288 = vpop.permute.xlu0 %2287
    %2289 = vrot.lane.b32.xlu0 %v2216, 88
    %v2290 = vpop.permute.xlu0 %2289
    %v2291 = vsel %vm233, %v2288, 0
    %v2293 = vsel %vm233, %v2290, 0
    %2295 = vmatpush.xpose.msra.mxu0 0.0
    %2296 = vmatpush.xpose.msra.mxu0 0.0
    %2297 = vmatpush.xpose.msra.mxu0 0.0
    %2298 = vmatpush.xpose.msra.mxu0 0.0
    %2299 = vmatpush.xpose.msra.mxu0 0.0
    %2300 = vmatpush.xpose.msra.mxu0 0.0
    %2301 = vmatpush.xpose.msra.mxu0 0.0
    %2302 = vmatpush.xpose.msra.mxu0 0.0
    %2303 = vmatpush.xpose.msra.mxu0 0.0
    %2304 = vmatpush.xpose.msra.mxu0 0.0
    %2305 = vmatpush.xpose.msra.mxu0 0.0
    %2306 = vmatpush.xpose.msra.mxu0 0.0
    %2307 = vmatpush.xpose.msra.mxu0 0.0
    %2308 = vmatpush.xpose.msra.mxu0 0.0
    %2309 = vmatpush.xpose.msra.mxu0 0.0
    %2310 = vmatpush.xpose.msra.mxu0 %v2293
    %2311 = vmatmul.f32.gmra.mxu0 %v2291
    %v2312 = vpop.f32.mrf.mxu0
    %v2313 = vadd.f32 0.0, %v2312
    %2314 = vdwg.mxu0
    %v2315 = vmul.f32 %v2313, 0.35355338
    %v2316 = vadd.f32 %v2315, %v259
    %v2317 = vsel %vm233, %v2316, -inf
    %2318 = vmax.xlane.f32.xlu0 %v2317
    %v2319 = vpop.xlane.xlu0 %2318
    %v2320 = vsub.f32 %v2316, %v2319
    %v2321 = vmul.f32 %v2320, 1.442695
    %v2322 = vpow.pop %v2321
    %v2323 = vsel %vm233, %v2322, 0.0
    %2324 = vadd.xlane.f32.xlu0 %v2323
    %v2325 = vpop.xlane.xlu0 %2324
    %v2326 = vrcp.pop %v2325
    %v2327 = vmul.f32 %v2322, %v2326
    %2328 = vrot.lane.b32.xlu0 %v2216, 56
    %v2329 = vpop.permute.xlu0 %2328
    %v2332 = vsel %vm233, %v2327, 0
    %2334 = vmatpush.msra.mxu0 0.0
    %2335 = vmatpush.msra.mxu0 0.0
    %2336 = vmatpush.msra.mxu0 0.0
    %2337 = vmatpush.msra.mxu0 0.0
    %2338 = vmatpush.msra.mxu0 0.0
    %2339 = vmatpush.msra.mxu0 0.0
    %2340 = vmatpush.msra.mxu0 0.0
    %2341 = vmatpush.msra.mxu0 0.0
    %2342 = vmatpush.msra.mxu0 0.0
    %2343 = vmatpush.msra.mxu0 0.0
    %2344 = vmatpush.msra.mxu0 0.0
    %2345 = vmatpush.msra.mxu0 0.0
    %2346 = vmatpush.msra.mxu0 0.0
    %2347 = vmatpush.msra.mxu0 0.0
    %2348 = vmatpush.msra.mxu0 0.0
    %2349 = vmatpush.msra.mxu0 %v2329
    %2350 = vmatmul.f32.gmra.mxu0 %v2332
    %v2351 = vpop.f32.mrf.mxu0
    %v2352 = vadd.f32 0.0, %v2351
    %2353 = vdwg.mxu0
    %v2355 = vsel %vm233, %v2352, 0
    %2357 = vmatpush.msra.mxu0 0.0
    %2358 = vmatpush.msra.mxu0 0.0
    %2359 = vmatpush.msra.mxu0 0.0
    %2360 = vmatpush.msra.mxu0 0.0
    %2361 = vmatpush.msra.mxu0 0.0
    %2362 = vmatpush.msra.mxu0 0.0
    %2363 = vmatpush.msra.mxu0 0.0
    %2364 = vmatpush.msra.mxu0 0.0
    %2365 = vmatpush.msra.mxu0 0.0
    %2366 = vmatpush.msra.mxu0 0.0
    %2367 = vmatpush.msra.mxu0 0.0
    %2368 = vmatpush.msra.mxu0 0.0
    %2369 = vmatpush.msra.mxu0 0.0
    %2370 = vmatpush.msra.mxu0 0.0
    %2371 = vmatpush.msra.mxu0 0.0
    %2372 = vmatpush.msra.mxu0 %v2179
    %2373 = vmatmul.f32.gmra.mxu0 %v2355
    %v2374 = vpop.f32.mrf.mxu0
    %v2375 = vadd.f32 0.0, %v2374
    %2376 = vdwg.mxu0
    %v2378 = vsel %vm233, %v2285, 0
    %2380 = vmatpush.msra.mxu0 0.0
    %2381 = vmatpush.msra.mxu0 0.0
    %2382 = vmatpush.msra.mxu0 0.0
    %2383 = vmatpush.msra.mxu0 0.0
    %2384 = vmatpush.msra.mxu0 0.0
    %2385 = vmatpush.msra.mxu0 0.0
    %2386 = vmatpush.msra.mxu0 0.0
    %2387 = vmatpush.msra.mxu0 0.0
    %2388 = vmatpush.msra.mxu0 0.0
    %2389 = vmatpush.msra.mxu0 0.0
    %2390 = vmatpush.msra.mxu0 0.0
    %2391 = vmatpush.msra.mxu0 0.0
    %2392 = vmatpush.msra.mxu0 0.0
    %2393 = vmatpush.msra.mxu0 0.0
    %2394 = vmatpush.msra.mxu0 0.0
    %2395 = vmatpush.msra.mxu0 %v2178
    %2396 = vmatmul.f32.gmra.mxu0 %v2378
    %v2397 = vpop.f32.mrf.mxu0
    %v2398 = vadd.f32 %v2375, %v2397
    %2399 = vdwg.mxu0
    %2400 = vrot.lane.b32.xlu0 %v2216, 112
    %v2401 = vpop.permute.xlu0 %2400
    %2402 = vrot.lane.b32.xlu0 %v2216, 80
    %v2403 = vpop.permute.xlu0 %2402
    %v2404 = vsel %vm233, %v2401, 0
    %v2406 = vsel %vm233, %v2403, 0
    %2408 = vmatpush.xpose.msra.mxu0 0.0
    %2409 = vmatpush.xpose.msra.mxu0 0.0
    %2410 = vmatpush.xpose.msra.mxu0 0.0
    %2411 = vmatpush.xpose.msra.mxu0 0.0
    %2412 = vmatpush.xpose.msra.mxu0 0.0
    %2413 = vmatpush.xpose.msra.mxu0 0.0
    %2414 = vmatpush.xpose.msra.mxu0 0.0
    %2415 = vmatpush.xpose.msra.mxu0 0.0
    %2416 = vmatpush.xpose.msra.mxu0 0.0
    %2417 = vmatpush.xpose.msra.mxu0 0.0
    %2418 = vmatpush.xpose.msra.mxu0 0.0
    %2419 = vmatpush.xpose.msra.mxu0 0.0
    %2420 = vmatpush.xpose.msra.mxu0 0.0
    %2421 = vmatpush.xpose.msra.mxu0 0.0
    %2422 = vmatpush.xpose.msra.mxu0 0.0
    %2423 = vmatpush.xpose.msra.mxu0 %v2406
    %2424 = vmatmul.f32.gmra.mxu0 %v2404
    %v2425 = vpop.f32.mrf.mxu0
    %v2426 = vadd.f32 0.0, %v2425
    %2427 = vdwg.mxu0
    %v2428 = vmul.f32 %v2426, 0.35355338
    %v2429 = vadd.f32 %v2428, %v259
    %v2430 = vsel %vm233, %v2429, -inf
    %2431 = vmax.xlane.f32.xlu0 %v2430
    %v2432 = vpop.xlane.xlu0 %2431
    %v2433 = vsub.f32 %v2429, %v2432
    %v2434 = vmul.f32 %v2433, 1.442695
    %v2435 = vpow.pop %v2434
    %v2436 = vsel %vm233, %v2435, 0.0
    %2437 = vadd.xlane.f32.xlu0 %v2436
    %v2438 = vpop.xlane.xlu0 %2437
    %v2439 = vrcp.pop %v2438
    %v2440 = vmul.f32 %v2435, %v2439
    %2441 = vrot.lane.b32.xlu0 %v2216, 48
    %v2442 = vpop.permute.xlu0 %2441
    %v2445 = vsel %vm233, %v2440, 0
    %2447 = vmatpush.msra.mxu0 0.0
    %2448 = vmatpush.msra.mxu0 0.0
    %2449 = vmatpush.msra.mxu0 0.0
    %2450 = vmatpush.msra.mxu0 0.0
    %2451 = vmatpush.msra.mxu0 0.0
    %2452 = vmatpush.msra.mxu0 0.0
    %2453 = vmatpush.msra.mxu0 0.0
    %2454 = vmatpush.msra.mxu0 0.0
    %2455 = vmatpush.msra.mxu0 0.0
    %2456 = vmatpush.msra.mxu0 0.0
    %2457 = vmatpush.msra.mxu0 0.0
    %2458 = vmatpush.msra.mxu0 0.0
    %2459 = vmatpush.msra.mxu0 0.0
    %2460 = vmatpush.msra.mxu0 0.0
    %2461 = vmatpush.msra.mxu0 0.0
    %2462 = vmatpush.msra.mxu0 %v2442
    %2463 = vmatmul.f32.gmra.mxu0 %v2445
    %v2464 = vpop.f32.mrf.mxu0
    %v2465 = vadd.f32 0.0, %v2464
    %2466 = vdwg.mxu0
    %v2468 = vsel %vm233, %v2465, 0
    %2470 = vmatpush.msra.mxu0 0.0
    %2471 = vmatpush.msra.mxu0 0.0
    %2472 = vmatpush.msra.mxu0 0.0
    %2473 = vmatpush.msra.mxu0 0.0
    %2474 = vmatpush.msra.mxu0 0.0
    %2475 = vmatpush.msra.mxu0 0.0
    %2476 = vmatpush.msra.mxu0 0.0
    %2477 = vmatpush.msra.mxu0 0.0
    %2478 = vmatpush.msra.mxu0 0.0
    %2479 = vmatpush.msra.mxu0 0.0
    %2480 = vmatpush.msra.mxu0 0.0
    %2481 = vmatpush.msra.mxu0 0.0
    %2482 = vmatpush.msra.mxu0 0.0
    %2483 = vmatpush.msra.mxu0 0.0
    %2484 = vmatpush.msra.mxu0 0.0
    %2485 = vmatpush.msra.mxu0 %v2180
    %2486 = vmatmul.f32.gmra.mxu0 %v2468
    %v2487 = vpop.f32.mrf.mxu0
    %v2488 = vadd.f32 0.0, %v2487
    %2489 = vdwg.mxu0
    %v2490 = vadd.f32 %v2398, %v2488
    %2491 = vrot.lane.b32.xlu0 %v2216, 104
    %v2492 = vpop.permute.xlu0 %2491
    %2493 = vrot.lane.b32.xlu0 %v2216, 72
    %v2494 = vpop.permute.xlu0 %2493
    %v2495 = vsel %vm233, %v2492, 0
    %v2497 = vsel %vm233, %v2494, 0
    %2499 = vmatpush.xpose.msra.mxu0 0.0
    %2500 = vmatpush.xpose.msra.mxu0 0.0
    %2501 = vmatpush.xpose.msra.mxu0 0.0
    %2502 = vmatpush.xpose.msra.mxu0 0.0
    %2503 = vmatpush.xpose.msra.mxu0 0.0
    %2504 = vmatpush.xpose.msra.mxu0 0.0
    %2505 = vmatpush.xpose.msra.mxu0 0.0
    %2506 = vmatpush.xpose.msra.mxu0 0.0
    %2507 = vmatpush.xpose.msra.mxu0 0.0
    %2508 = vmatpush.xpose.msra.mxu0 0.0
    %2509 = vmatpush.xpose.msra.mxu0 0.0
    %2510 = vmatpush.xpose.msra.mxu0 0.0
    %2511 = vmatpush.xpose.msra.mxu0 0.0
    %2512 = vmatpush.xpose.msra.mxu0 0.0
    %2513 = vmatpush.xpose.msra.mxu0 0.0
    %2514 = vmatpush.xpose.msra.mxu0 %v2497
    %2515 = vmatmul.f32.gmra.mxu0 %v2495
    %v2516 = vpop.f32.mrf.mxu0
    %v2517 = vadd.f32 0.0, %v2516
    %2518 = vdwg.mxu0
    %v2519 = vmul.f32 %v2517, 0.35355338
    %v2520 = vadd.f32 %v2519, %v259
    %v2521 = vsel %vm233, %v2520, -inf
    %2522 = vmax.xlane.f32.xlu0 %v2521
    %v2523 = vpop.xlane.xlu0 %2522
    %v2524 = vsub.f32 %v2520, %v2523
    %v2525 = vmul.f32 %v2524, 1.442695
    %v2526 = vpow.pop %v2525
    %v2527 = vsel %vm233, %v2526, 0.0
    %2528 = vadd.xlane.f32.xlu0 %v2527
    %v2529 = vpop.xlane.xlu0 %2528
    %v2530 = vrcp.pop %v2529
    %v2531 = vmul.f32 %v2526, %v2530
    %2532 = vrot.lane.b32.xlu0 %v2216, 40
    %v2533 = vpop.permute.xlu0 %2532
    %v2536 = vsel %vm233, %v2531, 0
    %2538 = vmatpush.msra.mxu0 0.0
    %2539 = vmatpush.msra.mxu0 0.0
    %2540 = vmatpush.msra.mxu0 0.0
    %2541 = vmatpush.msra.mxu0 0.0
    %2542 = vmatpush.msra.mxu0 0.0
    %2543 = vmatpush.msra.mxu0 0.0
    %2544 = vmatpush.msra.mxu0 0.0
    %2545 = vmatpush.msra.mxu0 0.0
    %2546 = vmatpush.msra.mxu0 0.0
    %2547 = vmatpush.msra.mxu0 0.0
    %2548 = vmatpush.msra.mxu0 0.0
    %2549 = vmatpush.msra.mxu0 0.0
    %2550 = vmatpush.msra.mxu0 0.0
    %2551 = vmatpush.msra.mxu0 0.0
    %2552 = vmatpush.msra.mxu0 0.0
    %2553 = vmatpush.msra.mxu0 %v2533
    %2554 = vmatmul.f32.gmra.mxu0 %v2536
    %v2555 = vpop.f32.mrf.mxu0
    %v2556 = vadd.f32 0.0, %v2555
    %2557 = vdwg.mxu0
    %v2559 = vsel %vm233, %v2556, 0
    %2561 = vmatpush.msra.mxu0 0.0
    %2562 = vmatpush.msra.mxu0 0.0
    %2563 = vmatpush.msra.mxu0 0.0
    %2564 = vmatpush.msra.mxu0 0.0
    %2565 = vmatpush.msra.mxu0 0.0
    %2566 = vmatpush.msra.mxu0 0.0
    %2567 = vmatpush.msra.mxu0 0.0
    %2568 = vmatpush.msra.mxu0 0.0
    %2569 = vmatpush.msra.mxu0 0.0
    %2570 = vmatpush.msra.mxu0 0.0
    %2571 = vmatpush.msra.mxu0 0.0
    %2572 = vmatpush.msra.mxu0 0.0
    %2573 = vmatpush.msra.mxu0 0.0
    %2574 = vmatpush.msra.mxu0 0.0
    %2575 = vmatpush.msra.mxu0 0.0
    %2576 = vmatpush.msra.mxu0 %v2181
    %2577 = vmatmul.f32.gmra.mxu0 %v2559
    %v2578 = vpop.f32.mrf.mxu0
    %v2579 = vadd.f32 0.0, %v2578
    %2580 = vdwg.mxu0
    %v2581 = vadd.f32 %v2490, %v2579
    %2583 = vrot.lane.b32.xlu0 %v2219, 96
    %v2584 = vpop.permute.xlu0 %2583
    %v2585 = vsel %vm233, %v2219, 0
    %v2587 = vsel %vm233, %v2584, 0
    %2589 = vmatpush.xpose.msra.mxu0 0.0
    %2590 = vmatpush.xpose.msra.mxu0 0.0
    %2591 = vmatpush.xpose.msra.mxu0 0.0
    %2592 = vmatpush.xpose.msra.mxu0 0.0
    %2593 = vmatpush.xpose.msra.mxu0 0.0
    %2594 = vmatpush.xpose.msra.mxu0 0.0
    %2595 = vmatpush.xpose.msra.mxu0 0.0
    %2596 = vmatpush.xpose.msra.mxu0 0.0
    %2597 = vmatpush.xpose.msra.mxu0 0.0
    %2598 = vmatpush.xpose.msra.mxu0 0.0
    %2599 = vmatpush.xpose.msra.mxu0 0.0
    %2600 = vmatpush.xpose.msra.mxu0 0.0
    %2601 = vmatpush.xpose.msra.mxu0 0.0
    %2602 = vmatpush.xpose.msra.mxu0 0.0
    %2603 = vmatpush.xpose.msra.mxu0 0.0
    %2604 = vmatpush.xpose.msra.mxu0 %v2587
    %2605 = vmatmul.f32.gmra.mxu0 %v2585
    %v2606 = vpop.f32.mrf.mxu0
    %v2607 = vadd.f32 0.0, %v2606
    %2608 = vdwg.mxu0
    %v2609 = vmul.f32 %v2607, 0.35355338
    %v2610 = vadd.f32 %v2609, %v621
    %v2611 = vsel %vm233, %v2610, -inf
    %2612 = vmax.xlane.f32.xlu0 %v2611
    %v2613 = vpop.xlane.xlu0 %2612
    %v2614 = vsub.f32 %v2610, %v2613
    %v2615 = vmul.f32 %v2614, 1.442695
    %v2616 = vpow.pop %v2615
    %v2617 = vsel %vm233, %v2616, 0.0
    %2618 = vadd.xlane.f32.xlu0 %v2617
    %v2619 = vpop.xlane.xlu0 %2618
    %v2620 = vrcp.pop %v2619
    %v2621 = vmul.f32 %v2616, %v2620
    %2622 = vrot.lane.b32.xlu0 %v2219, 64
    %v2623 = vpop.permute.xlu0 %2622
    %v2626 = vsel %vm233, %v2621, 0
    %2628 = vmatpush.msra.mxu0 0.0
    %2629 = vmatpush.msra.mxu0 0.0
    %2630 = vmatpush.msra.mxu0 0.0
    %2631 = vmatpush.msra.mxu0 0.0
    %2632 = vmatpush.msra.mxu0 0.0
    %2633 = vmatpush.msra.mxu0 0.0
    %2634 = vmatpush.msra.mxu0 0.0
    %2635 = vmatpush.msra.mxu0 0.0
    %2636 = vmatpush.msra.mxu0 0.0
    %2637 = vmatpush.msra.mxu0 0.0
    %2638 = vmatpush.msra.mxu0 0.0
    %2639 = vmatpush.msra.mxu0 0.0
    %2640 = vmatpush.msra.mxu0 0.0
    %2641 = vmatpush.msra.mxu0 0.0
    %2642 = vmatpush.msra.mxu0 0.0
    %2643 = vmatpush.msra.mxu0 %v2623
    %2644 = vmatmul.f32.gmra.mxu0 %v2626
    %v2645 = vpop.f32.mrf.mxu0
    %v2646 = vadd.f32 0.0, %v2645
    %2647 = vdwg.mxu0
    %2648 = vrot.lane.b32.xlu0 %v2219, 120
    %v2649 = vpop.permute.xlu0 %2648
    %2650 = vrot.lane.b32.xlu0 %v2219, 88
    %v2651 = vpop.permute.xlu0 %2650
    %v2652 = vsel %vm233, %v2649, 0
    %v2654 = vsel %vm233, %v2651, 0
    %2656 = vmatpush.xpose.msra.mxu0 0.0
    %2657 = vmatpush.xpose.msra.mxu0 0.0
    %2658 = vmatpush.xpose.msra.mxu0 0.0
    %2659 = vmatpush.xpose.msra.mxu0 0.0
    %2660 = vmatpush.xpose.msra.mxu0 0.0
    %2661 = vmatpush.xpose.msra.mxu0 0.0
    %2662 = vmatpush.xpose.msra.mxu0 0.0
    %2663 = vmatpush.xpose.msra.mxu0 0.0
    %2664 = vmatpush.xpose.msra.mxu0 0.0
    %2665 = vmatpush.xpose.msra.mxu0 0.0
    %2666 = vmatpush.xpose.msra.mxu0 0.0
    %2667 = vmatpush.xpose.msra.mxu0 0.0
    %2668 = vmatpush.xpose.msra.mxu0 0.0
    %2669 = vmatpush.xpose.msra.mxu0 0.0
    %2670 = vmatpush.xpose.msra.mxu0 0.0
    %2671 = vmatpush.xpose.msra.mxu0 %v2654
    %2672 = vmatmul.f32.gmra.mxu0 %v2652
    %v2673 = vpop.f32.mrf.mxu0
    %v2674 = vadd.f32 0.0, %v2673
    %2675 = vdwg.mxu0
    %v2676 = vmul.f32 %v2674, 0.35355338
    %v2677 = vadd.f32 %v2676, %v621
    %v2678 = vsel %vm233, %v2677, -inf
    %2679 = vmax.xlane.f32.xlu0 %v2678
    %v2680 = vpop.xlane.xlu0 %2679
    %v2681 = vsub.f32 %v2677, %v2680
    %v2682 = vmul.f32 %v2681, 1.442695
    %v2683 = vpow.pop %v2682
    %v2684 = vsel %vm233, %v2683, 0.0
    %2685 = vadd.xlane.f32.xlu0 %v2684
    %v2686 = vpop.xlane.xlu0 %2685
    %v2687 = vrcp.pop %v2686
    %v2688 = vmul.f32 %v2683, %v2687
    %2689 = vrot.lane.b32.xlu0 %v2219, 56
    %v2690 = vpop.permute.xlu0 %2689
    %v2693 = vsel %vm233, %v2688, 0
    %2695 = vmatpush.msra.mxu0 0.0
    %2696 = vmatpush.msra.mxu0 0.0
    %2697 = vmatpush.msra.mxu0 0.0
    %2698 = vmatpush.msra.mxu0 0.0
    %2699 = vmatpush.msra.mxu0 0.0
    %2700 = vmatpush.msra.mxu0 0.0
    %2701 = vmatpush.msra.mxu0 0.0
    %2702 = vmatpush.msra.mxu0 0.0
    %2703 = vmatpush.msra.mxu0 0.0
    %2704 = vmatpush.msra.mxu0 0.0
    %2705 = vmatpush.msra.mxu0 0.0
    %2706 = vmatpush.msra.mxu0 0.0
    %2707 = vmatpush.msra.mxu0 0.0
    %2708 = vmatpush.msra.mxu0 0.0
    %2709 = vmatpush.msra.mxu0 0.0
    %2710 = vmatpush.msra.mxu0 %v2690
    %2711 = vmatmul.f32.gmra.mxu0 %v2693
    %v2712 = vpop.f32.mrf.mxu0
    %v2713 = vadd.f32 0.0, %v2712
    %2714 = vdwg.mxu0
    %v2716 = vsel %vm233, %v2713, 0
    %2718 = vmatpush.msra.mxu0 0.0
    %2719 = vmatpush.msra.mxu0 0.0
    %2720 = vmatpush.msra.mxu0 0.0
    %2721 = vmatpush.msra.mxu0 0.0
    %2722 = vmatpush.msra.mxu0 0.0
    %2723 = vmatpush.msra.mxu0 0.0
    %2724 = vmatpush.msra.mxu0 0.0
    %2725 = vmatpush.msra.mxu0 0.0
    %2726 = vmatpush.msra.mxu0 0.0
    %2727 = vmatpush.msra.mxu0 0.0
    %2728 = vmatpush.msra.mxu0 0.0
    %2729 = vmatpush.msra.mxu0 0.0
    %2730 = vmatpush.msra.mxu0 0.0
    %2731 = vmatpush.msra.mxu0 0.0
    %2732 = vmatpush.msra.mxu0 0.0
    %2733 = vmatpush.msra.mxu0 %v2179
    %2734 = vmatmul.f32.gmra.mxu0 %v2716
    %v2735 = vpop.f32.mrf.mxu0
    %v2736 = vadd.f32 0.0, %v2735
    %2737 = vdwg.mxu0
    %v2739 = vsel %vm233, %v2646, 0
    %2741 = vmatpush.msra.mxu0 0.0
    %2742 = vmatpush.msra.mxu0 0.0
    %2743 = vmatpush.msra.mxu0 0.0
    %2744 = vmatpush.msra.mxu0 0.0
    %2745 = vmatpush.msra.mxu0 0.0
    %2746 = vmatpush.msra.mxu0 0.0
    %2747 = vmatpush.msra.mxu0 0.0
    %2748 = vmatpush.msra.mxu0 0.0
    %2749 = vmatpush.msra.mxu0 0.0
    %2750 = vmatpush.msra.mxu0 0.0
    %2751 = vmatpush.msra.mxu0 0.0
    %2752 = vmatpush.msra.mxu0 0.0
    %2753 = vmatpush.msra.mxu0 0.0
    %2754 = vmatpush.msra.mxu0 0.0
    %2755 = vmatpush.msra.mxu0 0.0
    %2756 = vmatpush.msra.mxu0 %v2178
    %2757 = vmatmul.f32.gmra.mxu0 %v2739
    %v2758 = vpop.f32.mrf.mxu0
    %v2759 = vadd.f32 %v2736, %v2758
    %2760 = vdwg.mxu0
    %2761 = vrot.lane.b32.xlu0 %v2219, 112
    %v2762 = vpop.permute.xlu0 %2761
    %2763 = vrot.lane.b32.xlu0 %v2219, 80
    %v2764 = vpop.permute.xlu0 %2763
    %v2765 = vsel %vm233, %v2762, 0
    %v2767 = vsel %vm233, %v2764, 0
    %2769 = vmatpush.xpose.msra.mxu0 0.0
    %2770 = vmatpush.xpose.msra.mxu0 0.0
    %2771 = vmatpush.xpose.msra.mxu0 0.0
    %2772 = vmatpush.xpose.msra.mxu0 0.0
    %2773 = vmatpush.xpose.msra.mxu0 0.0
    %2774 = vmatpush.xpose.msra.mxu0 0.0
    %2775 = vmatpush.xpose.msra.mxu0 0.0
    %2776 = vmatpush.xpose.msra.mxu0 0.0
    %2777 = vmatpush.xpose.msra.mxu0 0.0
    %2778 = vmatpush.xpose.msra.mxu0 0.0
    %2779 = vmatpush.xpose.msra.mxu0 0.0
    %2780 = vmatpush.xpose.msra.mxu0 0.0
    %2781 = vmatpush.xpose.msra.mxu0 0.0
    %2782 = vmatpush.xpose.msra.mxu0 0.0
    %2783 = vmatpush.xpose.msra.mxu0 0.0
    %2784 = vmatpush.xpose.msra.mxu0 %v2767
    %2785 = vmatmul.f32.gmra.mxu0 %v2765
    %v2786 = vpop.f32.mrf.mxu0
    %v2787 = vadd.f32 0.0, %v2786
    %2788 = vdwg.mxu0
    %v2789 = vmul.f32 %v2787, 0.35355338
    %v2790 = vadd.f32 %v2789, %v621
    %v2791 = vsel %vm233, %v2790, -inf
    %2792 = vmax.xlane.f32.xlu0 %v2791
    %v2793 = vpop.xlane.xlu0 %2792
    %v2794 = vsub.f32 %v2790, %v2793
    %v2795 = vmul.f32 %v2794, 1.442695
    %v2796 = vpow.pop %v2795
    %v2797 = vsel %vm233, %v2796, 0.0
    %2798 = vadd.xlane.f32.xlu0 %v2797
    %v2799 = vpop.xlane.xlu0 %2798
    %v2800 = vrcp.pop %v2799
    %v2801 = vmul.f32 %v2796, %v2800
    %2802 = vrot.lane.b32.xlu0 %v2219, 48
    %v2803 = vpop.permute.xlu0 %2802
    %v2806 = vsel %vm233, %v2801, 0
    %2808 = vmatpush.msra.mxu0 0.0
    %2809 = vmatpush.msra.mxu0 0.0
    %2810 = vmatpush.msra.mxu0 0.0
    %2811 = vmatpush.msra.mxu0 0.0
    %2812 = vmatpush.msra.mxu0 0.0
    %2813 = vmatpush.msra.mxu0 0.0
    %2814 = vmatpush.msra.mxu0 0.0
    %2815 = vmatpush.msra.mxu0 0.0
    %2816 = vmatpush.msra.mxu0 0.0
    %2817 = vmatpush.msra.mxu0 0.0
    %2818 = vmatpush.msra.mxu0 0.0
    %2819 = vmatpush.msra.mxu0 0.0
    %2820 = vmatpush.msra.mxu0 0.0
    %2821 = vmatpush.msra.mxu0 0.0
    %2822 = vmatpush.msra.mxu0 0.0
    %2823 = vmatpush.msra.mxu0 %v2803
    %2824 = vmatmul.f32.gmra.mxu0 %v2806
    %v2825 = vpop.f32.mrf.mxu0
    %v2826 = vadd.f32 0.0, %v2825
    %2827 = vdwg.mxu0
    %v2829 = vsel %vm233, %v2826, 0
    %2831 = vmatpush.msra.mxu0 0.0
    %2832 = vmatpush.msra.mxu0 0.0
    %2833 = vmatpush.msra.mxu0 0.0
    %2834 = vmatpush.msra.mxu0 0.0
    %2835 = vmatpush.msra.mxu0 0.0
    %2836 = vmatpush.msra.mxu0 0.0
    %2837 = vmatpush.msra.mxu0 0.0
    %2838 = vmatpush.msra.mxu0 0.0
    %2839 = vmatpush.msra.mxu0 0.0
    %2840 = vmatpush.msra.mxu0 0.0
    %2841 = vmatpush.msra.mxu0 0.0
    %2842 = vmatpush.msra.mxu0 0.0
    %2843 = vmatpush.msra.mxu0 0.0
    %2844 = vmatpush.msra.mxu0 0.0
    %2845 = vmatpush.msra.mxu0 0.0
    %2846 = vmatpush.msra.mxu0 %v2180
    %2847 = vmatmul.f32.gmra.mxu0 %v2829
    %v2848 = vpop.f32.mrf.mxu0
    %v2849 = vadd.f32 0.0, %v2848
    %2850 = vdwg.mxu0
    %v2851 = vadd.f32 %v2759, %v2849
    %2852 = vrot.lane.b32.xlu0 %v2219, 104
    %v2853 = vpop.permute.xlu0 %2852
    %2854 = vrot.lane.b32.xlu0 %v2219, 72
    %v2855 = vpop.permute.xlu0 %2854
    %v2856 = vsel %vm233, %v2853, 0
    %v2858 = vsel %vm233, %v2855, 0
    %2860 = vmatpush.xpose.msra.mxu0 0.0
    %2861 = vmatpush.xpose.msra.mxu0 0.0
    %2862 = vmatpush.xpose.msra.mxu0 0.0
    %2863 = vmatpush.xpose.msra.mxu0 0.0
    %2864 = vmatpush.xpose.msra.mxu0 0.0
    %2865 = vmatpush.xpose.msra.mxu0 0.0
    %2866 = vmatpush.xpose.msra.mxu0 0.0
    %2867 = vmatpush.xpose.msra.mxu0 0.0
    %2868 = vmatpush.xpose.msra.mxu0 0.0
    %2869 = vmatpush.xpose.msra.mxu0 0.0
    %2870 = vmatpush.xpose.msra.mxu0 0.0
    %2871 = vmatpush.xpose.msra.mxu0 0.0
    %2872 = vmatpush.xpose.msra.mxu0 0.0
    %2873 = vmatpush.xpose.msra.mxu0 0.0
    %2874 = vmatpush.xpose.msra.mxu0 0.0
    %2875 = vmatpush.xpose.msra.mxu0 %v2858
    %2876 = vmatmul.f32.gmra.mxu0 %v2856
    %v2877 = vpop.f32.mrf.mxu0
    %v2878 = vadd.f32 0.0, %v2877
    %2879 = vdwg.mxu0
    %v2880 = vmul.f32 %v2878, 0.35355338
    %v2881 = vadd.f32 %v2880, %v621
    %v2882 = vsel %vm233, %v2881, -inf
    %2883 = vmax.xlane.f32.xlu0 %v2882
    %v2884 = vpop.xlane.xlu0 %2883
    %v2885 = vsub.f32 %v2881, %v2884
    %v2886 = vmul.f32 %v2885, 1.442695
    %v2887 = vpow.pop %v2886
    %v2888 = vsel %vm233, %v2887, 0.0
    %2889 = vadd.xlane.f32.xlu0 %v2888
    %v2890 = vpop.xlane.xlu0 %2889
    %v2891 = vrcp.pop %v2890
    %v2892 = vmul.f32 %v2887, %v2891
    %2893 = vrot.lane.b32.xlu0 %v2219, 40
    %v2894 = vpop.permute.xlu0 %2893
    %v2897 = vsel %vm233, %v2892, 0
    %2899 = vmatpush.msra.mxu0 0.0
    %2900 = vmatpush.msra.mxu0 0.0
    %2901 = vmatpush.msra.mxu0 0.0
    %2902 = vmatpush.msra.mxu0 0.0
    %2903 = vmatpush.msra.mxu0 0.0
    %2904 = vmatpush.msra.mxu0 0.0
    %2905 = vmatpush.msra.mxu0 0.0
    %2906 = vmatpush.msra.mxu0 0.0
    %2907 = vmatpush.msra.mxu0 0.0
    %2908 = vmatpush.msra.mxu0 0.0
    %2909 = vmatpush.msra.mxu0 0.0
    %2910 = vmatpush.msra.mxu0 0.0
    %2911 = vmatpush.msra.mxu0 0.0
    %2912 = vmatpush.msra.mxu0 0.0
    %2913 = vmatpush.msra.mxu0 0.0
    %2914 = vmatpush.msra.mxu0 %v2894
    %2915 = vmatmul.f32.gmra.mxu0 %v2897
    %v2916 = vpop.f32.mrf.mxu0
    %v2917 = vadd.f32 0.0, %v2916
    %2918 = vdwg.mxu0
    %v2920 = vsel %vm233, %v2917, 0
    %2922 = vmatpush.msra.mxu0 0.0
    %2923 = vmatpush.msra.mxu0 0.0
    %2924 = vmatpush.msra.mxu0 0.0
    %2925 = vmatpush.msra.mxu0 0.0
    %2926 = vmatpush.msra.mxu0 0.0
    %2927 = vmatpush.msra.mxu0 0.0
    %2928 = vmatpush.msra.mxu0 0.0
    %2929 = vmatpush.msra.mxu0 0.0
    %2930 = vmatpush.msra.mxu0 0.0
    %2931 = vmatpush.msra.mxu0 0.0
    %2932 = vmatpush.msra.mxu0 0.0
    %2933 = vmatpush.msra.mxu0 0.0
    %2934 = vmatpush.msra.mxu0 0.0
    %2935 = vmatpush.msra.mxu0 0.0
    %2936 = vmatpush.msra.mxu0 0.0
    %2937 = vmatpush.msra.mxu0 %v2181
    %2938 = vmatmul.f32.gmra.mxu0 %v2920
    %v2939 = vpop.f32.mrf.mxu0
    %v2940 = vadd.f32 0.0, %v2939
    %2941 = vdwg.mxu0
    %v2942 = vadd.f32 %v2851, %v2940
    %s2943 = scalar_lea.vmem %s13, 2
    %v2944 = vld [vmem:[%s2943] sm:$0x1]
    %v2946 = vperm.slane %v2944, 0
    %v2948 = vadd.f32 %v2581, %v2946
    %v2949 = vadd.f32 %v2942, %v2946
    %v2950 = vadd.f32 %v2175, %v2948
    %v2951 = vadd.f32 %v2176, %v2949
    %s2952 = scalar_lea.vmem %s15, 2
    %v2953 = vld [vmem:[%s2952] sm:$0x1]
    %s2954 = scalar_lea.vmem %s17, 2
    %v2955 = vld [vmem:[%s2954] sm:$0x1]
    %v2956 = vsel %vm200, %v2950, 0.0
    %2957 = vadd.xlane.f32.xlu0 %v2956
    %v2958 = vpop.xlane.xlu0 %2957
    %v2959 = vsel %vm200, %v2951, 0.0
    %2960 = vadd.xlane.f32.xlu0 %v2959
    %v2961 = vpop.xlane.xlu0 %2960
    %v2962 = vmul.f32 %v2958, %v977
    %v2963 = vmul.f32 %v2961, %v977
    %v2964 = vsub.f32 %v2950, %v2962
    %v2965 = vsub.f32 %v2951, %v2963
    %v2966 = vmul.f32 %v2964, %v2964
    %v2967 = vmul.f32 %v2965, %v2965
    %v2968 = vsel %vm200, %v2966, 0.0
    %2969 = vadd.xlane.f32.xlu0 %v2968
    %v2970 = vpop.xlane.xlu0 %2969
    %v2971 = vsel %vm200, %v2967, 0.0
    %2972 = vadd.xlane.f32.xlu0 %v2971
    %v2973 = vpop.xlane.xlu0 %2972
    %v2974 = vmul.f32 %v2970, %v977
    %v2975 = vmul.f32 %v2973, %v977
    %v2976 = vadd.f32 %v2974, 1e-05
    %v2977 = vadd.f32 %v2975, 1e-05
    %v2978 = vrsqrt.pop %v2976
    %v2979 = vmul.f32 %v2978, %v2976
    %v2980 = vmul.f32 %v2979, %v2978
    %v2981 = vmul.f32 0.5, %v2980
    %v2982 = vsub.f32 1.5, %v2981
    %v2983 = vmul.f32 %v2978, %v2982
    %vm2984 = vweird.f32 %v2976
    %vm2985 = vweird.f32 %v2978
    %vm2986 = vmor %vm2984, %vm2985
    %v2987 = vsel %vm2986, %v2978, %v2983
    %v2988 = vrsqrt.pop %v2977
    %v2989 = vmul.f32 %v2988, %v2977
    %v2990 = vmul.f32 %v2989, %v2988
    %v2991 = vmul.f32 0.5, %v2990
    %v2992 = vsub.f32 1.5, %v2991
    %v2993 = vmul.f32 %v2988, %v2992
    %vm2994 = vweird.f32 %v2977
    %vm2995 = vweird.f32 %v2988
    %vm2996 = vmor %vm2994, %vm2995
    %v2997 = vsel %vm2996, %v2988, %v2993
    %v2998 = vmul.f32 %v2964, %v2987
    %v2999 = vmul.f32 %v2965, %v2997
    %v3001 = vperm.slane %v2953, 0
    %v3003 = vmul.f32 %v2998, %v3001
    %v3004 = vmul.f32 %v2999, %v3001
    %v3006 = vperm.slane %v2955, 0
    %v3008 = vadd.f32 %v3003, %v3006
    %v3009 = vadd.f32 %v3004, %v3006
    %s3010 = scalar_lea.vmem %s19, 64
    %v3011 = vld [vmem:[%s3010] sm:$0xff]
    %v3012 = vld [vmem:[%s3010 + $0x8] sm:$0xff]
    %v3013 = vld [vmem:[%s3010 + $0x10] sm:$0xff]
    %v3014 = vld [vmem:[%s3010 + $0x18] sm:$0xff]
    %s3015 = scalar_lea.vmem %s21, 2
    %v3016 = vld [vmem:[%s3015] sm:$0x1]
    %v3018 = vperm.slane %v3016, 0
    %v3021 = vsel %vm200, %v3008, 0
    %v3024 = vsel %vm200, %v3009, 0
    %3026 = vmatpush.msra.mxu0 0.0
    %3027 = vmatpush.msra.mxu0 0.0
    %3028 = vmatpush.msra.mxu0 0.0
    %3029 = vmatpush.msra.mxu0 0.0
    %3030 = vmatpush.msra.mxu0 0.0
    %3031 = vmatpush.msra.mxu0 0.0
    %3032 = vmatpush.msra.mxu0 0.0
    %3033 = vmatpush.msra.mxu0 0.0
    %3034 = vmatpush.msra.mxu0 0.0
    %3035 = vmatpush.msra.mxu0 0.0
    %3036 = vmatpush.msra.mxu0 0.0
    %3037 = vmatpush.msra.mxu0 0.0
    %3038 = vmatpush.msra.mxu0 %v3014
    %3039 = vmatpush.msra.mxu0 %v3013
    %3040 = vmatpush.msra.mxu0 %v3012
    %3041 = vmatpush.msra.mxu0 %v3011
    %3042 = vmatmul.f32.gmra.mxu0 %v3021
    %v3043 = vpop.f32.mrf.mxu0
    %v3044 = vadd.f32 %v3018, %v3043
    %3045 = vmatmul.f32.gmra.mxu0 %v3024
    %v3046 = vpop.f32.mrf.mxu0
    %v3047 = vadd.f32 %v3018, %v3046
    %3048 = vdwg.mxu0
    %v3049 = vmul.f32 %v3044, 0.5
    %v3050 = vmul.f32 %v3047, 0.5
    %v3051 = vmul.f32 %v3044, 0.044715
    %v3052 = vmul.f32 %v3047, 0.044715
    %v3053 = vmul.f32 %v3051, %v3044
    %v3054 = vmul.f32 %v3052, %v3047
    %v3055 = vmul.f32 %v3053, %v3044
    %v3056 = vmul.f32 %v3054, %v3047
    %v3057 = vadd.f32 %v3044, %v3055
    %v3058 = vadd.f32 %v3047, %v3056
    %v3059 = vmul.f32 %v3057, 0.7978846
    %v3060 = vmul.f32 %v3058, 0.7978846
    %v3061 = vtanh.pop %v3059
    %v3062 = vtanh.pop %v3060
    %v3063 = vadd.f32 %v3061, 1.0
    %v3064 = vadd.f32 %v3062, 1.0
    %v3065 = vmul.f32 %v3049, %v3063
    %v3066 = vmul.f32 %v3050, %v3064
    %s3067 = scalar_lea.vmem %s23, 256
    %v3068 = vld [vmem:[%s3067] sm:$0xff]
    %v3069 = vld [vmem:[%s3067 + $0x8] sm:$0xff]
    %v3070 = vld [vmem:[%s3067 + $0x10] sm:$0xff]
    %v3071 = vld [vmem:[%s3067 + $0x18] sm:$0xff]
    %v3072 = vld [vmem:[%s3067 + $0x20] sm:$0xff]
    %v3073 = vld [vmem:[%s3067 + $0x28] sm:$0xff]
    %v3074 = vld [vmem:[%s3067 + $0x30] sm:$0xff]
    %v3075 = vld [vmem:[%s3067 + $0x38] sm:$0xff]
    %v3076 = vld [vmem:[%s3067 + $0x40] sm:$0xff]
    %v3077 = vld [vmem:[%s3067 + $0x48] sm:$0xff]
    %v3078 = vld [vmem:[%s3067 + $0x50] sm:$0xff]
    %v3079 = vld [vmem:[%s3067 + $0x58] sm:$0xff]
    %v3080 = vld [vmem:[%s3067 + $0x60] sm:$0xff]
    %v3081 = vld [vmem:[%s3067 + $0x68] sm:$0xff]
    %v3082 = vld [vmem:[%s3067 + $0x70] sm:$0xff]
    %v3083 = vld [vmem:[%s3067 + $0x78] sm:$0xff]
    %s3084 = scalar_lea.vmem %s25, 2
    %v3085 = vld [vmem:[%s3084] sm:$0x1]
    %v3087 = vperm.slane %v3085, 0
    %3089 = vmatpush.msra.mxu0 %v3083
    %3090 = vmatpush.msra.mxu0 %v3082
    %3091 = vmatpush.msra.mxu0 %v3081
    %3092 = vmatpush.msra.mxu0 %v3080
    %3093 = vmatpush.msra.mxu0 %v3079
    %3094 = vmatpush.msra.mxu0 %v3078
    %3095 = vmatpush.msra.mxu0 %v3077
    %3096 = vmatpush.msra.mxu0 %v3076
    %3097 = vmatpush.msra.mxu0 %v3075
    %3098 = vmatpush.msra.mxu0 %v3074
    %3099 = vmatpush.msra.mxu0 %v3073
    %3100 = vmatpush.msra.mxu0 %v3072
    %3101 = vmatpush.msra.mxu0 %v3071
    %3102 = vmatpush.msra.mxu0 %v3070
    %3103 = vmatpush.msra.mxu0 %v3069
    %3104 = vmatpush.msra.mxu0 %v3068
    %3105 = vmatmul.f32.gmra.mxu0 %v3065
    %v3106 = vpop.f32.mrf.mxu0
    %v3107 = vadd.f32 %v3087, %v3106
    %3108 = vmatmul.f32.gmra.mxu0 %v3066
    %v3109 = vpop.f32.mrf.mxu0
    %v3110 = vadd.f32 %v3087, %v3109
    %3111 = vdwg.mxu0
    %v3112 = vadd.f32 %v3008, %v3107
    %v3113 = vadd.f32 %v3009, %v3110
    %s3114 = scalar_lea.vmem %s27, 2
    %v3115 = vld [vmem:[%s3114] sm:$0x1]
    %s3116 = scalar_lea.vmem %s29, 2
    %v3117 = vld [vmem:[%s3116] sm:$0x1]
    %v3118 = vsel %vm200, %v3112, 0.0
    %3119 = vadd.xlane.f32.xlu0 %v3118
    %v3120 = vpop.xlane.xlu0 %3119
    %v3121 = vsel %vm200, %v3113, 0.0
    %3122 = vadd.xlane.f32.xlu0 %v3121
    %v3123 = vpop.xlane.xlu0 %3122
    %v3124 = vmul.f32 %v3120, %v977
    %v3125 = vmul.f32 %v3123, %v977
    %v3126 = vsub.f32 %v3112, %v3124
    %v3127 = vsub.f32 %v3113, %v3125
    %v3128 = vmul.f32 %v3126, %v3126
    %v3129 = vmul.f32 %v3127, %v3127
    %v3130 = vsel %vm200, %v3128, 0.0
    %3131 = vadd.xlane.f32.xlu0 %v3130
    %v3132 = vpop.xlane.xlu0 %3131
    %v3133 = vsel %vm200, %v3129, 0.0
    %3134 = vadd.xlane.f32.xlu0 %v3133
    %v3135 = vpop.xlane.xlu0 %3134
    %v3136 = vmul.f32 %v3132, %v977
    %v3137 = vmul.f32 %v3135, %v977
    %v3138 = vadd.f32 %v3136, 1e-05
    %v3139 = vadd.f32 %v3137, 1e-05
    %v3140 = vrsqrt.pop %v3138
    %v3141 = vmul.f32 %v3140, %v3138
    %v3142 = vmul.f32 %v3141, %v3140
    %v3143 = vmul.f32 0.5, %v3142
    %v3144 = vsub.f32 1.5, %v3143
    %v3145 = vmul.f32 %v3140, %v3144
    %vm3146 = vweird.f32 %v3138
    %vm3147 = vweird.f32 %v3140
    %vm3148 = vmor %vm3146, %vm3147
    %v3149 = vsel %vm3148, %v3140, %v3145
    %v3150 = vrsqrt.pop %v3139
    %v3151 = vmul.f32 %v3150, %v3139
    %v3152 = vmul.f32 %v3151, %v3150
    %v3153 = vmul.f32 0.5, %v3152
    %v3154 = vsub.f32 1.5, %v3153
    %v3155 = vmul.f32 %v3150, %v3154
    %vm3156 = vweird.f32 %v3139
    %vm3157 = vweird.f32 %v3150
    %vm3158 = vmor %vm3156, %vm3157
    %v3159 = vsel %vm3158, %v3150, %v3155
    %v3160 = vmul.f32 %v3126, %v3149
    %v3161 = vmul.f32 %v3127, %v3159
    %v3163 = vperm.slane %v3115, 0
    %v3165 = vmul.f32 %v3160, %v3163
    %v3166 = vmul.f32 %v3161, %v3163
    %v3168 = vperm.slane %v3117, 0
    %v3170 = vadd.f32 %v3165, %v3168
    %v3171 = vadd.f32 %v3166, %v3168
    %3172 = vst.msk [vmem:[#allocation6] sm:$0xff] %vm233, %v2260
    %3173 = vst.msk [vmem:[#allocation6 + $0x8] sm:$0xff] %vm233, %v2327
    %3174 = vst.msk [vmem:[#allocation6 + $0x10] sm:$0xff] %vm233, %v2440
    %3175 = vst.msk [vmem:[#allocation6 + $0x18] sm:$0xff] %vm233, %v2531
    %3176 = vst.msk [vmem:[#allocation6 + $0x20] sm:$0xff] %vm233, %v2621
    %3177 = vst.msk [vmem:[#allocation6 + $0x28] sm:$0xff] %vm233, %v2688
    %3178 = vst.msk [vmem:[#allocation6 + $0x30] sm:$0xff] %vm233, %v2801
    %3179 = vst.msk [vmem:[#allocation6 + $0x38] sm:$0xff] %vm233, %v2892
    %v3181 = vrot.slane %v3171, 7
    %vm3183 = vcmask 1040384
    %v3184 = vsel %vm3183, %v3170, %v3181
    %v3185 = vld [vmem:[%s63] sm:$0xff]
    %v3186 = vld [vmem:[%s63 + $0x8] sm:$0xff]
    %v3187 = vld [vmem:[%s63 + $0x10] sm:$0xff]
    %v3188 = vld [vmem:[%s63 + $0x18] sm:$0xff]
    %v3189 = vld [vmem:[%s65] sm:$0x1]
    %v3191 = vperm.slane %v3189, 0
    %v3194 = vsel %vm200, %v3184, 0
    %3196 = vmatpush.msra.mxu0 0.0
    %3197 = vmatpush.msra.mxu0 0.0
    %3198 = vmatpush.msra.mxu0 0.0
    %3199 = vmatpush.msra.mxu0 0.0
    %3200 = vmatpush.msra.mxu0 0.0
    %3201 = vmatpush.msra.mxu0 0.0
    %3202 = vmatpush.msra.mxu0 0.0
    %3203 = vmatpush.msra.mxu0 0.0
    %3204 = vmatpush.msra.mxu0 0.0
    %3205 = vmatpush.msra.mxu0 0.0
    %3206 = vmatpush.msra.mxu0 0.0
    %3207 = vmatpush.msra.mxu0 0.0
    %3208 = vmatpush.msra.mxu0 %v3188
    %3209 = vmatpush.msra.mxu0 %v3187
    %3210 = vmatpush.msra.mxu0 %v3186
    %3211 = vmatpush.msra.mxu0 %v3185
    %3212 = vmatmul.f32.gmra.mxu0 %v3194
    %v3213 = vpop.f32.mrf.mxu0
    %v3214 = vadd.f32 %v3191, %v3213
    %3215 = vdwg.mxu0
    %v3216 = vld [vmem:[%s67] sm:$0x1]
    %v3217 = vld [vmem:[%s69] sm:$0x1]
    %vm3218 = vcmask 123904
    %v3219 = vsel %vm3218, %v3214, 0.0
    %3220 = vadd.xlane.f32.xlu0 %v3219
    %v3221 = vpop.xlane.xlu0 %3220
    %v3222 = vrcp.pop 16.0
    %v3223 = vmul.f32 16.0, %v3222
    %v3224 = vsub.f32 1.0, %v3223
    %v3225 = vmul.f32 %v3222, %v3224
    %v3226 = vadd.f32 %v3222, %v3225
    %vm3227 = vweird.f32 %v3222
    %v3228 = vsel %vm3227, %v3222, %v3226
    %v3229 = vmul.f32 %v3221, %v3228
    %v3230 = vsub.f32 %v3214, %v3229
    %v3231 = vmul.f32 %v3230, %v3230
    %v3232 = vsel %vm3218, %v3231, 0.0
    %3233 = vadd.xlane.f32.xlu0 %v3232
    %v3234 = vpop.xlane.xlu0 %3233
    %v3235 = vmul.f32 %v3234, %v3228
    %v3236 = vadd.f32 %v3235, 1e-05
    %v3237 = vrsqrt.pop %v3236
    %v3238 = vmul.f32 %v3237, %v3236
    %v3239 = vmul.f32 %v3238, %v3237
    %v3240 = vmul.f32 0.5, %v3239
    %v3241 = vsub.f32 1.5, %v3240
    %v3242 = vmul.f32 %v3237, %v3241
    %vm3243 = vweird.f32 %v3236
    %vm3244 = vweird.f32 %v3237
    %vm3245 = vmor %vm3243, %vm3244
    %v3246 = vsel %vm3245, %v3237, %v3242
    %v3247 = vmul.f32 %v3230, %v3246
    %v3249 = vperm.slane %v3216, 0
    %v3251 = vmul.f32 %v3247, %v3249
    %v3253 = vperm.slane %v3217, 0
    %v3255 = vadd.f32 %v3251, %v3253
    %v3256 = vmul.f32 %v3255, 0.5
    %v3257 = vmul.f32 %v3255, 0.044715
    %v3258 = vmul.f32 %v3257, %v3255
    %v3259 = vmul.f32 %v3258, %v3255
    %v3260 = vadd.f32 %v3255, %v3259
    %v3261 = vmul.f32 %v3260, 0.7978846
    %v3262 = vtanh.pop %v3261
    %v3263 = vadd.f32 %v3262, 1.0
    %v3264 = vmul.f32 %v3256, %v3263
    %v3265 = vld [vmem:[%s71] sm:$0xff]
    %v3266 = vld [vmem:[%s71 + $0x8] sm:$0xff]
    %v3267 = vld [vmem:[%s73] sm:$0x1]
    %v3269 = vperm.slane %v3267, 0
    %vm3271 = vcmask 130048
    %v3273 = vsel %vm3271, %v3264, 0
    %3275 = vmatpush.msra.mxu0 0.0
    %3276 = vmatpush.msra.mxu0 0.0
    %3277 = vmatpush.msra.mxu0 0.0
    %3278 = vmatpush.msra.mxu0 0.0
    %3279 = vmatpush.msra.mxu0 0.0
    %3280 = vmatpush.msra.mxu0 0.0
    %3281 = vmatpush.msra.mxu0 0.0
    %3282 = vmatpush.msra.mxu0 0.0
    %3283 = vmatpush.msra.mxu0 0.0
    %3284 = vmatpush.msra.mxu0 0.0
    %3285 = vmatpush.msra.mxu0 0.0
    %3286 = vmatpush.msra.mxu0 0.0
    %3287 = vmatpush.msra.mxu0 0.0
    %3288 = vmatpush.msra.mxu0 0.0
    %3289 = vmatpush.msra.mxu0 %v3266
    %3290 = vmatpush.msra.mxu0 %v3265
    %3291 = vmatmul.f32.gmra.mxu0 %v3273
    %v3292 = vpop.f32.mrf.mxu0
    %v3293 = vadd.f32 %v3269, %v3292
    %3294 = vdwg.mxu0
    %vm3295 = vcmask 50176
    %v3296 = vsel %vm3295, %v3293, -inf
    %3297 = vmax.xlane.f32.xlu0 %v3296
    %v3298 = vpop.xlane.xlu0 %3297
    %v3299 = vsub.f32 %v3293, %v3298
    %v3300 = vmul.f32 %v3299, 1.442695
    %v3301 = vpow.pop %v3300
    %v3302 = vsel %vm3295, %v3301, 0.0
    %3303 = vadd.xlane.f32.xlu0 %v3302
    %v3304 = vpop.xlane.xlu0 %3303
    %v3305 = vrcp.pop %v3304
    %v3306 = vmul.f32 %v3301, %v3305
    %3307 = vst.msk [vmem:[#allocation8] sm:$0x3] %vm3295, %v3306
    %v3308 = vld [vmem:[%s5] sm:$0xff]
    %v3309 = vld [vmem:[%s5 + $0x8] sm:$0xff]
    %v3310 = vld [vmem:[%s31] sm:$0xff]
    %v3311 = vld [vmem:[%s31 + $0x8] sm:$0xff]
    %v3312 = vld [vmem:[%s31 + $0x10] sm:$0xff]
    %v3313 = vld [vmem:[%s31 + $0x18] sm:$0xff]
    %v3314 = vld [vmem:[%s33] sm:$0x1]
    %v3316 = vperm.slane %v3314, 0
    %v3319 = vsel %vm200, %v3170, 0
    %v3321 = vsel %vm200, %v3171, 0
    %3323 = vmatpush.msra.mxu0 0.0
    %3324 = vmatpush.msra.mxu0 0.0
    %3325 = vmatpush.msra.mxu0 0.0
    %3326 = vmatpush.msra.mxu0 0.0
    %3327 = vmatpush.msra.mxu0 0.0
    %3328 = vmatpush.msra.mxu0 0.0
    %3329 = vmatpush.msra.mxu0 0.0
    %3330 = vmatpush.msra.mxu0 0.0
    %3331 = vmatpush.msra.mxu0 0.0
    %3332 = vmatpush.msra.mxu0 0.0
    %3333 = vmatpush.msra.mxu0 0.0
    %3334 = vmatpush.msra.mxu0 0.0
    %3335 = vmatpush.msra.mxu0 %v3313
    %3336 = vmatpush.msra.mxu0 %v3312
    %3337 = vmatpush.msra.mxu0 %v3311
    %3338 = vmatpush.msra.mxu0 %v3310
    %3339 = vmatmul.f32.gmra.mxu0 %v3319
    %v3340 = vpop.f32.mrf.mxu0
    %v3341 = vadd.f32 %v3316, %v3340
    %3342 = vmatmul.f32.gmra.mxu0 %v3321
    %v3343 = vpop.f32.mrf.mxu0
    %v3344 = vadd.f32 %v3316, %v3343
    %3345 = vdwg.mxu0
    %v3346 = vmul.f32 %v3341, 0.5
    %v3347 = vmul.f32 %v3344, 0.5
    %v3348 = vmul.f32 %v3341, 0.044715
    %v3349 = vmul.f32 %v3344, 0.044715
    %v3350 = vmul.f32 %v3348, %v3341
    %v3351 = vmul.f32 %v3349, %v3344
    %v3352 = vmul.f32 %v3350, %v3341
    %v3353 = vmul.f32 %v3351, %v3344
    %v3354 = vadd.f32 %v3341, %v3352
    %v3355 = vadd.f32 %v3344, %v3353
    %v3356 = vmul.f32 %v3354, 0.7978846
    %v3357 = vmul.f32 %v3355, 0.7978846
    %v3358 = vtanh.pop %v3356
    %v3359 = vtanh.pop %v3357
    %v3360 = vadd.f32 %v3358, 1.0
    %v3361 = vadd.f32 %v3359, 1.0
    %v3362 = vmul.f32 %v3346, %v3360
    %v3363 = vmul.f32 %v3347, %v3361
    %v3364 = vld [vmem:[%s35] sm:$0xff]
    %v3365 = vld [vmem:[%s35 + $0x8] sm:$0xff]
    %v3366 = vld [vmem:[#allocation2] sm:$0x1]
    %v3368 = vperm.slane %v3366, 0
    %v3371 = vsel %vm3271, %v3362, 0
    %v3374 = vsel %vm3271, %v3363, 0
    %3376 = vmatpush.msra.mxu0 0.0
    %3377 = vmatpush.msra.mxu0 0.0
    %3378 = vmatpush.msra.mxu0 0.0
    %3379 = vmatpush.msra.mxu0 0.0
    %3380 = vmatpush.msra.mxu0 0.0
    %3381 = vmatpush.msra.mxu0 0.0
    %3382 = vmatpush.msra.mxu0 0.0
    %3383 = vmatpush.msra.mxu0 0.0
    %3384 = vmatpush.msra.mxu0 0.0
    %3385 = vmatpush.msra.mxu0 0.0
    %3386 = vmatpush.msra.mxu0 0.0
    %3387 = vmatpush.msra.mxu0 0.0
    %3388 = vmatpush.msra.mxu0 0.0
    %3389 = vmatpush.msra.mxu0 0.0
    %3390 = vmatpush.msra.mxu0 %v3365
    %3391 = vmatpush.msra.mxu0 %v3364
    %3392 = vmatmul.f32.gmra.mxu0 %v3371
    %v3393 = vpop.f32.mrf.mxu0
    %v3394 = vadd.f32 %v3368, %v3393
    %3395 = vmatmul.f32.gmra.mxu0 %v3374
    %v3396 = vpop.f32.mrf.mxu0
    %v3397 = vadd.f32 %v3368, %v3396
    %3398 = vdwg.mxu0
    %v3399 = vxor.u32 %v3394, 2147483648
    %v3400 = vxor.u32 %v3397, 2147483648
    %v3401 = vmul.f32 %v3399, 1.442695
    %v3402 = vpow.pop %v3401
    %v3403 = vmul.f32 %v3400, 1.442695
    %v3404 = vpow.pop %v3403
    %v3405 = vadd.f32 %v3402, 1.0
    %v3406 = vadd.f32 %v3404, 1.0
    %v3407 = vrcp.pop %v3405
    %v3408 = vmul.f32 %v3405, %v3407
    %v3409 = vsub.f32 1.0, %v3408
    %v3410 = vmul.f32 %v3407, %v3409
    %v3411 = vadd.f32 %v3407, %v3410
    %vm3412 = vweird.f32 %v3405
    %vm3413 = vweird.f32 %v3407
    %vm3414 = vmor %vm3412, %vm3413
    %v3415 = vsel %vm3414, %v3407, %v3411
    %v3416 = vand.u32 2147483647, %v3405
    %vm3417 = vcmp.eq.f32.partialorder %v3416, 8.507059e+37
    %v3418 = vand.u32 %v3405, 2147483648
    %v3419 = vor.u32 1.1754944e-38, %v3418
    %v3420 = vsel %vm3417, %v3419, %v3415
    %v3421 = vmul.f32 1.0, %v3420
    %v3422 = vrcp.pop %v3406
    %v3423 = vmul.f32 %v3406, %v3422
    %v3424 = vsub.f32 1.0, %v3423
    %v3425 = vmul.f32 %v3422, %v3424
    %v3426 = vadd.f32 %v3422, %v3425
    %vm3427 = vweird.f32 %v3406
    %vm3428 = vweird.f32 %v3422
    %vm3429 = vmor %vm3427, %vm3428
    %v3430 = vsel %vm3429, %v3422, %v3426
    %v3431 = vand.u32 2147483647, %v3406
    %vm3432 = vcmp.eq.f32.partialorder %v3431, 8.507059e+37
    %v3433 = vand.u32 %v3406, 2147483648
    %v3434 = vor.u32 1.1754944e-38, %v3433
    %v3435 = vsel %vm3432, %v3434, %v3430
    %v3436 = vmul.f32 1.0, %v3435
    %v3437 = vmul.f32 %v3421, %v3308
    %v3438 = vmul.f32 %v3436, %v3309
    %v3439 = vsub.f32 1.0, %v3437
    %v3440 = vsub.f32 1.0, %v3438
    %v3441 = vmul.f32 %v3439, %v3308
    %v3442 = vmul.f32 %v3440, %v3309
    %vm3443 = vcmask 7168
    %v3444 = vsel %vm3443, %v3441, 0.0
    %v3445 = vrot.slane %v3444, 4
    %v3446 = vadd.f32 %v3444, %v3445
    %v3447 = vrot.slane %v3446, 2
    %v3448 = vadd.f32 %v3446, %v3447
    %v3449 = vrot.slane %v3448, 1
    %v3450 = vadd.f32 %v3448, %v3449
    %v3451 = vadd.f32 %v3450, 1e-09
    %v3452 = vrcp.pop %v3451
    %v3453 = vmul.f32 %v3441, %v3452
    %3455 = vset.pattern.permute.xlu0 0
    %3456 = vperm.xlu0 %3455, %v3453
    %v3457 = vpop.permute.xlu0 %3456
    %v3459 = vmul.f32 %v3457, %v3170
    %v3460 = vsel %vm200, %v3459, 0.0
    %v3461 = vrot.slane %v3460, 4
    %v3462 = vadd.f32 %v3460, %v3461
    %v3463 = vrot.slane %v3462, 2
    %v3464 = vadd.f32 %v3462, %v3463
    %v3465 = vrot.slane %v3464, 1
    %v3466 = vadd.f32 %v3464, %v3465
    %v3467 = vsel %vm3443, %v3442, 0.0
    %v3468 = vrot.slane %v3467, 4
    %v3469 = vadd.f32 %v3467, %v3468
    %v3470 = vrot.slane %v3469, 2
    %v3471 = vadd.f32 %v3469, %v3470
    %v3472 = vrot.slane %v3471, 1
    %v3473 = vadd.f32 %v3471, %v3472
    %v3474 = vadd.f32 %v3473, 1e-09
    %v3475 = vrcp.pop %v3474
    %v3476 = vmul.f32 %v3442, %v3475
    %3478 = vset.pattern.permute.xlu0 0
    %3479 = vperm.xlu0 %3478, %v3476
    %v3480 = vpop.permute.xlu0 %3479
    %v3482 = vmul.f32 %v3480, %v3171
    %v3483 = vsel %vm200, %v3482, 0.0
    %v3484 = vrot.slane %v3483, 4
    %v3485 = vadd.f32 %v3483, %v3484
    %v3486 = vrot.slane %v3485, 2
    %v3487 = vadd.f32 %v3485, %v3486
    %v3488 = vrot.slane %v3487, 1
    %v3489 = vadd.f32 %v3487, %v3488
    %v3490 = vsel %vm3183, %v3466, %v3489
    %v3491 = vld [vmem:[%s39] sm:$0xff]
    %v3492 = vld [vmem:[%s39 + $0x8] sm:$0xff]
    %v3493 = vld [vmem:[%s39 + $0x10] sm:$0xff]
    %v3494 = vld [vmem:[%s39 + $0x18] sm:$0xff]
    %v3495 = vld [vmem:[%s41] sm:$0x1]
    %v3497 = vperm.slane %v3495, 0
    %v3500 = vsel %vm200, %v3490, 0
    %3502 = vmatpush.msra.mxu0 0.0
    %3503 = vmatpush.msra.mxu0 0.0
    %3504 = vmatpush.msra.mxu0 0.0
    %3505 = vmatpush.msra.mxu0 0.0
    %3506 = vmatpush.msra.mxu0 0.0
    %3507 = vmatpush.msra.mxu0 0.0
    %3508 = vmatpush.msra.mxu0 0.0
    %3509 = vmatpush.msra.mxu0 0.0
    %3510 = vmatpush.msra.mxu0 0.0
    %3511 = vmatpush.msra.mxu0 0.0
    %3512 = vmatpush.msra.mxu0 0.0
    %3513 = vmatpush.msra.mxu0 0.0
    %3514 = vmatpush.msra.mxu0 %v3494
    %3515 = vmatpush.msra.mxu0 %v3493
    %3516 = vmatpush.msra.mxu0 %v3492
    %3517 = vmatpush.msra.mxu0 %v3491
    %3518 = vmatmul.f32.gmra.mxu0 %v3500
    %v3519 = vpop.f32.mrf.mxu0
    %v3520 = vadd.f32 %v3497, %v3519
    %3521 = vdwg.mxu0
    %v3522 = vld [vmem:[%s43] sm:$0x1]
    %v3523 = vld [vmem:[%s45] sm:$0x1]
    %vm3524 = vcmask 254976
    %v3525 = vsel %vm3524, %v3520, 0.0
    %3526 = vadd.xlane.f32.xlu0 %v3525
    %v3527 = vpop.xlane.xlu0 %3526
    %v3528 = vmul.f32 %v3527, %v977
    %v3529 = vsub.f32 %v3520, %v3528
    %v3530 = vmul.f32 %v3529, %v3529
    %v3531 = vsel %vm3524, %v3530, 0.0
    %3532 = vadd.xlane.f32.xlu0 %v3531
    %v3533 = vpop.xlane.xlu0 %3532
    %v3534 = vmul.f32 %v3533, %v977
    %v3535 = vadd.f32 %v3534, 1e-05
    %v3536 = vrsqrt.pop %v3535
    %v3537 = vmul.f32 %v3536, %v3535
    %v3538 = vmul.f32 %v3537, %v3536
    %v3539 = vmul.f32 0.5, %v3538
    %v3540 = vsub.f32 1.5, %v3539
    %v3541 = vmul.f32 %v3536, %v3540
    %vm3542 = vweird.f32 %v3535
    %vm3543 = vweird.f32 %v3536
    %vm3544 = vmor %vm3542, %vm3543
    %v3545 = vsel %vm3544, %v3536, %v3541
    %v3546 = vmul.f32 %v3529, %v3545
    %v3548 = vperm.slane %v3522, 0
    %v3550 = vmul.f32 %v3546, %v3548
    %v3552 = vperm.slane %v3523, 0
    %v3554 = vadd.f32 %v3550, %v3552
    %v3555 = vmul.f32 %v3554, 0.5
    %v3556 = vmul.f32 %v3554, 0.044715
    %v3557 = vmul.f32 %v3556, %v3554
    %v3558 = vmul.f32 %v3557, %v3554
    %v3559 = vadd.f32 %v3554, %v3558
    %v3560 = vmul.f32 %v3559, 0.7978846
    %v3561 = vtanh.pop %v3560
    %v3562 = vadd.f32 %v3561, 1.0
    %v3563 = vmul.f32 %v3555, %v3562
    %v3564 = vld [vmem:[%s47] sm:$0xff]
    %v3565 = vld [vmem:[%s47 + $0x8] sm:$0xff]
    %v3566 = vld [vmem:[%s47 + $0x10] sm:$0xff]
    %v3567 = vld [vmem:[%s47 + $0x18] sm:$0xff]
    %v3568 = vld [vmem:[%s49] sm:$0x1]
    %v3570 = vperm.slane %v3568, 0
    %v3573 = vsel %vm200, %v3563, 0
    %3575 = vmatpush.msra.mxu0 0.0
    %3576 = vmatpush.msra.mxu0 0.0
    %3577 = vmatpush.msra.mxu0 0.0
    %3578 = vmatpush.msra.mxu0 0.0
    %3579 = vmatpush.msra.mxu0 0.0
    %3580 = vmatpush.msra.mxu0 0.0
    %3581 = vmatpush.msra.mxu0 0.0
    %3582 = vmatpush.msra.mxu0 0.0
    %3583 = vmatpush.msra.mxu0 0.0
    %3584 = vmatpush.msra.mxu0 0.0
    %3585 = vmatpush.msra.mxu0 0.0
    %3586 = vmatpush.msra.mxu0 0.0
    %3587 = vmatpush.msra.mxu0 %v3567
    %3588 = vmatpush.msra.mxu0 %v3566
    %3589 = vmatpush.msra.mxu0 %v3565
    %3590 = vmatpush.msra.mxu0 %v3564
    %3591 = vmatmul.f32.gmra.mxu0 %v3573
    %v3592 = vpop.f32.mrf.mxu0
    %v3593 = vadd.f32 %v3570, %v3592
    %3594 = vdwg.mxu0
    %v3595 = vld [vmem:[%s75] sm:$0xff]
    %v3596 = vld [vmem:[%s75 + $0x8] sm:$0xff]
    %v3597 = vld [vmem:[%s75 + $0x10] sm:$0xff]
    %v3598 = vld [vmem:[%s75 + $0x18] sm:$0xff]
    %v3599 = vld [vmem:[%s77] sm:$0x1]
    %v3601 = vperm.slane %v3599, 0
    %3603 = vmatpush.msra.mxu0 0.0
    %3604 = vmatpush.msra.mxu0 0.0
    %3605 = vmatpush.msra.mxu0 0.0
    %3606 = vmatpush.msra.mxu0 0.0
    %3607 = vmatpush.msra.mxu0 0.0
    %3608 = vmatpush.msra.mxu0 0.0
    %3609 = vmatpush.msra.mxu0 0.0
    %3610 = vmatpush.msra.mxu0 0.0
    %3611 = vmatpush.msra.mxu0 0.0
    %3612 = vmatpush.msra.mxu0 0.0
    %3613 = vmatpush.msra.mxu0 0.0
    %3614 = vmatpush.msra.mxu0 0.0
    %3615 = vmatpush.msra.mxu0 %v3598
    %3616 = vmatpush.msra.mxu0 %v3597
    %3617 = vmatpush.msra.mxu0 %v3596
    %3618 = vmatpush.msra.mxu0 %v3595
    %3619 = vmatmul.f32.gmra.mxu0 %v3194
    %v3620 = vpop.f32.mrf.mxu0
    %v3621 = vadd.f32 %v3601, %v3620
    %3622 = vdwg.mxu0
    %v3623 = vmax.f32 %v3621, 0.0
    %v3624 = vld [vmem:[%s79] sm:$0xff]
    %v3625 = vld [vmem:[#allocation3] sm:$0x1]
    %v3627 = vperm.slane %v3625, 0
    %v3630 = vsel %vm233, %v3623, 0
    %3632 = vmatpush.msra.mxu0 0.0
    %3633 = vmatpush.msra.mxu0 0.0
    %3634 = vmatpush.msra.mxu0 0.0
    %3635 = vmatpush.msra.mxu0 0.0
    %3636 = vmatpush.msra.mxu0 0.0
    %3637 = vmatpush.msra.mxu0 0.0
    %3638 = vmatpush.msra.mxu0 0.0
    %3639 = vmatpush.msra.mxu0 0.0
    %3640 = vmatpush.msra.mxu0 0.0
    %3641 = vmatpush.msra.mxu0 0.0
    %3642 = vmatpush.msra.mxu0 0.0
    %3643 = vmatpush.msra.mxu0 0.0
    %3644 = vmatpush.msra.mxu0 0.0
    %3645 = vmatpush.msra.mxu0 0.0
    %3646 = vmatpush.msra.mxu0 0.0
    %3647 = vmatpush.msra.mxu0 %v3624
    %3648 = vmatmul.f32.gmra.mxu0 %v3630
    %v3649 = vpop.f32.mrf.mxu0
    %v3650 = vadd.f32 %v3627, %v3649
    %3651 = vdwg.mxu0
    %v3652 = vxor.u32 %v3650, 2147483648
    %v3653 = vmul.f32 %v3652, 1.442695
    %v3654 = vpow.pop %v3653
    %v3655 = vadd.f32 %v3654, 1.0
    %v3656 = vrcp.pop %v3655
    %v3657 = vmul.f32 %v3655, %v3656
    %v3658 = vsub.f32 1.0, %v3657
    %v3659 = vmul.f32 %v3656, %v3658
    %v3660 = vadd.f32 %v3656, %v3659
    %vm3661 = vweird.f32 %v3655
    %vm3662 = vweird.f32 %v3656
    %vm3663 = vmor %vm3661, %vm3662
    %v3664 = vsel %vm3663, %v3656, %v3660
    %v3665 = vand.u32 2147483647, %v3655
    %vm3666 = vcmp.eq.f32.partialorder %v3665, 8.507059e+37
    %v3667 = vand.u32 %v3655, 2147483648
    %v3668 = vor.u32 1.1754944e-38, %v3667
    %v3669 = vsel %vm3666, %v3668, %v3664
    %v3670 = vmul.f32 1.0, %v3669
    %vm3671 = vcmask 1024
    %3672 = vst.msk [vmem:[%s89] sm:$0x3] %vm3671, %v3670
    %v3673 = vld [vmem:[%s51] sm:$0xff]
    %v3674 = vld [vmem:[%s51 + $0x8] sm:$0xff]
    %v3675 = vld [vmem:[%s51 + $0x10] sm:$0xff]
    %v3676 = vld [vmem:[%s51 + $0x18] sm:$0xff]
    %v3677 = vld [vmem:[%s51 + $0x20] sm:$0xff]
    %v3678 = vld [vmem:[%s51 + $0x28] sm:$0xff]
    %v3679 = vld [vmem:[%s51 + $0x30] sm:$0xff]
    %v3680 = vld [vmem:[%s51 + $0x38] sm:$0xff]
    %v3682 = vsel %vm200, %v3593, 0
    %3684 = vmatpush.msra.mxu0 0.0
    %3685 = vmatpush.msra.mxu0 0.0
    %3686 = vmatpush.msra.mxu0 0.0
    %3687 = vmatpush.msra.mxu0 0.0
    %3688 = vmatpush.msra.mxu0 0.0
    %3689 = vmatpush.msra.mxu0 0.0
    %3690 = vmatpush.msra.mxu0 0.0
    %3691 = vmatpush.msra.mxu0 0.0
    %3692 = vmatpush.msra.mxu0 0.0
    %3693 = vmatpush.msra.mxu0 0.0
    %3694 = vmatpush.msra.mxu0 0.0
    %3695 = vmatpush.msra.mxu0 0.0
    %3696 = vmatpush.msra.mxu0 %v3680
    %3697 = vmatpush.msra.mxu0 %v3679
    %3698 = vmatpush.msra.mxu0 %v3678
    %3699 = vmatpush.msra.mxu0 %v3677
    %3700 = vmatmul.f32.gmra.mxu0 %v3682
    %v3701 = vpop.f32.mrf.mxu0
    %v3702 = vadd.f32 0.0, %v3701
    %3703 = vdwg.mxu0
    %3704 = vmatpush.msra.mxu0 0.0
    %3705 = vmatpush.msra.mxu0 0.0
    %3706 = vmatpush.msra.mxu0 0.0
    %3707 = vmatpush.msra.mxu0 0.0
    %3708 = vmatpush.msra.mxu0 0.0
    %3709 = vmatpush.msra.mxu0 0.0
    %3710 = vmatpush.msra.mxu0 0.0
    %3711 = vmatpush.msra.mxu0 0.0
    %3712 = vmatpush.msra.mxu0 0.0
    %3713 = vmatpush.msra.mxu0 0.0
    %3714 = vmatpush.msra.mxu0 0.0
    %3715 = vmatpush.msra.mxu0 0.0
    %3716 = vmatpush.msra.mxu0 %v3676
    %3717 = vmatpush.msra.mxu0 %v3675
    %3718 = vmatpush.msra.mxu0 %v3674
    %3719 = vmatpush.msra.mxu0 %v3673
    %3720 = vmatmul.f32.gmra.mxu0 %v3194
    %v3721 = vpop.f32.mrf.mxu0
    %v3722 = vadd.f32 %v3702, %v3721
    %3723 = vdwg.mxu0
    %v3724 = vld [vmem:[%s53] sm:$0x1]
    %v3726 = vperm.slane %v3724, 0
    %v3728 = vadd.f32 %v3722, %v3726
    %v3729 = vld [vmem:[%s55] sm:$0x1]
    %v3730 = vld [vmem:[%s57] sm:$0x1]
    %v3731 = vsel %vm3524, %v3728, 0.0
    %3732 = vadd.xlane.f32.xlu0 %v3731
    %v3733 = vpop.xlane.xlu0 %3732
    %v3734 = vmul.f32 %v3733, %v977
    %v3735 = vsub.f32 %v3728, %v3734
    %v3736 = vmul.f32 %v3735, %v3735
    %v3737 = vsel %vm3524, %v3736, 0.0
    %3738 = vadd.xlane.f32.xlu0 %v3737
    %v3739 = vpop.xlane.xlu0 %3738
    %v3740 = vmul.f32 %v3739, %v977
    %v3741 = vadd.f32 %v3740, 1e-05
    %v3742 = vrsqrt.pop %v3741
    %v3743 = vmul.f32 %v3742, %v3741
    %v3744 = vmul.f32 %v3743, %v3742
    %v3745 = vmul.f32 0.5, %v3744
    %v3746 = vsub.f32 1.5, %v3745
    %v3747 = vmul.f32 %v3742, %v3746
    %vm3748 = vweird.f32 %v3741
    %vm3749 = vweird.f32 %v3742
    %vm3750 = vmor %vm3748, %vm3749
    %v3751 = vsel %vm3750, %v3742, %v3747
    %v3752 = vmul.f32 %v3735, %v3751
    %v3754 = vperm.slane %v3729, 0
    %v3756 = vmul.f32 %v3752, %v3754
    %v3758 = vperm.slane %v3730, 0
    %v3760 = vadd.f32 %v3756, %v3758
    %v3761 = vmul.f32 %v3760, 0.5
    %v3762 = vmul.f32 %v3760, 0.044715
    %v3763 = vmul.f32 %v3762, %v3760
    %v3764 = vmul.f32 %v3763, %v3760
    %v3765 = vadd.f32 %v3760, %v3764
    %v3766 = vmul.f32 %v3765, 0.7978846
    %v3767 = vtanh.pop %v3766
    %v3768 = vadd.f32 %v3767, 1.0
    %v3769 = vmul.f32 %v3761, %v3768
    %v3770 = vld [vmem:[%s59] sm:$0xff]
    %v3771 = vld [vmem:[%s59 + $0x8] sm:$0xff]
    %v3772 = vld [vmem:[%s59 + $0x10] sm:$0xff]
    %v3773 = vld [vmem:[%s59 + $0x18] sm:$0xff]
    %v3774 = vld [vmem:[%s61] sm:$0x1]
    %v3776 = vperm.slane %v3774, 0
    %v3779 = vsel %vm200, %v3769, 0
    %3781 = vmatpush.msra.mxu0 0.0
    %3782 = vmatpush.msra.mxu0 0.0
    %3783 = vmatpush.msra.mxu0 0.0
    %3784 = vmatpush.msra.mxu0 0.0
    %3785 = vmatpush.msra.mxu0 0.0
    %3786 = vmatpush.msra.mxu0 0.0
    %3787 = vmatpush.msra.mxu0 0.0
    %3788 = vmatpush.msra.mxu0 0.0
    %3789 = vmatpush.msra.mxu0 0.0
    %3790 = vmatpush.msra.mxu0 0.0
    %3791 = vmatpush.msra.mxu0 0.0
    %3792 = vmatpush.msra.mxu0 0.0
    %3793 = vmatpush.msra.mxu0 %v3773
    %3794 = vmatpush.msra.mxu0 %v3772
    %3795 = vmatpush.msra.mxu0 %v3771
    %3796 = vmatpush.msra.mxu0 %v3770
    %3797 = vmatmul.f32.gmra.mxu0 %v3779
    %v3798 = vpop.f32.mrf.mxu0
    %v3799 = vadd.f32 %v3776, %v3798
    %3800 = vdwg.mxu0
    %3801 = vst.msk [vmem:[#allocation4] sm:$0x3] %vm3524, %v3799
    // Predicated region
    $region166: #{question_expert_forward.1} parent=1 // pred_check
      _
    $region167: #{question_expert_forward.1} parent=1 // pred_check_branch
      %3803 = sbr.rel (0) target = $region169
    $region168: #{question_expert_forward.1} parent=1 // pred_region
      %3805 = vsyncadd [#allocation5], 0
      %s3807 = sshll.u32 [#allocation4], 4
      %s3808 = int_to_ptr.vmem [resolvable:$true] %s3807
      %s3809 = sshll.u32 %s83, 4
      %s3810 = int_to_ptr.hbm [resolvable:$true] %s3809
      %3812 = dma.vmem_to_hbm [thread:$0]  %s3808, 32, %s3810, [#allocation5]
    $region169: #{question_expert_forward.1} parent=1 // pred_fallthru
      _
    // Predicated region
    $region170: #{question_expert_forward.1} parent=1 // pred_check
      _
    $region171: #{question_expert_forward.1} parent=1 // pred_check_branch
      %3814 = sbr.rel (0) target = $region173
    $region172: #{question_expert_forward.1} parent=1 // pred_region
      %3816 = vsyncadd [#allocation7], 0
      %s3817 = sshll.u32 [#allocation6], 4
      %s3818 = int_to_ptr.vmem [resolvable:$true] %s3817
      %s3819 = sshll.u32 %s85, 4
      %s3820 = int_to_ptr.hbm [resolvable:$true] %s3819
      %3825 = dma.vmem_to_hbm [thread:$0]  %s3818, 1024, %s3820, [#allocation7], 128, 128, 8
    $region173: #{question_expert_forward.1} parent=1 // pred_fallthru
      _
    // Predicated region
    $region174: #{question_expert_forward.1} parent=1 // pred_check
      _
    $region175: #{question_expert_forward.1} parent=1 // pred_check_branch
      %3827 = sbr.rel (0) target = $region177
    $region176: #{question_expert_forward.1} parent=1 // pred_region
      %3829 = vsyncadd [#allocation7], 0
      %s3831 = sshll.u32 [#allocation8], 4
      %s3832 = int_to_ptr.vmem [resolvable:$true] %s3831
      %s3833 = sshll.u32 %s87, 4
      %s3834 = int_to_ptr.hbm [resolvable:$true] %s3833
      %3836 = dma.vmem_to_hbm [thread:$0]  %s3832, 32, %s3834, [#allocation7]
    $region177: #{question_expert_forward.1} parent=1 // pred_fallthru
      _
    // Predicated region
    $region178: #{question_expert_forward.1} parent=1 // pred_check
      _
    $region179: #{question_expert_forward.1} parent=1 // pred_check_branch
      %3838 = sbr.rel (0) target = $region181
    $region180: #{question_expert_forward.1} parent=1 // pred_region
      _
    $region181: #{question_expert_forward.1} parent=1 // pred_fallthru
      _
    // Predicated region
    $region182: #{question_expert_forward.1} parent=1 // pred_check
      _
    $region183: #{question_expert_forward.1} parent=1 // pred_check_branch
      %3840 = sbr.rel (0) target = $region185
    $region184: #{question_expert_forward.1} parent=1 // pred_region
      %3842 = dma.done [#allocation5], 32
    $region185: #{question_expert_forward.1} parent=1 // pred_fallthru
      _
    // Predicated region
    $region186: #{question_expert_forward.1} parent=1 // pred_check
      _
    $region187: #{question_expert_forward.1} parent=1 // pred_check_branch
      %3844 = sbr.rel (0) target = $region189
    $region188: #{question_expert_forward.1} parent=1 // pred_region
      %3846 = dma.done [#allocation7], 1024
    $region189: #{question_expert_forward.1} parent=1 // pred_fallthru
      _
    // Predicated region
    $region190: #{question_expert_forward.1} parent=1 // pred_check
      _
    $region191: #{question_expert_forward.1} parent=1 // pred_check_branch
      %3848 = sbr.rel (0) target = $region193
    $region192: #{question_expert_forward.1} parent=1 // pred_region
      %3850 = dma.done [#allocation7], 32
    $region193: #{question_expert_forward.1} parent=1 // pred_fallthru
      _
    // Predicated region
    $region194: #{question_expert_forward.1} parent=1 // pred_check
      _
    $region195: #{question_expert_forward.1} parent=1 // pred_check_branch
      %3852 = sbr.rel (0) target = $region197
    $region196: #{question_expert_forward.1} parent=1 // pred_region
      _
    $region197: #{question_expert_forward.1} parent=1 // pred_fallthru
      _
    %3853 = vsyncpa [#allocation5], 1
    %3854 = vsyncpa [#allocation7], 1

</llo_original>
